<compile_context>
chip_gen: v7x
topology: tpu7x:2x2x1
jax: 0.10.0
libtpu: 0.0.40
codegen_flags: <defaults>
</compile_context>

<pallas_src>
import functools
import math

import jax
import jax.numpy as jnp
from jax.experimental import pallas as pl
from jax.experimental.pallas import tpu as pltpu


CONFIG = dict(
    vocab_size=100,
    max_pos=16,
    type_vocab=2,
    hidden=32,
    heads=4,
    intermediate=64,
    layers=2,
)


# ---------------------------------------------------------------------------
# Shared math helpers (used by both the kernel and the pure-JAX reference)
# ---------------------------------------------------------------------------
def _layernorm(x, g, b, eps):
    mean = jnp.mean(x, axis=-1, keepdims=True)
    var = jnp.mean((x - mean) ** 2, axis=-1, keepdims=True)
    inv = jax.lax.rsqrt(var + eps)
    return (x - mean) * inv * g + b


def _gelu(x):
    # TODO(synk): HF BERT uses exact erf-GELU; tanh approximation used here for
    # robust Mosaic lowering (differences ~1e-3).
    c = math.sqrt(2.0 / math.pi)
    return 0.5 * x * (1.0 + jnp.tanh(c * (x + 0.044715 * x * x * x)))


# ---------------------------------------------------------------------------
# The fused encoder kernel: whole forward pass, single invocation (no grid)
# ---------------------------------------------------------------------------
def _bert_encoder_kernel(mask_ref, emb_ref, emb_g_ref, emb_b_ref,
                         qkv_w_ref, qkv_b_ref, o_w_ref, o_b_ref,
                         ln1_g_ref, ln1_b_ref,
                         ff1_w_ref, ff1_b_ref, ff2_w_ref, ff2_b_ref,
                         ln2_g_ref, ln2_b_ref,
                         cls_ref, *, B, S, nH, dh, L, eps):
    H = nH * dh

    # Embedding LayerNorm seeds the hidden state (stays on-chip; it never
    # round-trips to HBM between layers).
    x = _layernorm(emb_ref[...].astype(jnp.float32),
                   emb_g_ref[...], emb_b_ref[...], eps)            # (B*S, H) f32

    # Layer-invariant additive attention-mask bias, laid out for the
    # head-major batched attention: (nH*B, 1, S).  Computed once.
    bias = (1.0 - mask_ref[...]) * jnp.float32(-10000.0)            # (B, S)
    bias = jnp.tile(bias, (nH, 1))[:, None, :]                      # (nH*B, 1, S)

    scale = jnp.float32(1.0 / math.sqrt(dh))

    def split_heads(t):
        # (B*S, H) -> (nH*B, S, dh).  Heads go to the MAJOR batch axis, so no
        # minor-dim transpose is required inside the kernel.
        parts = [t[:, h * dh:(h + 1) * dh].reshape(B, S, dh) for h in range(nH)]
        return jnp.stack(parts, axis=0).reshape(nH * B, S, dh)

    for layer in range(L):                 # static unroll; weights VMEM-resident
        # ----- fused QKV projection: one (H, 3H) bf16 matmul, f32 accumulate --
        qkv = jnp.dot(x.astype(jnp.bfloat16), qkv_w_ref[layer],
                      preferred_element_type=jnp.float32) + qkv_b_ref[layer]
        q = split_heads(qkv[:, 0 * H:1 * H] * scale)
        k = split_heads(qkv[:, 1 * H:2 * H])
        v = split_heads(qkv[:, 2 * H:3 * H])

        # ----- attention: one batched einsum pair over all nH*B heads --------
        s = jnp.einsum('bqd,bkd->bqk',
                       q.astype(jnp.bfloat16), k.astype(jnp.bfloat16),
                       preferred_element_type=jnp.float32) + bias
        s = s - jnp.max(s, axis=-1, keepdims=True)
        p = jnp.exp(s)
        p = p * pl.reciprocal(jnp.sum(p, axis=-1, keepdims=True), approx=True)
        ctx = jnp.einsum('bqk,bkd->bqd',
                         p.astype(jnp.bfloat16), v.astype(jnp.bfloat16),
                         preferred_element_type=jnp.float32)         # (nH*B, S, dh)

        # merge heads back to (B*S, H)
        ctx = ctx.reshape(nH, B * S, dh)
        ctx = jnp.concatenate([ctx[h] for h in range(nH)], axis=-1)  # (B*S, H)

        # ----- attention output projection + residual LayerNorm --------------
        attn = jnp.dot(ctx.astype(jnp.bfloat16), o_w_ref[layer],
                       preferred_element_type=jnp.float32) + o_b_ref[layer]
        x = _layernorm(attn + x, ln1_g_ref[layer], ln1_b_ref[layer], eps)

        # ----- feed-forward (ff1 + GELU + ff2) + residual LayerNorm ----------
        ff = jnp.dot(x.astype(jnp.bfloat16), ff1_w_ref[layer],
                     preferred_element_type=jnp.float32) + ff1_b_ref[layer]
        ff = _gelu(ff)
        ff = jnp.dot(ff.astype(jnp.bfloat16), ff2_w_ref[layer],
                     preferred_element_type=jnp.float32) + ff2_b_ref[layer]
        x = _layernorm(ff + x, ln2_g_ref[layer], ln2_b_ref[layer], eps)

    # Minimal output: only the CLS rows leave the kernel, shape (B, H).
    cls_ref[...] = x.reshape(B, S, H)[:, 0, :]


# ---------------------------------------------------------------------------
# Parameters
# ---------------------------------------------------------------------------
def init_params(key, cfg):
    H, I = cfg["hidden"], cfg["intermediate"]
    std = 0.02

    def nrm(k, shape):
        return std * jax.random.normal(k, shape, dtype=jnp.float32)

    keys = iter(jax.random.split(key, 8 + 12 * cfg["layers"]))
    params = {
        "word_emb": nrm(next(keys), (cfg["vocab_size"], H)),
        "pos_emb": nrm(next(keys), (cfg["max_pos"], H)),
        "tok_emb": nrm(next(keys), (cfg["type_vocab"], H)),
        "emb_ln_g": jnp.ones((H,), jnp.float32),
        "emb_ln_b": jnp.zeros((H,), jnp.float32),
        "layers": [],
    }
    for _ in range(cfg["layers"]):
        params["layers"].append({
            "q_w": nrm(next(keys), (H, H)), "q_b": jnp.zeros((H,), jnp.float32),
            "k_w": nrm(next(keys), (H, H)), "k_b": jnp.zeros((H,), jnp.float32),
            "v_w": nrm(next(keys), (H, H)), "v_b": jnp.zeros((H,), jnp.float32),
            "o_w": nrm(next(keys), (H, H)), "o_b": jnp.zeros((H,), jnp.float32),
            "ln1_g": jnp.ones((H,), jnp.float32), "ln1_b": jnp.zeros((H,), jnp.float32),
            "ff1_w": nrm(next(keys), (H, I)), "ff1_b": jnp.zeros((I,), jnp.float32),
            "ff2_w": nrm(next(keys), (I, H)), "ff2_b": jnp.zeros((H,), jnp.float32),
            "ln2_g": jnp.ones((H,), jnp.float32), "ln2_b": jnp.zeros((H,), jnp.float32),
        })
    return params


# ---------------------------------------------------------------------------
# Wrapper-side input packing (shared by kernel wrapper and reference)
# ---------------------------------------------------------------------------
def _pack_inputs(params, input_ids, attention_mask, cfg):
    B, S = input_ids.shape
    H, L, I = cfg["hidden"], cfg["layers"], cfg["intermediate"]

    # Embedding gathers stay as plain-JAX glue (tiny, data-dependent indexing).
    # token_type_ids default to 0, matching BertModel(input_ids, attention_mask).
    emb = (params["word_emb"][input_ids]
           + params["pos_emb"][:S][None, :, :]
           + params["tok_emb"][0][None, None, :])
    emb = emb.reshape(B * S, H).astype(jnp.float32)
    mask_f = attention_mask.astype(jnp.float32)
    emb_g = params["emb_ln_g"].reshape(1, H)
    emb_b = params["emb_ln_b"].reshape(1, H)

    layers = params["layers"]

    def stack(name, dtype=jnp.float32):
        return jnp.stack([l[name] for l in layers]).astype(dtype)

    # Matmul weights pre-cast to bf16 (MXU-native everywhere); biases / LN in f32.
    qkv_w = jnp.stack([jnp.concatenate([l["q_w"], l["k_w"], l["v_w"]], axis=1)
                       for l in layers]).astype(jnp.bfloat16)        # (L, H, 3H)
    qkv_b = jnp.stack([jnp.concatenate([l["q_b"], l["k_b"], l["v_b"]])
                       for l in layers]).reshape(L, 1, 3 * H)         # (L, 1, 3H)
    o_w = stack("o_w", jnp.bfloat16)                                  # (L, H, H)
    o_b = stack("o_b").reshape(L, 1, H)
    ln1_g = stack("ln1_g").reshape(L, 1, H)
    ln1_b = stack("ln1_b").reshape(L, 1, H)
    ff1_w = stack("ff1_w", jnp.bfloat16)                              # (L, H, I)
    ff1_b = stack("ff1_b").reshape(L, 1, I)
    ff2_w = stack("ff2_w", jnp.bfloat16)                              # (L, I, H)
    ff2_b = stack("ff2_b").reshape(L, 1, H)
    ln2_g = stack("ln2_g").reshape(L, 1, H)
    ln2_b = stack("ln2_b").reshape(L, 1, H)

    return (mask_f, emb, emb_g, emb_b, qkv_w, qkv_b, o_w, o_b,
            ln1_g, ln1_b, ff1_w, ff1_b, ff2_w, ff2_b, ln2_g, ln2_b)


# ---------------------------------------------------------------------------
# Forward wrapper
# ---------------------------------------------------------------------------
def dialogue_bert_forward(params, input_ids, attention_mask, cfg):
    """Returns last_hidden_state[:, 0, :] ([CLS] embedding), shape (B, H)."""
    B, S = input_ids.shape
    H, nH, L = cfg["hidden"], cfg["heads"], cfg["layers"]
    dh = H // nH

    operands = _pack_inputs(params, input_ids, attention_mask, cfg)
    vmem = pl.BlockSpec(memory_space=pltpu.MemorySpace.VMEM)

    return pl.pallas_call(
        functools.partial(_bert_encoder_kernel,
                          B=B, S=S, nH=nH, dh=dh, L=L, eps=1e-12),
        out_shape=jax.ShapeDtypeStruct((B, H), jnp.float32),
        in_specs=[vmem] * len(operands),
        out_specs=vmem,
    )(*operands)


# ---------------------------------------------------------------------------
# Pure-JAX reference (same math / same bf16 weight cast, exact softmax)
# ---------------------------------------------------------------------------
def _reference_forward(params, input_ids, attention_mask, cfg):
    B, S = input_ids.shape
    H, nH, L = cfg["hidden"], cfg["heads"], cfg["layers"]
    dh = H // nH
    eps = 1e-12
    (mask_f, emb, emb_g, emb_b, qkv_w, qkv_b, o_w, o_b,
     ln1_g, ln1_b, ff1_w, ff1_b, ff2_w, ff2_b, ln2_g, ln2_b) = _pack_inputs(
        params, input_ids, attention_mask, cfg)

    x = _layernorm(emb, emb_g, emb_b, eps)
    bias = (1.0 - mask_f) * -10000.0                                  # (B, S)
    for l in range(L):
        qkv = jnp.dot(x.astype(jnp.bfloat16), qkv_w[l],
                      preferred_element_type=jnp.float32) + qkv_b[l]
        q, k, v = jnp.split(qkv, 3, axis=-1)

        def sh(t):
            return t.reshape(B, S, nH, dh).transpose(0, 2, 1, 3)      # (B,nH,S,dh)

        q = sh(q) * (1.0 / math.sqrt(dh))
        k, v = sh(k), sh(v)
        s = jnp.einsum('bhqd,bhkd->bhqk',
                       q.astype(jnp.bfloat16), k.astype(jnp.bfloat16),
                       preferred_element_type=jnp.float32)
        s = s + bias[:, None, None, :]
        p = jax.nn.softmax(s, axis=-1)
        ctx = jnp.einsum('bhqk,bhkd->bhqd',
                         p.astype(jnp.bfloat16), v.astype(jnp.bfloat16),
                         preferred_element_type=jnp.float32)
        ctx = ctx.transpose(0, 2, 1, 3).reshape(B * S, H)
        attn = jnp.dot(ctx.astype(jnp.bfloat16), o_w[l],
                       preferred_element_type=jnp.float32) + o_b[l]
        x = _layernorm(attn + x, ln1_g[l], ln1_b[l], eps)
        ff = jnp.dot(x.astype(jnp.bfloat16), ff1_w[l],
                     preferred_element_type=jnp.float32) + ff1_b[l]
        ff = _gelu(ff)
        ff = jnp.dot(ff.astype(jnp.bfloat16), ff2_w[l],
                     preferred_element_type=jnp.float32) + ff2_b[l]
        x = _layernorm(ff + x, ln2_g[l], ln2_b[l], eps)
    return x.reshape(B, S, H)[:, 0, :]


# ---------------------------------------------------------------------------
# Main
# ---------------------------------------------------------------------------
if __name__ == "__main__":
    cfg = CONFIG
    B, S = 2, 8

    key = jax.random.PRNGKey(0)
    pkey, ikey = jax.random.split(key)
    params = init_params(pkey, cfg)

    input_ids = jax.random.randint(ikey, (B, S), 0, cfg["vocab_size"],
                                   dtype=jnp.int32)
    # Simulate padding: last two tokens of the second sequence are masked out.
    attention_mask = jnp.array(
        [[1, 1, 1, 1, 1, 1, 1, 1],
         [1, 1, 1, 1, 1, 1, 0, 0]], dtype=jnp.int32)

    fwd = jax.jit(functools.partial(dialogue_bert_forward, cfg=cfg))
    cls = jax.block_until_ready(fwd(params, input_ids, attention_mask))

    assert cls.shape == (B, cfg["hidden"]) and cls.dtype == jnp.float32
    assert bool(jnp.all(jnp.isfinite(cls)))

    ref = _reference_forward(params, input_ids, attention_mask, cfg)
    err = float(jnp.max(jnp.abs(cls - ref)))
    assert err < 5e-2, f"max abs diff vs reference too large: {err}"

    print("KERNEL_OK")
</pallas_src>

<mosaic_0001>
module attributes {stable_mosaic.version = 11 : i64} {
  func.func @_bert_encoder_kernel(%arg0: memref<2x8xf32, #tpu.memory_space<vmem>>, %arg1: memref<16x32xf32, #tpu.memory_space<vmem>>, %arg2: memref<1x32xf32, #tpu.memory_space<vmem>>, %arg3: memref<1x32xf32, #tpu.memory_space<vmem>>, %arg4: memref<2x32x96xbf16, #tpu.memory_space<vmem>>, %arg5: memref<2x1x96xf32, #tpu.memory_space<vmem>>, %arg6: memref<2x32x32xbf16, #tpu.memory_space<vmem>>, %arg7: memref<2x1x32xf32, #tpu.memory_space<vmem>>, %arg8: memref<2x1x32xf32, #tpu.memory_space<vmem>>, %arg9: memref<2x1x32xf32, #tpu.memory_space<vmem>>, %arg10: memref<2x32x64xbf16, #tpu.memory_space<vmem>>, %arg11: memref<2x1x64xf32, #tpu.memory_space<vmem>>, %arg12: memref<2x64x32xbf16, #tpu.memory_space<vmem>>, %arg13: memref<2x1x32xf32, #tpu.memory_space<vmem>>, %arg14: memref<2x1x32xf32, #tpu.memory_space<vmem>>, %arg15: memref<2x1x32xf32, #tpu.memory_space<vmem>>, %arg16: memref<2x32xf32, #tpu.memory_space<vmem>>) attributes {dimension_semantics = [], scalar_prefetch = 0 : i64, scratch_operands = 0 : i64, tpu.core_type = #tpu.core_type<tc>} {
    %c0 = arith.constant 0 : index
    %c0_0 = arith.constant 0 : index
    %0 = vector.load %arg1[%c0, %c0_0] : memref<16x32xf32, #tpu.memory_space<vmem>>, vector<16x32xf32>
    %c0_1 = arith.constant 0 : index
    %c0_2 = arith.constant 0 : index
    %1 = vector.load %arg2[%c0_1, %c0_2] : memref<1x32xf32, #tpu.memory_space<vmem>>, vector<1x32xf32>
    %c0_3 = arith.constant 0 : index
    %c0_4 = arith.constant 0 : index
    %2 = vector.load %arg3[%c0_3, %c0_4] : memref<1x32xf32, #tpu.memory_space<vmem>>, vector<1x32xf32>
    %cst = arith.constant dense<0.000000e+00> : vector<16xf32>
    %3 = vector.multi_reduction <add>, %0, %cst [1] : vector<16x32xf32> to vector<16xf32>
    %4 = vector.shape_cast %3 : vector<16xf32> to vector<16x1xf32>
    %cst_5 = arith.constant 3.200000e+01 : f32
    %5 = vector.broadcast %cst_5 : f32 to vector<16x1xf32>
    %6 = arith.divf %4, %5 : vector<16x1xf32>
    %7 = vector.broadcast %6 : vector<16x1xf32> to vector<16x32xf32>
    %8 = arith.subf %0, %7 : vector<16x32xf32>
    %9 = arith.mulf %8, %8 : vector<16x32xf32>
    %cst_6 = arith.constant dense<0.000000e+00> : vector<16xf32>
    %10 = vector.multi_reduction <add>, %9, %cst_6 [1] : vector<16x32xf32> to vector<16xf32>
    %11 = vector.shape_cast %10 : vector<16xf32> to vector<16x1xf32>
    %cst_7 = arith.constant 3.200000e+01 : f32
    %12 = vector.broadcast %cst_7 : f32 to vector<16x1xf32>
    %13 = arith.divf %11, %12 : vector<16x1xf32>
    %cst_8 = arith.constant 9.99999996E-13 : f32
    %14 = vector.broadcast %cst_8 : f32 to vector<16x1xf32>
    %15 = arith.addf %13, %14 : vector<16x1xf32>
    %16 = math.rsqrt %15 : vector<16x1xf32>
    %17 = vector.broadcast %6 : vector<16x1xf32> to vector<16x32xf32>
    %18 = arith.subf %0, %17 : vector<16x32xf32>
    %19 = vector.broadcast %16 : vector<16x1xf32> to vector<16x32xf32>
    %20 = arith.mulf %18, %19 : vector<16x32xf32>
    %21 = vector.broadcast %1 : vector<1x32xf32> to vector<16x32xf32>
    %22 = arith.mulf %20, %21 : vector<16x32xf32>
    %23 = vector.broadcast %2 : vector<1x32xf32> to vector<16x32xf32>
    %24 = arith.addf %22, %23 : vector<16x32xf32>
    %c0_9 = arith.constant 0 : index
    %c0_10 = arith.constant 0 : index
    %25 = vector.load %arg0[%c0_9, %c0_10] : memref<2x8xf32, #tpu.memory_space<vmem>>, vector<2x8xf32>
    %cst_11 = arith.constant 1.000000e+00 : f32
    %26 = vector.broadcast %cst_11 : f32 to vector<2x8xf32>
    %27 = arith.subf %26, %25 : vector<2x8xf32>
    %cst_12 = arith.constant -1.000000e+04 : f32
    %28 = vector.broadcast %cst_12 : f32 to vector<2x8xf32>
    %29 = arith.mulf %27, %28 : vector<2x8xf32>
    %30 = tpu.concatenate %29, %29, %29, %29 in 0 : vector<2x8xf32>, vector<2x8xf32>, vector<2x8xf32>, vector<2x8xf32> -> vector<8x8xf32>
    %31 = vector.shape_cast %30 : vector<8x8xf32> to vector<8x1x8xf32>
    %32 = arith.truncf %24 : vector<16x32xf32> to vector<16x32xbf16>
    %c0_13 = arith.constant 0 : index
    %c0_14 = arith.constant 0 : index
    %c0_15 = arith.constant 0 : index
    %33 = vector.load %arg4[%c0_13, %c0_14, %c0_15] : memref<2x32x96xbf16, #tpu.memory_space<vmem>>, vector<1x32x96xbf16>
    %34 = vector.shape_cast %33 : vector<1x32x96xbf16> to vector<32x96xbf16>
    %cst_16 = arith.constant dense<0.000000e+00> : vector<16x96xf32>
    %35 = tpu.matmul %32, %34, %cst_16 {dimension_numbers = #tpu.dot_dimension_numbers<[1], [0], [0], [1], [0, 0, 1, 1], [], []>} : vector<16x32xbf16>, vector<32x96xbf16>, vector<16x96xf32> -> vector<16x96xf32>
    %c0_17 = arith.constant 0 : index
    %c0_18 = arith.constant 0 : index
    %c0_19 = arith.constant 0 : index
    %36 = vector.load %arg5[%c0_17, %c0_18, %c0_19] : memref<2x1x96xf32, #tpu.memory_space<vmem>>, vector<1x1x96xf32>
    %37 = vector.shape_cast %36 : vector<1x1x96xf32> to vector<1x96xf32>
    %38 = vector.broadcast %37 : vector<1x96xf32> to vector<16x96xf32>
    %39 = arith.addf %35, %38 : vector<16x96xf32>
    %40 = vector.extract_strided_slice %39 {offsets = [0, 0], sizes = [16, 32], strides = [1, 1]} : vector<16x96xf32> to vector<16x32xf32>
    %cst_20 = arith.constant 0.353553385 : f32
    %41 = vector.broadcast %cst_20 : f32 to vector<16x32xf32>
    %42 = arith.mulf %40, %41 : vector<16x32xf32>
    %43 = vector.extract_strided_slice %42 {offsets = [0, 0], sizes = [16, 8], strides = [1, 1]} : vector<16x32xf32> to vector<16x8xf32>
    %44 = vector.shape_cast %43 : vector<16x8xf32> to vector<2x8x8xf32>
    %45 = vector.extract_strided_slice %42 {offsets = [0, 8], sizes = [16, 8], strides = [1, 1]} : vector<16x32xf32> to vector<16x8xf32>
    %46 = vector.shape_cast %45 : vector<16x8xf32> to vector<2x8x8xf32>
    %47 = vector.extract_strided_slice %42 {offsets = [0, 16], sizes = [16, 8], strides = [1, 1]} : vector<16x32xf32> to vector<16x8xf32>
    %48 = vector.shape_cast %47 : vector<16x8xf32> to vector<2x8x8xf32>
    %49 = vector.extract_strided_slice %42 {offsets = [0, 24], sizes = [16, 8], strides = [1, 1]} : vector<16x32xf32> to vector<16x8xf32>
    %50 = vector.shape_cast %49 : vector<16x8xf32> to vector<2x8x8xf32>
    %51 = vector.shape_cast %44 : vector<2x8x8xf32> to vector<1x2x8x8xf32>
    %52 = vector.shape_cast %46 : vector<2x8x8xf32> to vector<1x2x8x8xf32>
    %53 = vector.shape_cast %48 : vector<2x8x8xf32> to vector<1x2x8x8xf32>
    %54 = vector.shape_cast %50 : vector<2x8x8xf32> to vector<1x2x8x8xf32>
    %55 = tpu.concatenate %51, %52, %53, %54 in 0 : vector<1x2x8x8xf32>, vector<1x2x8x8xf32>, vector<1x2x8x8xf32>, vector<1x2x8x8xf32> -> vector<4x2x8x8xf32>
    %56 = vector.shape_cast %55 : vector<4x2x8x8xf32> to vector<8x8x8xf32>
    %57 = vector.extract_strided_slice %39 {offsets = [0, 32], sizes = [16, 32], strides = [1, 1]} : vector<16x96xf32> to vector<16x32xf32>
    %58 = vector.extract_strided_slice %57 {offsets = [0, 0], sizes = [16, 8], strides = [1, 1]} : vector<16x32xf32> to vector<16x8xf32>
    %59 = vector.shape_cast %58 : vector<16x8xf32> to vector<2x8x8xf32>
    %60 = vector.extract_strided_slice %57 {offsets = [0, 8], sizes = [16, 8], strides = [1, 1]} : vector<16x32xf32> to vector<16x8xf32>
    %61 = vector.shape_cast %60 : vector<16x8xf32> to vector<2x8x8xf32>
    %62 = vector.extract_strided_slice %57 {offsets = [0, 16], sizes = [16, 8], strides = [1, 1]} : vector<16x32xf32> to vector<16x8xf32>
    %63 = vector.shape_cast %62 : vector<16x8xf32> to vector<2x8x8xf32>
    %64 = vector.extract_strided_slice %57 {offsets = [0, 24], sizes = [16, 8], strides = [1, 1]} : vector<16x32xf32> to vector<16x8xf32>
    %65 = vector.shape_cast %64 : vector<16x8xf32> to vector<2x8x8xf32>
    %66 = vector.shape_cast %59 : vector<2x8x8xf32> to vector<1x2x8x8xf32>
    %67 = vector.shape_cast %61 : vector<2x8x8xf32> to vector<1x2x8x8xf32>
    %68 = vector.shape_cast %63 : vector<2x8x8xf32> to vector<1x2x8x8xf32>
    %69 = vector.shape_cast %65 : vector<2x8x8xf32> to vector<1x2x8x8xf32>
    %70 = tpu.concatenate %66, %67, %68, %69 in 0 : vector<1x2x8x8xf32>, vector<1x2x8x8xf32>, vector<1x2x8x8xf32>, vector<1x2x8x8xf32> -> vector<4x2x8x8xf32>
    %71 = vector.shape_cast %70 : vector<4x2x8x8xf32> to vector<8x8x8xf32>
    %72 = vector.extract_strided_slice %39 {offsets = [0, 64], sizes = [16, 32], strides = [1, 1]} : vector<16x96xf32> to vector<16x32xf32>
    %73 = vector.extract_strided_slice %72 {offsets = [0, 0], sizes = [16, 8], strides = [1, 1]} : vector<16x32xf32> to vector<16x8xf32>
    %74 = vector.shape_cast %73 : vector<16x8xf32> to vector<2x8x8xf32>
    %75 = vector.extract_strided_slice %72 {offsets = [0, 8], sizes = [16, 8], strides = [1, 1]} : vector<16x32xf32> to vector<16x8xf32>
    %76 = vector.shape_cast %75 : vector<16x8xf32> to vector<2x8x8xf32>
    %77 = vector.extract_strided_slice %72 {offsets = [0, 16], sizes = [16, 8], strides = [1, 1]} : vector<16x32xf32> to vector<16x8xf32>
    %78 = vector.shape_cast %77 : vector<16x8xf32> to vector<2x8x8xf32>
    %79 = vector.extract_strided_slice %72 {offsets = [0, 24], sizes = [16, 8], strides = [1, 1]} : vector<16x32xf32> to vector<16x8xf32>
    %80 = vector.shape_cast %79 : vector<16x8xf32> to vector<2x8x8xf32>
    %81 = vector.shape_cast %74 : vector<2x8x8xf32> to vector<1x2x8x8xf32>
    %82 = vector.shape_cast %76 : vector<2x8x8xf32> to vector<1x2x8x8xf32>
    %83 = vector.shape_cast %78 : vector<2x8x8xf32> to vector<1x2x8x8xf32>
    %84 = vector.shape_cast %80 : vector<2x8x8xf32> to vector<1x2x8x8xf32>
    %85 = tpu.concatenate %81, %82, %83, %84 in 0 : vector<1x2x8x8xf32>, vector<1x2x8x8xf32>, vector<1x2x8x8xf32>, vector<1x2x8x8xf32> -> vector<4x2x8x8xf32>
    %86 = vector.shape_cast %85 : vector<4x2x8x8xf32> to vector<8x8x8xf32>
    %87 = arith.truncf %56 : vector<8x8x8xf32> to vector<8x8x8xbf16>
    %88 = arith.truncf %71 : vector<8x8x8xf32> to vector<8x8x8xbf16>
    "tpu.trace_start"() <{level = 10 : i32, message = "bqd,bkd->bqk"}> : () -> ()
    %cst_21 = arith.constant dense<0.000000e+00> : vector<8x8x8xf32>
    %89 = tpu.matmul %87, %88, %cst_21 {dimension_numbers = #tpu.dot_dimension_numbers<[2], [2], [1], [1], [0, 0, 0, 1, 1, 1], [0], [0]>} : vector<8x8x8xbf16>, vector<8x8x8xbf16>, vector<8x8x8xf32> -> vector<8x8x8xf32>
    "tpu.trace_stop"() : () -> ()
    %90 = vector.broadcast %31 : vector<8x1x8xf32> to vector<8x8x8xf32>
    %91 = arith.addf %89, %90 : vector<8x8x8xf32>
    %cst_22 = arith.constant dense<0xFF800000> : vector<8x8xf32>
    %92 = vector.multi_reduction <maximumf>, %91, %cst_22 [2] : vector<8x8x8xf32> to vector<8x8xf32>
    %93 = vector.shape_cast %92 : vector<8x8xf32> to vector<8x8x1xf32>
    %94 = vector.broadcast %93 : vector<8x8x1xf32> to vector<8x8x8xf32>
    %95 = arith.subf %91, %94 : vector<8x8x8xf32>
    %96 = math.exp %95 : vector<8x8x8xf32>
    %cst_23 = arith.constant dense<0.000000e+00> : vector<8x8xf32>
    %97 = vector.multi_reduction <add>, %96, %cst_23 [2] : vector<8x8x8xf32> to vector<8x8xf32>
    %98 = vector.shape_cast %97 : vector<8x8xf32> to vector<8x8x1xf32>
    %99 = tpu.reciprocal %98 {approx = true} : vector<8x8x1xf32> -> vector<8x8x1xf32>
    %100 = vector.broadcast %99 : vector<8x8x1xf32> to vector<8x8x8xf32>
    %101 = arith.mulf %96, %100 : vector<8x8x8xf32>
    %102 = arith.truncf %101 : vector<8x8x8xf32> to vector<8x8x8xbf16>
    %103 = arith.truncf %86 : vector<8x8x8xf32> to vector<8x8x8xbf16>
    "tpu.trace_start"() <{level = 10 : i32, message = "bqk,bkd->bqd"}> : () -> ()
    %cst_24 = arith.constant dense<0.000000e+00> : vector<8x8x8xf32>
    %104 = tpu.matmul %102, %103, %cst_24 {dimension_numbers = #tpu.dot_dimension_numbers<[2], [1], [1], [2], [0, 0, 0, 1, 1, 2], [0], [0]>} : vector<8x8x8xbf16>, vector<8x8x8xbf16>, vector<8x8x8xf32> -> vector<8x8x8xf32>
    "tpu.trace_stop"() : () -> ()
    %105 = vector.shape_cast %104 : vector<8x8x8xf32> to vector<4x16x8xf32>
    %106 = vector.extract_strided_slice %105 {offsets = [0, 0, 0], sizes = [1, 16, 8], strides = [1, 1, 1]} : vector<4x16x8xf32> to vector<1x16x8xf32>
    %107 = vector.shape_cast %106 : vector<1x16x8xf32> to vector<16x8xf32>
    %108 = vector.extract_strided_slice %105 {offsets = [1, 0, 0], sizes = [1, 16, 8], strides = [1, 1, 1]} : vector<4x16x8xf32> to vector<1x16x8xf32>
    %109 = vector.shape_cast %108 : vector<1x16x8xf32> to vector<16x8xf32>
    %110 = vector.extract_strided_slice %105 {offsets = [2, 0, 0], sizes = [1, 16, 8], strides = [1, 1, 1]} : vector<4x16x8xf32> to vector<1x16x8xf32>
    %111 = vector.shape_cast %110 : vector<1x16x8xf32> to vector<16x8xf32>
    %112 = vector.extract_strided_slice %105 {offsets = [3, 0, 0], sizes = [1, 16, 8], strides = [1, 1, 1]} : vector<4x16x8xf32> to vector<1x16x8xf32>
    %113 = vector.shape_cast %112 : vector<1x16x8xf32> to vector<16x8xf32>
    %114 = tpu.concatenate %107, %109, %111, %113 in 1 : vector<16x8xf32>, vector<16x8xf32>, vector<16x8xf32>, vector<16x8xf32> -> vector<16x32xf32>
    %115 = arith.truncf %114 : vector<16x32xf32> to vector<16x32xbf16>
    %c0_25 = arith.constant 0 : index
    %c0_26 = arith.constant 0 : index
    %c0_27 = arith.constant 0 : index
    %116 = vector.load %arg6[%c0_25, %c0_26, %c0_27] : memref<2x32x32xbf16, #tpu.memory_space<vmem>>, vector<1x32x32xbf16>
    %117 = vector.shape_cast %116 : vector<1x32x32xbf16> to vector<32x32xbf16>
    %cst_28 = arith.constant dense<0.000000e+00> : vector<16x32xf32>
    %118 = tpu.matmul %115, %117, %cst_28 {dimension_numbers = #tpu.dot_dimension_numbers<[1], [0], [0], [1], [0, 0, 1, 1], [], []>} : vector<16x32xbf16>, vector<32x32xbf16>, vector<16x32xf32> -> vector<16x32xf32>
    %c0_29 = arith.constant 0 : index
    %c0_30 = arith.constant 0 : index
    %c0_31 = arith.constant 0 : index
    %119 = vector.load %arg7[%c0_29, %c0_30, %c0_31] : memref<2x1x32xf32, #tpu.memory_space<vmem>>, vector<1x1x32xf32>
    %120 = vector.shape_cast %119 : vector<1x1x32xf32> to vector<1x32xf32>
    %121 = vector.broadcast %120 : vector<1x32xf32> to vector<16x32xf32>
    %122 = arith.addf %118, %121 : vector<16x32xf32>
    %123 = arith.addf %122, %24 : vector<16x32xf32>
    %c0_32 = arith.constant 0 : index
    %c0_33 = arith.constant 0 : index
    %c0_34 = arith.constant 0 : index
    %124 = vector.load %arg8[%c0_32, %c0_33, %c0_34] : memref<2x1x32xf32, #tpu.memory_space<vmem>>, vector<1x1x32xf32>
    %125 = vector.shape_cast %124 : vector<1x1x32xf32> to vector<1x32xf32>
    %c0_35 = arith.constant 0 : index
    %c0_36 = arith.constant 0 : index
    %c0_37 = arith.constant 0 : index
    %126 = vector.load %arg9[%c0_35, %c0_36, %c0_37] : memref<2x1x32xf32, #tpu.memory_space<vmem>>, vector<1x1x32xf32>
    %127 = vector.shape_cast %126 : vector<1x1x32xf32> to vector<1x32xf32>
    %cst_38 = arith.constant dense<0.000000e+00> : vector<16xf32>
    %128 = vector.multi_reduction <add>, %123, %cst_38 [1] : vector<16x32xf32> to vector<16xf32>
    %129 = vector.shape_cast %128 : vector<16xf32> to vector<16x1xf32>
    %cst_39 = arith.constant 3.200000e+01 : f32
    %130 = vector.broadcast %cst_39 : f32 to vector<16x1xf32>
    %131 = arith.divf %129, %130 : vector<16x1xf32>
    %132 = vector.broadcast %131 : vector<16x1xf32> to vector<16x32xf32>
    %133 = arith.subf %123, %132 : vector<16x32xf32>
    %134 = arith.mulf %133, %133 : vector<16x32xf32>
    %cst_40 = arith.constant dense<0.000000e+00> : vector<16xf32>
    %135 = vector.multi_reduction <add>, %134, %cst_40 [1] : vector<16x32xf32> to vector<16xf32>
    %136 = vector.shape_cast %135 : vector<16xf32> to vector<16x1xf32>
    %cst_41 = arith.constant 3.200000e+01 : f32
    %137 = vector.broadcast %cst_41 : f32 to vector<16x1xf32>
    %138 = arith.divf %136, %137 : vector<16x1xf32>
    %cst_42 = arith.constant 9.99999996E-13 : f32
    %139 = vector.broadcast %cst_42 : f32 to vector<16x1xf32>
    %140 = arith.addf %138, %139 : vector<16x1xf32>
    %141 = math.rsqrt %140 : vector<16x1xf32>
    %142 = vector.broadcast %131 : vector<16x1xf32> to vector<16x32xf32>
    %143 = arith.subf %123, %142 : vector<16x32xf32>
    %144 = vector.broadcast %141 : vector<16x1xf32> to vector<16x32xf32>
    %145 = arith.mulf %143, %144 : vector<16x32xf32>
    %146 = vector.broadcast %125 : vector<1x32xf32> to vector<16x32xf32>
    %147 = arith.mulf %145, %146 : vector<16x32xf32>
    %148 = vector.broadcast %127 : vector<1x32xf32> to vector<16x32xf32>
    %149 = arith.addf %147, %148 : vector<16x32xf32>
    %150 = arith.truncf %149 : vector<16x32xf32> to vector<16x32xbf16>
    %c0_43 = arith.constant 0 : index
    %c0_44 = arith.constant 0 : index
    %c0_45 = arith.constant 0 : index
    %151 = vector.load %arg10[%c0_43, %c0_44, %c0_45] : memref<2x32x64xbf16, #tpu.memory_space<vmem>>, vector<1x32x64xbf16>
    %152 = vector.shape_cast %151 : vector<1x32x64xbf16> to vector<32x64xbf16>
    %cst_46 = arith.constant dense<0.000000e+00> : vector<16x64xf32>
    %153 = tpu.matmul %150, %152, %cst_46 {dimension_numbers = #tpu.dot_dimension_numbers<[1], [0], [0], [1], [0, 0, 1, 1], [], []>} : vector<16x32xbf16>, vector<32x64xbf16>, vector<16x64xf32> -> vector<16x64xf32>
    %c0_47 = arith.constant 0 : index
    %c0_48 = arith.constant 0 : index
    %c0_49 = arith.constant 0 : index
    %154 = vector.load %arg11[%c0_47, %c0_48, %c0_49] : memref<2x1x64xf32, #tpu.memory_space<vmem>>, vector<1x1x64xf32>
    %155 = vector.shape_cast %154 : vector<1x1x64xf32> to vector<1x64xf32>
    %156 = vector.broadcast %155 : vector<1x64xf32> to vector<16x64xf32>
    %157 = arith.addf %153, %156 : vector<16x64xf32>
    %cst_50 = arith.constant 5.000000e-01 : f32
    %158 = vector.broadcast %cst_50 : f32 to vector<16x64xf32>
    %159 = arith.mulf %158, %157 : vector<16x64xf32>
    %cst_51 = arith.constant 4.471500e-02 : f32
    %160 = vector.broadcast %cst_51 : f32 to vector<16x64xf32>
    %161 = arith.mulf %160, %157 : vector<16x64xf32>
    %162 = arith.mulf %161, %157 : vector<16x64xf32>
    %163 = arith.mulf %162, %157 : vector<16x64xf32>
    %164 = arith.addf %157, %163 : vector<16x64xf32>
    %cst_52 = arith.constant 0.797884583 : f32
    %165 = vector.broadcast %cst_52 : f32 to vector<16x64xf32>
    %166 = arith.mulf %165, %164 : vector<16x64xf32>
    %167 = math.tanh %166 : vector<16x64xf32>
    %cst_53 = arith.constant 1.000000e+00 : f32
    %168 = vector.broadcast %cst_53 : f32 to vector<16x64xf32>
    %169 = arith.addf %168, %167 : vector<16x64xf32>
    %170 = arith.mulf %159, %169 : vector<16x64xf32>
    %171 = arith.truncf %170 : vector<16x64xf32> to vector<16x64xbf16>
    %c0_54 = arith.constant 0 : index
    %c0_55 = arith.constant 0 : index
    %c0_56 = arith.constant 0 : index
    %172 = vector.load %arg12[%c0_54, %c0_55, %c0_56] : memref<2x64x32xbf16, #tpu.memory_space<vmem>>, vector<1x64x32xbf16>
    %173 = vector.shape_cast %172 : vector<1x64x32xbf16> to vector<64x32xbf16>
    %cst_57 = arith.constant dense<0.000000e+00> : vector<16x32xf32>
    %174 = tpu.matmul %171, %173, %cst_57 {dimension_numbers = #tpu.dot_dimension_numbers<[1], [0], [0], [1], [0, 0, 1, 1], [], []>} : vector<16x64xbf16>, vector<64x32xbf16>, vector<16x32xf32> -> vector<16x32xf32>
    %c0_58 = arith.constant 0 : index
    %c0_59 = arith.constant 0 : index
    %c0_60 = arith.constant 0 : index
    %175 = vector.load %arg13[%c0_58, %c0_59, %c0_60] : memref<2x1x32xf32, #tpu.memory_space<vmem>>, vector<1x1x32xf32>
    %176 = vector.shape_cast %175 : vector<1x1x32xf32> to vector<1x32xf32>
    %177 = vector.broadcast %176 : vector<1x32xf32> to vector<16x32xf32>
    %178 = arith.addf %174, %177 : vector<16x32xf32>
    %179 = arith.addf %178, %149 : vector<16x32xf32>
    %c0_61 = arith.constant 0 : index
    %c0_62 = arith.constant 0 : index
    %c0_63 = arith.constant 0 : index
    %180 = vector.load %arg14[%c0_61, %c0_62, %c0_63] : memref<2x1x32xf32, #tpu.memory_space<vmem>>, vector<1x1x32xf32>
    %181 = vector.shape_cast %180 : vector<1x1x32xf32> to vector<1x32xf32>
    %c0_64 = arith.constant 0 : index
    %c0_65 = arith.constant 0 : index
    %c0_66 = arith.constant 0 : index
    %182 = vector.load %arg15[%c0_64, %c0_65, %c0_66] : memref<2x1x32xf32, #tpu.memory_space<vmem>>, vector<1x1x32xf32>
    %183 = vector.shape_cast %182 : vector<1x1x32xf32> to vector<1x32xf32>
    %cst_67 = arith.constant dense<0.000000e+00> : vector<16xf32>
    %184 = vector.multi_reduction <add>, %179, %cst_67 [1] : vector<16x32xf32> to vector<16xf32>
    %185 = vector.shape_cast %184 : vector<16xf32> to vector<16x1xf32>
    %cst_68 = arith.constant 3.200000e+01 : f32
    %186 = vector.broadcast %cst_68 : f32 to vector<16x1xf32>
    %187 = arith.divf %185, %186 : vector<16x1xf32>
    %188 = vector.broadcast %187 : vector<16x1xf32> to vector<16x32xf32>
    %189 = arith.subf %179, %188 : vector<16x32xf32>
    %190 = arith.mulf %189, %189 : vector<16x32xf32>
    %cst_69 = arith.constant dense<0.000000e+00> : vector<16xf32>
    %191 = vector.multi_reduction <add>, %190, %cst_69 [1] : vector<16x32xf32> to vector<16xf32>
    %192 = vector.shape_cast %191 : vector<16xf32> to vector<16x1xf32>
    %cst_70 = arith.constant 3.200000e+01 : f32
    %193 = vector.broadcast %cst_70 : f32 to vector<16x1xf32>
    %194 = arith.divf %192, %193 : vector<16x1xf32>
    %cst_71 = arith.constant 9.99999996E-13 : f32
    %195 = vector.broadcast %cst_71 : f32 to vector<16x1xf32>
    %196 = arith.addf %194, %195 : vector<16x1xf32>
    %197 = math.rsqrt %196 : vector<16x1xf32>
    %198 = vector.broadcast %187 : vector<16x1xf32> to vector<16x32xf32>
    %199 = arith.subf %179, %198 : vector<16x32xf32>
    %200 = vector.broadcast %197 : vector<16x1xf32> to vector<16x32xf32>
    %201 = arith.mulf %199, %200 : vector<16x32xf32>
    %202 = vector.broadcast %181 : vector<1x32xf32> to vector<16x32xf32>
    %203 = arith.mulf %201, %202 : vector<16x32xf32>
    %204 = vector.broadcast %183 : vector<1x32xf32> to vector<16x32xf32>
    %205 = arith.addf %203, %204 : vector<16x32xf32>
    %206 = arith.truncf %205 : vector<16x32xf32> to vector<16x32xbf16>
    %c1 = arith.constant 1 : index
    %c0_72 = arith.constant 0 : index
    %c0_73 = arith.constant 0 : index
    %207 = vector.load %arg4[%c1, %c0_72, %c0_73] : memref<2x32x96xbf16, #tpu.memory_space<vmem>>, vector<1x32x96xbf16>
    %208 = vector.shape_cast %207 : vector<1x32x96xbf16> to vector<32x96xbf16>
    %cst_74 = arith.constant dense<0.000000e+00> : vector<16x96xf32>
    %209 = tpu.matmul %206, %208, %cst_74 {dimension_numbers = #tpu.dot_dimension_numbers<[1], [0], [0], [1], [0, 0, 1, 1], [], []>} : vector<16x32xbf16>, vector<32x96xbf16>, vector<16x96xf32> -> vector<16x96xf32>
    %c1_75 = arith.constant 1 : index
    %c0_76 = arith.constant 0 : index
    %c0_77 = arith.constant 0 : index
    %210 = vector.load %arg5[%c1_75, %c0_76, %c0_77] : memref<2x1x96xf32, #tpu.memory_space<vmem>>, vector<1x1x96xf32>
    %211 = vector.shape_cast %210 : vector<1x1x96xf32> to vector<1x96xf32>
    %212 = vector.broadcast %211 : vector<1x96xf32> to vector<16x96xf32>
    %213 = arith.addf %209, %212 : vector<16x96xf32>
    %214 = vector.extract_strided_slice %213 {offsets = [0, 0], sizes = [16, 32], strides = [1, 1]} : vector<16x96xf32> to vector<16x32xf32>
    %cst_78 = arith.constant 0.353553385 : f32
    %215 = vector.broadcast %cst_78 : f32 to vector<16x32xf32>
    %216 = arith.mulf %214, %215 : vector<16x32xf32>
    %217 = vector.extract_strided_slice %216 {offsets = [0, 0], sizes = [16, 8], strides = [1, 1]} : vector<16x32xf32> to vector<16x8xf32>
    %218 = vector.shape_cast %217 : vector<16x8xf32> to vector<2x8x8xf32>
    %219 = vector.extract_strided_slice %216 {offsets = [0, 8], sizes = [16, 8], strides = [1, 1]} : vector<16x32xf32> to vector<16x8xf32>
    %220 = vector.shape_cast %219 : vector<16x8xf32> to vector<2x8x8xf32>
    %221 = vector.extract_strided_slice %216 {offsets = [0, 16], sizes = [16, 8], strides = [1, 1]} : vector<16x32xf32> to vector<16x8xf32>
    %222 = vector.shape_cast %221 : vector<16x8xf32> to vector<2x8x8xf32>
    %223 = vector.extract_strided_slice %216 {offsets = [0, 24], sizes = [16, 8], strides = [1, 1]} : vector<16x32xf32> to vector<16x8xf32>
    %224 = vector.shape_cast %223 : vector<16x8xf32> to vector<2x8x8xf32>
    %225 = vector.shape_cast %218 : vector<2x8x8xf32> to vector<1x2x8x8xf32>
    %226 = vector.shape_cast %220 : vector<2x8x8xf32> to vector<1x2x8x8xf32>
    %227 = vector.shape_cast %222 : vector<2x8x8xf32> to vector<1x2x8x8xf32>
    %228 = vector.shape_cast %224 : vector<2x8x8xf32> to vector<1x2x8x8xf32>
    %229 = tpu.concatenate %225, %226, %227, %228 in 0 : vector<1x2x8x8xf32>, vector<1x2x8x8xf32>, vector<1x2x8x8xf32>, vector<1x2x8x8xf32> -> vector<4x2x8x8xf32>
    %230 = vector.shape_cast %229 : vector<4x2x8x8xf32> to vector<8x8x8xf32>
    %231 = vector.extract_strided_slice %213 {offsets = [0, 32], sizes = [16, 32], strides = [1, 1]} : vector<16x96xf32> to vector<16x32xf32>
    %232 = vector.extract_strided_slice %231 {offsets = [0, 0], sizes = [16, 8], strides = [1, 1]} : vector<16x32xf32> to vector<16x8xf32>
    %233 = vector.shape_cast %232 : vector<16x8xf32> to vector<2x8x8xf32>
    %234 = vector.extract_strided_slice %231 {offsets = [0, 8], sizes = [16, 8], strides = [1, 1]} : vector<16x32xf32> to vector<16x8xf32>
    %235 = vector.shape_cast %234 : vector<16x8xf32> to vector<2x8x8xf32>
    %236 = vector.extract_strided_slice %231 {offsets = [0, 16], sizes = [16, 8], strides = [1, 1]} : vector<16x32xf32> to vector<16x8xf32>
    %237 = vector.shape_cast %236 : vector<16x8xf32> to vector<2x8x8xf32>
    %238 = vector.extract_strided_slice %231 {offsets = [0, 24], sizes = [16, 8], strides = [1, 1]} : vector<16x32xf32> to vector<16x8xf32>
    %239 = vector.shape_cast %238 : vector<16x8xf32> to vector<2x8x8xf32>
    %240 = vector.shape_cast %233 : vector<2x8x8xf32> to vector<1x2x8x8xf32>
    %241 = vector.shape_cast %235 : vector<2x8x8xf32> to vector<1x2x8x8xf32>
    %242 = vector.shape_cast %237 : vector<2x8x8xf32> to vector<1x2x8x8xf32>
    %243 = vector.shape_cast %239 : vector<2x8x8xf32> to vector<1x2x8x8xf32>
    %244 = tpu.concatenate %240, %241, %242, %243 in 0 : vector<1x2x8x8xf32>, vector<1x2x8x8xf32>, vector<1x2x8x8xf32>, vector<1x2x8x8xf32> -> vector<4x2x8x8xf32>
    %245 = vector.shape_cast %244 : vector<4x2x8x8xf32> to vector<8x8x8xf32>
    %246 = vector.extract_strided_slice %213 {offsets = [0, 64], sizes = [16, 32], strides = [1, 1]} : vector<16x96xf32> to vector<16x32xf32>
    %247 = vector.extract_strided_slice %246 {offsets = [0, 0], sizes = [16, 8], strides = [1, 1]} : vector<16x32xf32> to vector<16x8xf32>
    %248 = vector.shape_cast %247 : vector<16x8xf32> to vector<2x8x8xf32>
    %249 = vector.extract_strided_slice %246 {offsets = [0, 8], sizes = [16, 8], strides = [1, 1]} : vector<16x32xf32> to vector<16x8xf32>
    %250 = vector.shape_cast %249 : vector<16x8xf32> to vector<2x8x8xf32>
    %251 = vector.extract_strided_slice %246 {offsets = [0, 16], sizes = [16, 8], strides = [1, 1]} : vector<16x32xf32> to vector<16x8xf32>
    %252 = vector.shape_cast %251 : vector<16x8xf32> to vector<2x8x8xf32>
    %253 = vector.extract_strided_slice %246 {offsets = [0, 24], sizes = [16, 8], strides = [1, 1]} : vector<16x32xf32> to vector<16x8xf32>
    %254 = vector.shape_cast %253 : vector<16x8xf32> to vector<2x8x8xf32>
    %255 = vector.shape_cast %248 : vector<2x8x8xf32> to vector<1x2x8x8xf32>
    %256 = vector.shape_cast %250 : vector<2x8x8xf32> to vector<1x2x8x8xf32>
    %257 = vector.shape_cast %252 : vector<2x8x8xf32> to vector<1x2x8x8xf32>
    %258 = vector.shape_cast %254 : vector<2x8x8xf32> to vector<1x2x8x8xf32>
    %259 = tpu.concatenate %255, %256, %257, %258 in 0 : vector<1x2x8x8xf32>, vector<1x2x8x8xf32>, vector<1x2x8x8xf32>, vector<1x2x8x8xf32> -> vector<4x2x8x8xf32>
    %260 = vector.shape_cast %259 : vector<4x2x8x8xf32> to vector<8x8x8xf32>
    %261 = arith.truncf %230 : vector<8x8x8xf32> to vector<8x8x8xbf16>
    %262 = arith.truncf %245 : vector<8x8x8xf32> to vector<8x8x8xbf16>
    "tpu.trace_start"() <{level = 10 : i32, message = "bqd,bkd->bqk"}> : () -> ()
    %cst_79 = arith.constant dense<0.000000e+00> : vector<8x8x8xf32>
    %263 = tpu.matmul %261, %262, %cst_79 {dimension_numbers = #tpu.dot_dimension_numbers<[2], [2], [1], [1], [0, 0, 0, 1, 1, 1], [0], [0]>} : vector<8x8x8xbf16>, vector<8x8x8xbf16>, vector<8x8x8xf32> -> vector<8x8x8xf32>
    "tpu.trace_stop"() : () -> ()
    %264 = vector.broadcast %31 : vector<8x1x8xf32> to vector<8x8x8xf32>
    %265 = arith.addf %263, %264 : vector<8x8x8xf32>
    %cst_80 = arith.constant dense<0xFF800000> : vector<8x8xf32>
    %266 = vector.multi_reduction <maximumf>, %265, %cst_80 [2] : vector<8x8x8xf32> to vector<8x8xf32>
    %267 = vector.shape_cast %266 : vector<8x8xf32> to vector<8x8x1xf32>
    %268 = vector.broadcast %267 : vector<8x8x1xf32> to vector<8x8x8xf32>
    %269 = arith.subf %265, %268 : vector<8x8x8xf32>
    %270 = math.exp %269 : vector<8x8x8xf32>
    %cst_81 = arith.constant dense<0.000000e+00> : vector<8x8xf32>
    %271 = vector.multi_reduction <add>, %270, %cst_81 [2] : vector<8x8x8xf32> to vector<8x8xf32>
    %272 = vector.shape_cast %271 : vector<8x8xf32> to vector<8x8x1xf32>
    %273 = tpu.reciprocal %272 {approx = true} : vector<8x8x1xf32> -> vector<8x8x1xf32>
    %274 = vector.broadcast %273 : vector<8x8x1xf32> to vector<8x8x8xf32>
    %275 = arith.mulf %270, %274 : vector<8x8x8xf32>
    %276 = arith.truncf %275 : vector<8x8x8xf32> to vector<8x8x8xbf16>
    %277 = arith.truncf %260 : vector<8x8x8xf32> to vector<8x8x8xbf16>
    "tpu.trace_start"() <{level = 10 : i32, message = "bqk,bkd->bqd"}> : () -> ()
    %cst_82 = arith.constant dense<0.000000e+00> : vector<8x8x8xf32>
    %278 = tpu.matmul %276, %277, %cst_82 {dimension_numbers = #tpu.dot_dimension_numbers<[2], [1], [1], [2], [0, 0, 0, 1, 1, 2], [0], [0]>} : vector<8x8x8xbf16>, vector<8x8x8xbf16>, vector<8x8x8xf32> -> vector<8x8x8xf32>
    "tpu.trace_stop"() : () -> ()
    %279 = vector.shape_cast %278 : vector<8x8x8xf32> to vector<4x16x8xf32>
    %280 = vector.extract_strided_slice %279 {offsets = [0, 0, 0], sizes = [1, 16, 8], strides = [1, 1, 1]} : vector<4x16x8xf32> to vector<1x16x8xf32>
    %281 = vector.shape_cast %280 : vector<1x16x8xf32> to vector<16x8xf32>
    %282 = vector.extract_strided_slice %279 {offsets = [1, 0, 0], sizes = [1, 16, 8], strides = [1, 1, 1]} : vector<4x16x8xf32> to vector<1x16x8xf32>
    %283 = vector.shape_cast %282 : vector<1x16x8xf32> to vector<16x8xf32>
    %284 = vector.extract_strided_slice %279 {offsets = [2, 0, 0], sizes = [1, 16, 8], strides = [1, 1, 1]} : vector<4x16x8xf32> to vector<1x16x8xf32>
    %285 = vector.shape_cast %284 : vector<1x16x8xf32> to vector<16x8xf32>
    %286 = vector.extract_strided_slice %279 {offsets = [3, 0, 0], sizes = [1, 16, 8], strides = [1, 1, 1]} : vector<4x16x8xf32> to vector<1x16x8xf32>
    %287 = vector.shape_cast %286 : vector<1x16x8xf32> to vector<16x8xf32>
    %288 = tpu.concatenate %281, %283, %285, %287 in 1 : vector<16x8xf32>, vector<16x8xf32>, vector<16x8xf32>, vector<16x8xf32> -> vector<16x32xf32>
    %289 = arith.truncf %288 : vector<16x32xf32> to vector<16x32xbf16>
    %c1_83 = arith.constant 1 : index
    %c0_84 = arith.constant 0 : index
    %c0_85 = arith.constant 0 : index
    %290 = vector.load %arg6[%c1_83, %c0_84, %c0_85] : memref<2x32x32xbf16, #tpu.memory_space<vmem>>, vector<1x32x32xbf16>
    %291 = vector.shape_cast %290 : vector<1x32x32xbf16> to vector<32x32xbf16>
    %cst_86 = arith.constant dense<0.000000e+00> : vector<16x32xf32>
    %292 = tpu.matmul %289, %291, %cst_86 {dimension_numbers = #tpu.dot_dimension_numbers<[1], [0], [0], [1], [0, 0, 1, 1], [], []>} : vector<16x32xbf16>, vector<32x32xbf16>, vector<16x32xf32> -> vector<16x32xf32>
    %c1_87 = arith.constant 1 : index
    %c0_88 = arith.constant 0 : index
    %c0_89 = arith.constant 0 : index
    %293 = vector.load %arg7[%c1_87, %c0_88, %c0_89] : memref<2x1x32xf32, #tpu.memory_space<vmem>>, vector<1x1x32xf32>
    %294 = vector.shape_cast %293 : vector<1x1x32xf32> to vector<1x32xf32>
    %295 = vector.broadcast %294 : vector<1x32xf32> to vector<16x32xf32>
    %296 = arith.addf %292, %295 : vector<16x32xf32>
    %297 = arith.addf %296, %205 : vector<16x32xf32>
    %c1_90 = arith.constant 1 : index
    %c0_91 = arith.constant 0 : index
    %c0_92 = arith.constant 0 : index
    %298 = vector.load %arg8[%c1_90, %c0_91, %c0_92] : memref<2x1x32xf32, #tpu.memory_space<vmem>>, vector<1x1x32xf32>
    %299 = vector.shape_cast %298 : vector<1x1x32xf32> to vector<1x32xf32>
    %c1_93 = arith.constant 1 : index
    %c0_94 = arith.constant 0 : index
    %c0_95 = arith.constant 0 : index
    %300 = vector.load %arg9[%c1_93, %c0_94, %c0_95] : memref<2x1x32xf32, #tpu.memory_space<vmem>>, vector<1x1x32xf32>
    %301 = vector.shape_cast %300 : vector<1x1x32xf32> to vector<1x32xf32>
    %cst_96 = arith.constant dense<0.000000e+00> : vector<16xf32>
    %302 = vector.multi_reduction <add>, %297, %cst_96 [1] : vector<16x32xf32> to vector<16xf32>
    %303 = vector.shape_cast %302 : vector<16xf32> to vector<16x1xf32>
    %cst_97 = arith.constant 3.200000e+01 : f32
    %304 = vector.broadcast %cst_97 : f32 to vector<16x1xf32>
    %305 = arith.divf %303, %304 : vector<16x1xf32>
    %306 = vector.broadcast %305 : vector<16x1xf32> to vector<16x32xf32>
    %307 = arith.subf %297, %306 : vector<16x32xf32>
    %308 = arith.mulf %307, %307 : vector<16x32xf32>
    %cst_98 = arith.constant dense<0.000000e+00> : vector<16xf32>
    %309 = vector.multi_reduction <add>, %308, %cst_98 [1] : vector<16x32xf32> to vector<16xf32>
    %310 = vector.shape_cast %309 : vector<16xf32> to vector<16x1xf32>
    %cst_99 = arith.constant 3.200000e+01 : f32
    %311 = vector.broadcast %cst_99 : f32 to vector<16x1xf32>
    %312 = arith.divf %310, %311 : vector<16x1xf32>
    %cst_100 = arith.constant 9.99999996E-13 : f32
    %313 = vector.broadcast %cst_100 : f32 to vector<16x1xf32>
    %314 = arith.addf %312, %313 : vector<16x1xf32>
    %315 = math.rsqrt %314 : vector<16x1xf32>
    %316 = vector.broadcast %305 : vector<16x1xf32> to vector<16x32xf32>
    %317 = arith.subf %297, %316 : vector<16x32xf32>
    %318 = vector.broadcast %315 : vector<16x1xf32> to vector<16x32xf32>
    %319 = arith.mulf %317, %318 : vector<16x32xf32>
    %320 = vector.broadcast %299 : vector<1x32xf32> to vector<16x32xf32>
    %321 = arith.mulf %319, %320 : vector<16x32xf32>
    %322 = vector.broadcast %301 : vector<1x32xf32> to vector<16x32xf32>
    %323 = arith.addf %321, %322 : vector<16x32xf32>
    %324 = arith.truncf %323 : vector<16x32xf32> to vector<16x32xbf16>
    %c1_101 = arith.constant 1 : index
    %c0_102 = arith.constant 0 : index
    %c0_103 = arith.constant 0 : index
    %325 = vector.load %arg10[%c1_101, %c0_102, %c0_103] : memref<2x32x64xbf16, #tpu.memory_space<vmem>>, vector<1x32x64xbf16>
    %326 = vector.shape_cast %325 : vector<1x32x64xbf16> to vector<32x64xbf16>
    %cst_104 = arith.constant dense<0.000000e+00> : vector<16x64xf32>
    %327 = tpu.matmul %324, %326, %cst_104 {dimension_numbers = #tpu.dot_dimension_numbers<[1], [0], [0], [1], [0, 0, 1, 1], [], []>} : vector<16x32xbf16>, vector<32x64xbf16>, vector<16x64xf32> -> vector<16x64xf32>
    %c1_105 = arith.constant 1 : index
    %c0_106 = arith.constant 0 : index
    %c0_107 = arith.constant 0 : index
    %328 = vector.load %arg11[%c1_105, %c0_106, %c0_107] : memref<2x1x64xf32, #tpu.memory_space<vmem>>, vector<1x1x64xf32>
    %329 = vector.shape_cast %328 : vector<1x1x64xf32> to vector<1x64xf32>
    %330 = vector.broadcast %329 : vector<1x64xf32> to vector<16x64xf32>
    %331 = arith.addf %327, %330 : vector<16x64xf32>
    %cst_108 = arith.constant 5.000000e-01 : f32
    %332 = vector.broadcast %cst_108 : f32 to vector<16x64xf32>
    %333 = arith.mulf %332, %331 : vector<16x64xf32>
    %cst_109 = arith.constant 4.471500e-02 : f32
    %334 = vector.broadcast %cst_109 : f32 to vector<16x64xf32>
    %335 = arith.mulf %334, %331 : vector<16x64xf32>
    %336 = arith.mulf %335, %331 : vector<16x64xf32>
    %337 = arith.mulf %336, %331 : vector<16x64xf32>
    %338 = arith.addf %331, %337 : vector<16x64xf32>
    %cst_110 = arith.constant 0.797884583 : f32
    %339 = vector.broadcast %cst_110 : f32 to vector<16x64xf32>
    %340 = arith.mulf %339, %338 : vector<16x64xf32>
    %341 = math.tanh %340 : vector<16x64xf32>
    %cst_111 = arith.constant 1.000000e+00 : f32
    %342 = vector.broadcast %cst_111 : f32 to vector<16x64xf32>
    %343 = arith.addf %342, %341 : vector<16x64xf32>
    %344 = arith.mulf %333, %343 : vector<16x64xf32>
    %345 = arith.truncf %344 : vector<16x64xf32> to vector<16x64xbf16>
    %c1_112 = arith.constant 1 : index
    %c0_113 = arith.constant 0 : index
    %c0_114 = arith.constant 0 : index
    %346 = vector.load %arg12[%c1_112, %c0_113, %c0_114] : memref<2x64x32xbf16, #tpu.memory_space<vmem>>, vector<1x64x32xbf16>
    %347 = vector.shape_cast %346 : vector<1x64x32xbf16> to vector<64x32xbf16>
    %cst_115 = arith.constant dense<0.000000e+00> : vector<16x32xf32>
    %348 = tpu.matmul %345, %347, %cst_115 {dimension_numbers = #tpu.dot_dimension_numbers<[1], [0], [0], [1], [0, 0, 1, 1], [], []>} : vector<16x64xbf16>, vector<64x32xbf16>, vector<16x32xf32> -> vector<16x32xf32>
    %c1_116 = arith.constant 1 : index
    %c0_117 = arith.constant 0 : index
    %c0_118 = arith.constant 0 : index
    %349 = vector.load %arg13[%c1_116, %c0_117, %c0_118] : memref<2x1x32xf32, #tpu.memory_space<vmem>>, vector<1x1x32xf32>
    %350 = vector.shape_cast %349 : vector<1x1x32xf32> to vector<1x32xf32>
    %351 = vector.broadcast %350 : vector<1x32xf32> to vector<16x32xf32>
    %352 = arith.addf %348, %351 : vector<16x32xf32>
    %353 = arith.addf %352, %323 : vector<16x32xf32>
    %c1_119 = arith.constant 1 : index
    %c0_120 = arith.constant 0 : index
    %c0_121 = arith.constant 0 : index
    %354 = vector.load %arg14[%c1_119, %c0_120, %c0_121] : memref<2x1x32xf32, #tpu.memory_space<vmem>>, vector<1x1x32xf32>
    %355 = vector.shape_cast %354 : vector<1x1x32xf32> to vector<1x32xf32>
    %c1_122 = arith.constant 1 : index
    %c0_123 = arith.constant 0 : index
    %c0_124 = arith.constant 0 : index
    %356 = vector.load %arg15[%c1_122, %c0_123, %c0_124] : memref<2x1x32xf32, #tpu.memory_space<vmem>>, vector<1x1x32xf32>
    %357 = vector.shape_cast %356 : vector<1x1x32xf32> to vector<1x32xf32>
    %cst_125 = arith.constant dense<0.000000e+00> : vector<16xf32>
    %358 = vector.multi_reduction <add>, %353, %cst_125 [1] : vector<16x32xf32> to vector<16xf32>
    %359 = vector.shape_cast %358 : vector<16xf32> to vector<16x1xf32>
    %cst_126 = arith.constant 3.200000e+01 : f32
    %360 = vector.broadcast %cst_126 : f32 to vector<16x1xf32>
    %361 = arith.divf %359, %360 : vector<16x1xf32>
    %362 = vector.broadcast %361 : vector<16x1xf32> to vector<16x32xf32>
    %363 = arith.subf %353, %362 : vector<16x32xf32>
    %364 = arith.mulf %363, %363 : vector<16x32xf32>
    %cst_127 = arith.constant dense<0.000000e+00> : vector<16xf32>
    %365 = vector.multi_reduction <add>, %364, %cst_127 [1] : vector<16x32xf32> to vector<16xf32>
    %366 = vector.shape_cast %365 : vector<16xf32> to vector<16x1xf32>
    %cst_128 = arith.constant 3.200000e+01 : f32
    %367 = vector.broadcast %cst_128 : f32 to vector<16x1xf32>
    %368 = arith.divf %366, %367 : vector<16x1xf32>
    %cst_129 = arith.constant 9.99999996E-13 : f32
    %369 = vector.broadcast %cst_129 : f32 to vector<16x1xf32>
    %370 = arith.addf %368, %369 : vector<16x1xf32>
    %371 = math.rsqrt %370 : vector<16x1xf32>
    %372 = vector.broadcast %361 : vector<16x1xf32> to vector<16x32xf32>
    %373 = arith.subf %353, %372 : vector<16x32xf32>
    %374 = vector.broadcast %371 : vector<16x1xf32> to vector<16x32xf32>
    %375 = arith.mulf %373, %374 : vector<16x32xf32>
    %376 = vector.broadcast %355 : vector<1x32xf32> to vector<16x32xf32>
    %377 = arith.mulf %375, %376 : vector<16x32xf32>
    %378 = vector.broadcast %357 : vector<1x32xf32> to vector<16x32xf32>
    %379 = arith.addf %377, %378 : vector<16x32xf32>
    %380 = vector.shape_cast %379 : vector<16x32xf32> to vector<2x8x32xf32>
    %381 = vector.extract_strided_slice %380 {offsets = [0, 0, 0], sizes = [2, 1, 32], strides = [1, 1, 1]} : vector<2x8x32xf32> to vector<2x1x32xf32>
    %382 = vector.shape_cast %381 : vector<2x1x32xf32> to vector<2x32xf32>
    %c0_130 = arith.constant 0 : index
    %c0_131 = arith.constant 0 : index
    %383 = vector.load %arg16[%c0_130, %c0_131] : memref<2x32xf32, #tpu.memory_space<vmem>>, vector<2x32xf32>
    tpu.vector_store %arg16[%c0_130, %c0_131], %382 {strides = array<i32>} : memref<2x32xf32, #tpu.memory_space<vmem>>, vector<2x32xf32>,
    return
  }
}

</mosaic_0001>

<llo_original>
// kernel: dialogue_bert_forward.1
$region0: #{dialogue_bert_forward.1}
  #allocation0 [shape = 'u32[]', space=smem, size = 0x4, offset = 0x4, fixed_abs, tag = 'smem constant byte address 0x4 - core index']
  #allocation1 [shape = 'u32[144,128]{1,0:T(1,128)}', space=vmem, size = 0x12000, scoped, tag = 'internal scratch']
  %s0 = inlined_call_operand.vmem [shape: f32[2,8], index: 0, kind: input, shape index: {}]
  %s1 = inlined_call_operand.vmem [shape: f32[16,32], index: 1, kind: input, shape index: {}]
  %s2 = inlined_call_operand.vmem [shape: f32[1,32], index: 2, kind: input, shape index: {}]
  %s3 = inlined_call_operand.vmem [shape: f32[1,32], index: 3, kind: input, shape index: {}]
  %s4 = inlined_call_operand.vmem [shape: bf16[2,32,96], index: 4, kind: input, shape index: {}]
  %s5 = inlined_call_operand.vmem [shape: f32[2,1,96], index: 5, kind: input, shape index: {}]
  %s6 = inlined_call_operand.vmem [shape: bf16[2,32,32], index: 6, kind: input, shape index: {}]
  %s7 = inlined_call_operand.vmem [shape: f32[2,1,32], index: 7, kind: input, shape index: {}]
  %s8 = inlined_call_operand.vmem [shape: f32[2,1,32], index: 8, kind: input, shape index: {}]
  %s9 = inlined_call_operand.vmem [shape: f32[2,1,32], index: 9, kind: input, shape index: {}]
  %s10 = inlined_call_operand.vmem [shape: bf16[2,32,64], index: 10, kind: input, shape index: {}]
  %s11 = inlined_call_operand.vmem [shape: f32[2,1,64], index: 11, kind: input, shape index: {}]
  %s12 = inlined_call_operand.vmem [shape: bf16[2,64,32], index: 12, kind: input, shape index: {}]
  %s13 = inlined_call_operand.vmem [shape: f32[2,1,32], index: 13, kind: input, shape index: {}]
  %s14 = inlined_call_operand.vmem [shape: f32[2,1,32], index: 14, kind: input, shape index: {}]
  %s15 = inlined_call_operand.vmem [shape: f32[2,1,32], index: 15, kind: input, shape index: {}]
  %s16 = inlined_call_operand.hbm [shape: f32[2,32], index: 16, kind: output, shape index: {}]
  %s17 = sld [smem:[#allocation0]]
  $region74: #{dialogue_bert_forward.1} parent=0
    _
  %s19 = ssub.s32 1, %s17
  %s20 = scalar_select 0, %s19, %s17
  $region1: #{dialogue_bert_forward.1} parent=0
    #allocation2 [shape = 'u8[1024]{0}', space=vmem, size = 0x400, scoped, tag = 'output window, operand 0, single buffered']
    #allocation3 [shape = 's32[1]{0}', space=sflag, size = 0x4, scoped, tag = 'scoped memory for dialogue_bert_forward.1']
    %21 = vsyncpa [#allocation3], 0
    // Predicated region
    $region2: #{dialogue_bert_forward.1} parent=1 // pred_check
      _
    $region3: #{dialogue_bert_forward.1} parent=1 // pred_check_branch
      %23 = sbr.rel (0) target = $region5
    $region4: #{dialogue_bert_forward.1} parent=1 // pred_region
      _
    $region5: #{dialogue_bert_forward.1} parent=1 // pred_fallthru
      _
    // Predicated region
    $region6: #{dialogue_bert_forward.1} parent=1 // pred_check
      _
    $region7: #{dialogue_bert_forward.1} parent=1 // pred_check_branch
      %25 = sbr.rel (0) target = $region9
    $region8: #{dialogue_bert_forward.1} parent=1 // pred_region
      _
    $region9: #{dialogue_bert_forward.1} parent=1 // pred_fallthru
      _
    // Predicated region
    $region10: #{dialogue_bert_forward.1} parent=1 // pred_check
      _
    $region11: #{dialogue_bert_forward.1} parent=1 // pred_check_branch
      %27 = sbr.rel (0) target = $region13
    $region12: #{dialogue_bert_forward.1} parent=1 // pred_region
      _
    $region13: #{dialogue_bert_forward.1} parent=1 // pred_fallthru
      _
    // Predicated region
    $region14: #{dialogue_bert_forward.1} parent=1 // pred_check
      _
    $region15: #{dialogue_bert_forward.1} parent=1 // pred_check_branch
      %29 = sbr.rel (0) target = $region17
    $region16: #{dialogue_bert_forward.1} parent=1 // pred_region
      _
    $region17: #{dialogue_bert_forward.1} parent=1 // pred_fallthru
      _
    // Predicated region
    $region18: #{dialogue_bert_forward.1} parent=1 // pred_check
      _
    $region19: #{dialogue_bert_forward.1} parent=1 // pred_check_branch
      %31 = sbr.rel (0) target = $region21
    $region20: #{dialogue_bert_forward.1} parent=1 // pred_region
      _
    $region21: #{dialogue_bert_forward.1} parent=1 // pred_fallthru
      _
    // Predicated region
    $region22: #{dialogue_bert_forward.1} parent=1 // pred_check
      _
    $region23: #{dialogue_bert_forward.1} parent=1 // pred_check_branch
      %33 = sbr.rel (0) target = $region25
    $region24: #{dialogue_bert_forward.1} parent=1 // pred_region
      _
    $region25: #{dialogue_bert_forward.1} parent=1 // pred_fallthru
      _
    // Predicated region
    $region26: #{dialogue_bert_forward.1} parent=1 // pred_check
      _
    $region27: #{dialogue_bert_forward.1} parent=1 // pred_check_branch
      %35 = sbr.rel (0) target = $region29
    $region28: #{dialogue_bert_forward.1} parent=1 // pred_region
      _
    $region29: #{dialogue_bert_forward.1} parent=1 // pred_fallthru
      _
    // Predicated region
    $region30: #{dialogue_bert_forward.1} parent=1 // pred_check
      _
    $region31: #{dialogue_bert_forward.1} parent=1 // pred_check_branch
      %37 = sbr.rel (0) target = $region33
    $region32: #{dialogue_bert_forward.1} parent=1 // pred_region
      _
    $region33: #{dialogue_bert_forward.1} parent=1 // pred_fallthru
      _
    // Predicated region
    $region34: #{dialogue_bert_forward.1} parent=1 // pred_check
      _
    $region35: #{dialogue_bert_forward.1} parent=1 // pred_check_branch
      %39 = sbr.rel (0) target = $region37
    $region36: #{dialogue_bert_forward.1} parent=1 // pred_region
      _
    $region37: #{dialogue_bert_forward.1} parent=1 // pred_fallthru
      _
    // Predicated region
    $region38: #{dialogue_bert_forward.1} parent=1 // pred_check
      _
    $region39: #{dialogue_bert_forward.1} parent=1 // pred_check_branch
      %41 = sbr.rel (0) target = $region41
    $region40: #{dialogue_bert_forward.1} parent=1 // pred_region
      _
    $region41: #{dialogue_bert_forward.1} parent=1 // pred_fallthru
      _
    // Predicated region
    $region42: #{dialogue_bert_forward.1} parent=1 // pred_check
      _
    $region43: #{dialogue_bert_forward.1} parent=1 // pred_check_branch
      %43 = sbr.rel (0) target = $region45
    $region44: #{dialogue_bert_forward.1} parent=1 // pred_region
      _
    $region45: #{dialogue_bert_forward.1} parent=1 // pred_fallthru
      _
    // Predicated region
    $region46: #{dialogue_bert_forward.1} parent=1 // pred_check
      _
    $region47: #{dialogue_bert_forward.1} parent=1 // pred_check_branch
      %45 = sbr.rel (0) target = $region49
    $region48: #{dialogue_bert_forward.1} parent=1 // pred_region
      _
    $region49: #{dialogue_bert_forward.1} parent=1 // pred_fallthru
      _
    // Predicated region
    $region50: #{dialogue_bert_forward.1} parent=1 // pred_check
      _
    $region51: #{dialogue_bert_forward.1} parent=1 // pred_check_branch
      %47 = sbr.rel (0) target = $region53
    $region52: #{dialogue_bert_forward.1} parent=1 // pred_region
      _
    $region53: #{dialogue_bert_forward.1} parent=1 // pred_fallthru
      _
    // Predicated region
    $region54: #{dialogue_bert_forward.1} parent=1 // pred_check
      _
    $region55: #{dialogue_bert_forward.1} parent=1 // pred_check_branch
      %49 = sbr.rel (0) target = $region57
    $region56: #{dialogue_bert_forward.1} parent=1 // pred_region
      _
    $region57: #{dialogue_bert_forward.1} parent=1 // pred_fallthru
      _
    // Predicated region
    $region58: #{dialogue_bert_forward.1} parent=1 // pred_check
      _
    $region59: #{dialogue_bert_forward.1} parent=1 // pred_check_branch
      %51 = sbr.rel (0) target = $region61
    $region60: #{dialogue_bert_forward.1} parent=1 // pred_region
      _
    $region61: #{dialogue_bert_forward.1} parent=1 // pred_fallthru
      _
    // Predicated region
    $region62: #{dialogue_bert_forward.1} parent=1 // pred_check
      _
    $region63: #{dialogue_bert_forward.1} parent=1 // pred_check_branch
      %53 = sbr.rel (0) target = $region65
    $region64: #{dialogue_bert_forward.1} parent=1 // pred_region
      _
    $region65: #{dialogue_bert_forward.1} parent=1 // pred_fallthru
      _
    %v55 = vld [vmem:[%s1] sm:$0xff]
    %v56 = vld [vmem:[%s1 + $0x8] sm:$0xff]
    %v57 = vld [vmem:[%s2] sm:$0x1]
    %v58 = vld [vmem:[%s3] sm:$0x1]
    %vm59 = vcmask 261120
    %v60 = vsel %vm59, %v55, 0.0
    %61 = vadd.xlane.f32.xlu0 %v60
    %v62 = vpop.xlane.xlu0 %61
    %v63 = vsel %vm59, %v56, 0.0
    %64 = vadd.xlane.f32.xlu0 %v63
    %v65 = vpop.xlane.xlu0 %64
    %v66 = vrcp.pop 32.0
    %v67 = vmul.f32 %v62, %v66
    %v68 = vmul.f32 %v65, %v66
    %v69 = vsub.f32 %v55, %v67
    %v70 = vsub.f32 %v56, %v68
    %v71 = vmul.f32 %v69, %v69
    %v72 = vmul.f32 %v70, %v70
    %v73 = vsel %vm59, %v71, 0.0
    %74 = vadd.xlane.f32.xlu0 %v73
    %v75 = vpop.xlane.xlu0 %74
    %v76 = vsel %vm59, %v72, 0.0
    %77 = vadd.xlane.f32.xlu0 %v76
    %v78 = vpop.xlane.xlu0 %77
    %v79 = vmul.f32 %v75, %v66
    %v80 = vmul.f32 %v78, %v66
    %v81 = vadd.f32 %v79, 1e-12
    %v82 = vadd.f32 %v80, 1e-12
    %v83 = vrsqrt.pop %v81
    %v84 = vrsqrt.pop %v82
    %v85 = vmul.f32 %v69, %v83
    %v86 = vmul.f32 %v70, %v84
    %v88 = vlaneseq
    %v89 = vshrl.u32 %v88, 7
    %v90 = vsub.s32 0, %v89
    %v91 = vrot.slane %v57, %v90
    %v93 = vmul.f32 %v85, %v91
    %v94 = vmul.f32 %v86, %v91
    %v96 = vlaneseq
    %v97 = vshrl.u32 %v96, 7
    %v98 = vsub.s32 0, %v97
    %v99 = vrot.slane %v58, %v98
    %v101 = vadd.f32 %v93, %v99
    %v102 = vadd.f32 %v94, %v99
    %v103 = vld [vmem:[%s0] sm:$0x3]
    %v104 = vsub.f32 1.0, %v103
    %v105 = vmul.f32 %v104, -10000.0
    %v107 = vrot.slane %v105, 6
    %v109 = vrot.slane %v105, 4
    %v111 = vrot.slane %v105, 2
    %vm113 = vcmask 1041408
    %v114 = vsel %vm113, %v105, %v107
    %vm115 = vcmask 1043456
    %v116 = vsel %vm115, %v114, %v109
    %vm117 = vcmask 1045504
    %v118 = vsel %vm117, %v116, %v111
    %v120 = vcombine.high %v118, %v118
    %v122 = vunpack.c.l.s4 1966171168
    %v123 = vunpack.c.0.s8 %v122
    %v124 = vlaneseq
    %v125 = vshrl.u32 %v124, 7
    %v126 = vsub.s32 %v123, %v125
    %v127 = vrot.slane %v118, %v126
    %v129 = vunpack.c.l.s4 1966171168
    %v130 = vunpack.c.0.s8 %v129
    %v131 = vlaneseq
    %v132 = vshrl.u32 %v131, 7
    %v133 = vsub.s32 %v130, %v132
    %v134 = vrot.slane %v120, %v133
    %v135 = vcombine.high %v127, %v127
    %v136 = vcombine.high %v134, %v134
    %v138 = vunpack.c.l.s4 1966171168
    %v139 = vunpack.c.0.s8 %v138
    %v140 = vlaneseq
    %v141 = vshrl.u32 %v140, 7
    %v142 = vsub.s32 %v139, %v141
    %v143 = vrot.slane %v127, %v142
    %v145 = vunpack.c.l.s4 1966171168
    %v146 = vunpack.c.0.s8 %v145
    %v147 = vlaneseq
    %v148 = vshrl.u32 %v147, 7
    %v149 = vsub.s32 %v146, %v148
    %v150 = vrot.slane %v134, %v149
    %v152 = vunpack.c.l.s4 1966171168
    %v153 = vunpack.c.0.s8 %v152
    %v154 = vlaneseq
    %v155 = vshrl.u32 %v154, 7
    %v156 = vsub.s32 %v153, %v155
    %v157 = vrot.slane %v135, %v156
    %v159 = vunpack.c.l.s4 1966171168
    %v160 = vunpack.c.0.s8 %v159
    %v161 = vlaneseq
    %v162 = vshrl.u32 %v161, 7
    %v163 = vsub.s32 %v160, %v162
    %v164 = vrot.slane %v136, %v163
    %v165 = vcombine.high %v143, %v143
    %v166 = vcombine.high %v150, %v150
    %v167 = vcombine.high %v157, %v157
    %v168 = vcombine.high %v164, %v164
    %v169 = vpack.c.bf16 %v102, %v101
    %v170 = vld [vmem:[%s4] sm:$0xf]
    %v171 = vld [vmem:[%s4 + $0x4] sm:$0xf]
    %v172 = vld [vmem:[%s4 + $0x8] sm:$0xf]
    %v173 = vld [vmem:[%s4 + $0xc] sm:$0xf]
    %v174 = vld [vmem:[%s5] sm:$0x1]
    %v176 = vlaneseq
    %v177 = vshrl.u32 %v176, 7
    %v178 = vsub.s32 0, %v177
    %v179 = vrot.slane %v174, %v178
    %v185 = vunpack.c.l.b16 %v170
    %v186 = vunpack.c.l.b16 %v171
    %v187 = vunpack.c.l.b16 %v172
    %v188 = vunpack.c.l.b16 %v173
    %v189 = vpack.c.b16 %v186, %v185
    %v190 = vpack.c.b16 %v188, %v187
    %v194 = vsel %vm59, %v169, 0
    %196 = vmatprep.subr.bf16.mxu0 0
    %197 = vmatpush1.bf16.msra.mxu0 %v189
    %198 = vmatprep.subr.bf16.mxu0 0
    %199 = vmatpush1.bf16.msra.mxu0 %v190
    %200 = vmatprep.subr.bf16.mxu0 0
    %201 = vmatpush1.bf16.msra.mxu0 0
    %202 = vmatprep.subr.bf16.mxu0 0
    %203 = vmatpush1.bf16.msra.mxu0 0
    %204 = vmatprep.subr.bf16.mxu0 0
    %205 = vmatpush1.bf16.msra.mxu0 0
    %206 = vmatprep.subr.bf16.mxu0 0
    %207 = vmatpush1.bf16.msra.mxu0 0
    %208 = vmatprep.subr.bf16.mxu0 0
    %209 = vmatpush1.bf16.msra.mxu0 0
    %210 = vmatprep.subr.bf16.mxu0 0
    %211 = vmatpush1.bf16.msra.mxu0 0
    %212 = vmatprep.subr.bf16.mxu0 0
    %213 = vmatpush1.bf16.msra.mxu0 0
    %214 = vmatprep.subr.bf16.mxu0 0
    %215 = vmatpush1.bf16.msra.mxu0 0
    %216 = vmatprep.subr.bf16.mxu0 0
    %217 = vmatpush1.bf16.msra.mxu0 0
    %218 = vmatprep.subr.bf16.mxu0 0
    %219 = vmatpush1.bf16.msra.mxu0 0
    %220 = vmatprep.subr.bf16.mxu0 0
    %221 = vmatpush1.bf16.msra.mxu0 0
    %222 = vmatprep.subr.bf16.mxu0 0
    %223 = vmatpush1.bf16.msra.mxu0 0
    %224 = vmatprep.subr.bf16.mxu0 0
    %225 = vmatpush1.bf16.msra.mxu0 0
    %226 = vmatprep.subr.bf16.mxu0 0
    %227 = vmatpush1.bf16.msra.mxu0 0
    %228 = vmatprep.mubr.bf16.mxu0 0
    %229 = vmatmul.mubr.bf16.gmra.mrb[0].mxu0 %v194
    %v230 = vpop.f32.mrb[0].mxu0
    %v231 = vadd.f32 %v179, %v230
    %v232 = vpop.f32.mrb[0].mxu0
    %v233 = vpop.f32.mrb[0].mxu0
    %v234 = vadd.f32 %v179, %v233
    %v235 = vpop.f32.mrb[0].mxu0
    %236 = vdwg.mxu0
    %v237 = vmul.f32 %v231, 0.35355338
    %v238 = vmul.f32 %v234, 0.35355338
    %241 = vrot.lane.b32.xlu0 %v237, 120
    %v242 = vpop.permute.xlu0 %241
    %243 = vrot.lane.b32.xlu0 %v238, 120
    %v244 = vpop.permute.xlu0 %243
    %247 = vrot.lane.b32.xlu0 %v237, 112
    %v248 = vpop.permute.xlu0 %247
    %249 = vrot.lane.b32.xlu0 %v238, 112
    %v250 = vpop.permute.xlu0 %249
    %253 = vrot.lane.b32.xlu0 %v237, 104
    %v254 = vpop.permute.xlu0 %253
    %255 = vrot.lane.b32.xlu0 %v238, 104
    %v256 = vpop.permute.xlu0 %255
    %261 = vrot.lane.b32.xlu0 %v231, 120
    %v262 = vpop.permute.xlu0 %261
    %263 = vrot.lane.b32.xlu0 %v234, 120
    %v264 = vpop.permute.xlu0 %263
    %267 = vrot.lane.b32.xlu0 %v231, 112
    %v268 = vpop.permute.xlu0 %267
    %269 = vrot.lane.b32.xlu0 %v234, 112
    %v270 = vpop.permute.xlu0 %269
    %273 = vrot.lane.b32.xlu0 %v231, 104
    %v274 = vpop.permute.xlu0 %273
    %275 = vrot.lane.b32.xlu0 %v234, 104
    %v276 = vpop.permute.xlu0 %275
    %v279 = vpack.c.bf16 %v237, %v237
    %v280 = vpack.c.bf16 %v238, %v238
    %v281 = vpack.c.bf16 %v242, %v242
    %v282 = vpack.c.bf16 %v244, %v244
    %v283 = vpack.c.bf16 %v248, %v248
    %v284 = vpack.c.bf16 %v250, %v250
    %v285 = vpack.c.bf16 %v254, %v254
    %v286 = vpack.c.bf16 %v256, %v256
    %v287 = vpack.c.bf16 %v231, %v231
    %v288 = vpack.c.bf16 %v234, %v234
    %v289 = vpack.c.bf16 %v262, %v262
    %v290 = vpack.c.bf16 %v264, %v264
    %v291 = vpack.c.bf16 %v268, %v268
    %v292 = vpack.c.bf16 %v270, %v270
    %v293 = vpack.c.bf16 %v274, %v274
    %v294 = vpack.c.bf16 %v276, %v276
    %v295 = vlaneseq
    %v296 = vshrl.u32 %v295, 7
    %v297 = vsub.s32 0, %v296
    %v298 = vrot.slane %v143, %v297
    %v299 = vlaneseq
    %v300 = vshrl.u32 %v299, 7
    %v301 = vsub.s32 0, %v300
    %v302 = vrot.slane %v157, %v301
    %v303 = vlaneseq
    %v304 = vshrl.u32 %v303, 7
    %v305 = vsub.s32 0, %v304
    %v306 = vrot.slane %v165, %v305
    %v307 = vlaneseq
    %v308 = vshrl.u32 %v307, 7
    %v309 = vsub.s32 0, %v308
    %v310 = vrot.slane %v167, %v309
    %v311 = vlaneseq
    %v312 = vshrl.u32 %v311, 7
    %v313 = vsub.s32 0, %v312
    %v314 = vrot.slane %v150, %v313
    %v315 = vlaneseq
    %v316 = vshrl.u32 %v315, 7
    %v317 = vsub.s32 0, %v316
    %v318 = vrot.slane %v164, %v317
    %v319 = vlaneseq
    %v320 = vshrl.u32 %v319, 7
    %v321 = vsub.s32 0, %v320
    %v322 = vrot.slane %v166, %v321
    %v323 = vlaneseq
    %v324 = vshrl.u32 %v323, 7
    %v325 = vsub.s32 0, %v324
    %v326 = vrot.slane %v168, %v325
    %336 = vrot.lane.b32.xlu0 %v287, 96
    %v337 = vpop.permute.xlu0 %336
    %vm338 = vcmask 64512
    %v340 = vsel %vm338, %v279, 0
    %v343 = vsel %vm338, %v337, 0
    %345 = vmatprep.subr.bf16.mxu0 0
    %346 = vmatpush1.bf16.xpose.msra.mxu0 %v343
    %347 = vmatprep.subr.bf16.mxu0 0
    %348 = vmatpush1.bf16.xpose.msra.mxu0 0
    %349 = vmatprep.subr.bf16.mxu0 0
    %350 = vmatpush1.bf16.xpose.msra.mxu0 0
    %351 = vmatprep.subr.bf16.mxu0 0
    %352 = vmatpush1.bf16.xpose.msra.mxu0 0
    %353 = vmatprep.subr.bf16.mxu0 0
    %354 = vmatpush1.bf16.xpose.msra.mxu0 0
    %355 = vmatprep.subr.bf16.mxu0 0
    %356 = vmatpush1.bf16.xpose.msra.mxu0 0
    %357 = vmatprep.subr.bf16.mxu0 0
    %358 = vmatpush1.bf16.xpose.msra.mxu0 0
    %359 = vmatprep.subr.bf16.mxu0 0
    %360 = vmatpush1.bf16.xpose.msra.mxu0 0
    %361 = vmatprep.subr.bf16.mxu0 0
    %362 = vmatpush1.bf16.xpose.msra.mxu0 0
    %363 = vmatprep.subr.bf16.mxu0 0
    %364 = vmatpush1.bf16.xpose.msra.mxu0 0
    %365 = vmatprep.subr.bf16.mxu0 0
    %366 = vmatpush1.bf16.xpose.msra.mxu0 0
    %367 = vmatprep.subr.bf16.mxu0 0
    %368 = vmatpush1.bf16.xpose.msra.mxu0 0
    %369 = vmatprep.subr.bf16.mxu0 0
    %370 = vmatpush1.bf16.xpose.msra.mxu0 0
    %371 = vmatprep.subr.bf16.mxu0 0
    %372 = vmatpush1.bf16.xpose.msra.mxu0 0
    %373 = vmatprep.subr.bf16.mxu0 0
    %374 = vmatpush1.bf16.xpose.msra.mxu0 0
    %375 = vmatprep.subr.bf16.mxu0 0
    %376 = vmatpush1.bf16.xpose.msra.mxu0 0
    %377 = vmatprep.mubr.bf16.mxu0 0
    %378 = vmatmul.mubr.bf16.gmra.mrb[0].mxu0 %v340
    %v379 = vpop.f32.mrb[0].mxu0
    %v380 = vadd.f32 %v298, %v379
    %v381 = vpop.f32.mrb[0].mxu0
    %v382 = vpop.f32.mrb[0].mxu0
    %v383 = vpop.f32.mrb[0].mxu0
    %384 = vdwg.mxu0
    %386 = vrot.lane.b32.xlu0 %v288, 96
    %v387 = vpop.permute.xlu0 %386
    %v389 = vsel %vm338, %v280, 0
    %v392 = vsel %vm338, %v387, 0
    %394 = vmatprep.subr.bf16.mxu0 0
    %395 = vmatpush1.bf16.xpose.msra.mxu0 %v392
    %396 = vmatprep.subr.bf16.mxu0 0
    %397 = vmatpush1.bf16.xpose.msra.mxu0 0
    %398 = vmatprep.subr.bf16.mxu0 0
    %399 = vmatpush1.bf16.xpose.msra.mxu0 0
    %400 = vmatprep.subr.bf16.mxu0 0
    %401 = vmatpush1.bf16.xpose.msra.mxu0 0
    %402 = vmatprep.subr.bf16.mxu0 0
    %403 = vmatpush1.bf16.xpose.msra.mxu0 0
    %404 = vmatprep.subr.bf16.mxu0 0
    %405 = vmatpush1.bf16.xpose.msra.mxu0 0
    %406 = vmatprep.subr.bf16.mxu0 0
    %407 = vmatpush1.bf16.xpose.msra.mxu0 0
    %408 = vmatprep.subr.bf16.mxu0 0
    %409 = vmatpush1.bf16.xpose.msra.mxu0 0
    %410 = vmatprep.subr.bf16.mxu0 0
    %411 = vmatpush1.bf16.xpose.msra.mxu0 0
    %412 = vmatprep.subr.bf16.mxu0 0
    %413 = vmatpush1.bf16.xpose.msra.mxu0 0
    %414 = vmatprep.subr.bf16.mxu0 0
    %415 = vmatpush1.bf16.xpose.msra.mxu0 0
    %416 = vmatprep.subr.bf16.mxu0 0
    %417 = vmatpush1.bf16.xpose.msra.mxu0 0
    %418 = vmatprep.subr.bf16.mxu0 0
    %419 = vmatpush1.bf16.xpose.msra.mxu0 0
    %420 = vmatprep.subr.bf16.mxu0 0
    %421 = vmatpush1.bf16.xpose.msra.mxu0 0
    %422 = vmatprep.subr.bf16.mxu0 0
    %423 = vmatpush1.bf16.xpose.msra.mxu0 0
    %424 = vmatprep.subr.bf16.mxu0 0
    %425 = vmatpush1.bf16.xpose.msra.mxu0 0
    %426 = vmatprep.mubr.bf16.mxu0 0
    %427 = vmatmul.mubr.bf16.gmra.mrb[0].mxu0 %v389
    %v428 = vpop.f32.mrb[0].mxu0
    %v429 = vadd.f32 %v302, %v428
    %v430 = vpop.f32.mrb[0].mxu0
    %v431 = vpop.f32.mrb[0].mxu0
    %v432 = vpop.f32.mrb[0].mxu0
    %433 = vdwg.mxu0
    %435 = vrot.lane.b32.xlu0 %v289, 96
    %v436 = vpop.permute.xlu0 %435
    %v438 = vsel %vm338, %v281, 0
    %v441 = vsel %vm338, %v436, 0
    %443 = vmatprep.subr.bf16.mxu0 0
    %444 = vmatpush1.bf16.xpose.msra.mxu0 %v441
    %445 = vmatprep.subr.bf16.mxu0 0
    %446 = vmatpush1.bf16.xpose.msra.mxu0 0
    %447 = vmatprep.subr.bf16.mxu0 0
    %448 = vmatpush1.bf16.xpose.msra.mxu0 0
    %449 = vmatprep.subr.bf16.mxu0 0
    %450 = vmatpush1.bf16.xpose.msra.mxu0 0
    %451 = vmatprep.subr.bf16.mxu0 0
    %452 = vmatpush1.bf16.xpose.msra.mxu0 0
    %453 = vmatprep.subr.bf16.mxu0 0
    %454 = vmatpush1.bf16.xpose.msra.mxu0 0
    %455 = vmatprep.subr.bf16.mxu0 0
    %456 = vmatpush1.bf16.xpose.msra.mxu0 0
    %457 = vmatprep.subr.bf16.mxu0 0
    %458 = vmatpush1.bf16.xpose.msra.mxu0 0
    %459 = vmatprep.subr.bf16.mxu0 0
    %460 = vmatpush1.bf16.xpose.msra.mxu0 0
    %461 = vmatprep.subr.bf16.mxu0 0
    %462 = vmatpush1.bf16.xpose.msra.mxu0 0
    %463 = vmatprep.subr.bf16.mxu0 0
    %464 = vmatpush1.bf16.xpose.msra.mxu0 0
    %465 = vmatprep.subr.bf16.mxu0 0
    %466 = vmatpush1.bf16.xpose.msra.mxu0 0
    %467 = vmatprep.subr.bf16.mxu0 0
    %468 = vmatpush1.bf16.xpose.msra.mxu0 0
    %469 = vmatprep.subr.bf16.mxu0 0
    %470 = vmatpush1.bf16.xpose.msra.mxu0 0
    %471 = vmatprep.subr.bf16.mxu0 0
    %472 = vmatpush1.bf16.xpose.msra.mxu0 0
    %473 = vmatprep.subr.bf16.mxu0 0
    %474 = vmatpush1.bf16.xpose.msra.mxu0 0
    %475 = vmatprep.mubr.bf16.mxu0 0
    %476 = vmatmul.mubr.bf16.gmra.mrb[0].mxu0 %v438
    %v477 = vpop.f32.mrb[0].mxu0
    %v478 = vadd.f32 %v306, %v477
    %v479 = vpop.f32.mrb[0].mxu0
    %v480 = vpop.f32.mrb[0].mxu0
    %v481 = vpop.f32.mrb[0].mxu0
    %482 = vdwg.mxu0
    %484 = vrot.lane.b32.xlu0 %v290, 96
    %v485 = vpop.permute.xlu0 %484
    %v487 = vsel %vm338, %v282, 0
    %v490 = vsel %vm338, %v485, 0
    %492 = vmatprep.subr.bf16.mxu0 0
    %493 = vmatpush1.bf16.xpose.msra.mxu0 %v490
    %494 = vmatprep.subr.bf16.mxu0 0
    %495 = vmatpush1.bf16.xpose.msra.mxu0 0
    %496 = vmatprep.subr.bf16.mxu0 0
    %497 = vmatpush1.bf16.xpose.msra.mxu0 0
    %498 = vmatprep.subr.bf16.mxu0 0
    %499 = vmatpush1.bf16.xpose.msra.mxu0 0
    %500 = vmatprep.subr.bf16.mxu0 0
    %501 = vmatpush1.bf16.xpose.msra.mxu0 0
    %502 = vmatprep.subr.bf16.mxu0 0
    %503 = vmatpush1.bf16.xpose.msra.mxu0 0
    %504 = vmatprep.subr.bf16.mxu0 0
    %505 = vmatpush1.bf16.xpose.msra.mxu0 0
    %506 = vmatprep.subr.bf16.mxu0 0
    %507 = vmatpush1.bf16.xpose.msra.mxu0 0
    %508 = vmatprep.subr.bf16.mxu0 0
    %509 = vmatpush1.bf16.xpose.msra.mxu0 0
    %510 = vmatprep.subr.bf16.mxu0 0
    %511 = vmatpush1.bf16.xpose.msra.mxu0 0
    %512 = vmatprep.subr.bf16.mxu0 0
    %513 = vmatpush1.bf16.xpose.msra.mxu0 0
    %514 = vmatprep.subr.bf16.mxu0 0
    %515 = vmatpush1.bf16.xpose.msra.mxu0 0
    %516 = vmatprep.subr.bf16.mxu0 0
    %517 = vmatpush1.bf16.xpose.msra.mxu0 0
    %518 = vmatprep.subr.bf16.mxu0 0
    %519 = vmatpush1.bf16.xpose.msra.mxu0 0
    %520 = vmatprep.subr.bf16.mxu0 0
    %521 = vmatpush1.bf16.xpose.msra.mxu0 0
    %522 = vmatprep.subr.bf16.mxu0 0
    %523 = vmatpush1.bf16.xpose.msra.mxu0 0
    %524 = vmatprep.mubr.bf16.mxu0 0
    %525 = vmatmul.mubr.bf16.gmra.mrb[0].mxu0 %v487
    %v526 = vpop.f32.mrb[0].mxu0
    %v527 = vadd.f32 %v310, %v526
    %v528 = vpop.f32.mrb[0].mxu0
    %v529 = vpop.f32.mrb[0].mxu0
    %v530 = vpop.f32.mrb[0].mxu0
    %531 = vdwg.mxu0
    %533 = vrot.lane.b32.xlu0 %v291, 96
    %v534 = vpop.permute.xlu0 %533
    %v536 = vsel %vm338, %v283, 0
    %v539 = vsel %vm338, %v534, 0
    %541 = vmatprep.subr.bf16.mxu0 0
    %542 = vmatpush1.bf16.xpose.msra.mxu0 %v539
    %543 = vmatprep.subr.bf16.mxu0 0
    %544 = vmatpush1.bf16.xpose.msra.mxu0 0
    %545 = vmatprep.subr.bf16.mxu0 0
    %546 = vmatpush1.bf16.xpose.msra.mxu0 0
    %547 = vmatprep.subr.bf16.mxu0 0
    %548 = vmatpush1.bf16.xpose.msra.mxu0 0
    %549 = vmatprep.subr.bf16.mxu0 0
    %550 = vmatpush1.bf16.xpose.msra.mxu0 0
    %551 = vmatprep.subr.bf16.mxu0 0
    %552 = vmatpush1.bf16.xpose.msra.mxu0 0
    %553 = vmatprep.subr.bf16.mxu0 0
    %554 = vmatpush1.bf16.xpose.msra.mxu0 0
    %555 = vmatprep.subr.bf16.mxu0 0
    %556 = vmatpush1.bf16.xpose.msra.mxu0 0
    %557 = vmatprep.subr.bf16.mxu0 0
    %558 = vmatpush1.bf16.xpose.msra.mxu0 0
    %559 = vmatprep.subr.bf16.mxu0 0
    %560 = vmatpush1.bf16.xpose.msra.mxu0 0
    %561 = vmatprep.subr.bf16.mxu0 0
    %562 = vmatpush1.bf16.xpose.msra.mxu0 0
    %563 = vmatprep.subr.bf16.mxu0 0
    %564 = vmatpush1.bf16.xpose.msra.mxu0 0
    %565 = vmatprep.subr.bf16.mxu0 0
    %566 = vmatpush1.bf16.xpose.msra.mxu0 0
    %567 = vmatprep.subr.bf16.mxu0 0
    %568 = vmatpush1.bf16.xpose.msra.mxu0 0
    %569 = vmatprep.subr.bf16.mxu0 0
    %570 = vmatpush1.bf16.xpose.msra.mxu0 0
    %571 = vmatprep.subr.bf16.mxu0 0
    %572 = vmatpush1.bf16.xpose.msra.mxu0 0
    %573 = vmatprep.mubr.bf16.mxu0 0
    %574 = vmatmul.mubr.bf16.gmra.mrb[0].mxu0 %v536
    %v575 = vpop.f32.mrb[0].mxu0
    %v576 = vadd.f32 %v314, %v575
    %v577 = vpop.f32.mrb[0].mxu0
    %v578 = vpop.f32.mrb[0].mxu0
    %v579 = vpop.f32.mrb[0].mxu0
    %580 = vdwg.mxu0
    %582 = vrot.lane.b32.xlu0 %v292, 96
    %v583 = vpop.permute.xlu0 %582
    %v585 = vsel %vm338, %v284, 0
    %v588 = vsel %vm338, %v583, 0
    %590 = vmatprep.subr.bf16.mxu0 0
    %591 = vmatpush1.bf16.xpose.msra.mxu0 %v588
    %592 = vmatprep.subr.bf16.mxu0 0
    %593 = vmatpush1.bf16.xpose.msra.mxu0 0
    %594 = vmatprep.subr.bf16.mxu0 0
    %595 = vmatpush1.bf16.xpose.msra.mxu0 0
    %596 = vmatprep.subr.bf16.mxu0 0
    %597 = vmatpush1.bf16.xpose.msra.mxu0 0
    %598 = vmatprep.subr.bf16.mxu0 0
    %599 = vmatpush1.bf16.xpose.msra.mxu0 0
    %600 = vmatprep.subr.bf16.mxu0 0
    %601 = vmatpush1.bf16.xpose.msra.mxu0 0
    %602 = vmatprep.subr.bf16.mxu0 0
    %603 = vmatpush1.bf16.xpose.msra.mxu0 0
    %604 = vmatprep.subr.bf16.mxu0 0
    %605 = vmatpush1.bf16.xpose.msra.mxu0 0
    %606 = vmatprep.subr.bf16.mxu0 0
    %607 = vmatpush1.bf16.xpose.msra.mxu0 0
    %608 = vmatprep.subr.bf16.mxu0 0
    %609 = vmatpush1.bf16.xpose.msra.mxu0 0
    %610 = vmatprep.subr.bf16.mxu0 0
    %611 = vmatpush1.bf16.xpose.msra.mxu0 0
    %612 = vmatprep.subr.bf16.mxu0 0
    %613 = vmatpush1.bf16.xpose.msra.mxu0 0
    %614 = vmatprep.subr.bf16.mxu0 0
    %615 = vmatpush1.bf16.xpose.msra.mxu0 0
    %616 = vmatprep.subr.bf16.mxu0 0
    %617 = vmatpush1.bf16.xpose.msra.mxu0 0
    %618 = vmatprep.subr.bf16.mxu0 0
    %619 = vmatpush1.bf16.xpose.msra.mxu0 0
    %620 = vmatprep.subr.bf16.mxu0 0
    %621 = vmatpush1.bf16.xpose.msra.mxu0 0
    %622 = vmatprep.mubr.bf16.mxu0 0
    %623 = vmatmul.mubr.bf16.gmra.mrb[0].mxu0 %v585
    %v624 = vpop.f32.mrb[0].mxu0
    %v625 = vadd.f32 %v318, %v624
    %v626 = vpop.f32.mrb[0].mxu0
    %v627 = vpop.f32.mrb[0].mxu0
    %v628 = vpop.f32.mrb[0].mxu0
    %629 = vdwg.mxu0
    %631 = vrot.lane.b32.xlu0 %v293, 96
    %v632 = vpop.permute.xlu0 %631
    %v634 = vsel %vm338, %v285, 0
    %v637 = vsel %vm338, %v632, 0
    %639 = vmatprep.subr.bf16.mxu0 0
    %640 = vmatpush1.bf16.xpose.msra.mxu0 %v637
    %641 = vmatprep.subr.bf16.mxu0 0
    %642 = vmatpush1.bf16.xpose.msra.mxu0 0
    %643 = vmatprep.subr.bf16.mxu0 0
    %644 = vmatpush1.bf16.xpose.msra.mxu0 0
    %645 = vmatprep.subr.bf16.mxu0 0
    %646 = vmatpush1.bf16.xpose.msra.mxu0 0
    %647 = vmatprep.subr.bf16.mxu0 0
    %648 = vmatpush1.bf16.xpose.msra.mxu0 0
    %649 = vmatprep.subr.bf16.mxu0 0
    %650 = vmatpush1.bf16.xpose.msra.mxu0 0
    %651 = vmatprep.subr.bf16.mxu0 0
    %652 = vmatpush1.bf16.xpose.msra.mxu0 0
    %653 = vmatprep.subr.bf16.mxu0 0
    %654 = vmatpush1.bf16.xpose.msra.mxu0 0
    %655 = vmatprep.subr.bf16.mxu0 0
    %656 = vmatpush1.bf16.xpose.msra.mxu0 0
    %657 = vmatprep.subr.bf16.mxu0 0
    %658 = vmatpush1.bf16.xpose.msra.mxu0 0
    %659 = vmatprep.subr.bf16.mxu0 0
    %660 = vmatpush1.bf16.xpose.msra.mxu0 0
    %661 = vmatprep.subr.bf16.mxu0 0
    %662 = vmatpush1.bf16.xpose.msra.mxu0 0
    %663 = vmatprep.subr.bf16.mxu0 0
    %664 = vmatpush1.bf16.xpose.msra.mxu0 0
    %665 = vmatprep.subr.bf16.mxu0 0
    %666 = vmatpush1.bf16.xpose.msra.mxu0 0
    %667 = vmatprep.subr.bf16.mxu0 0
    %668 = vmatpush1.bf16.xpose.msra.mxu0 0
    %669 = vmatprep.subr.bf16.mxu0 0
    %670 = vmatpush1.bf16.xpose.msra.mxu0 0
    %671 = vmatprep.mubr.bf16.mxu0 0
    %672 = vmatmul.mubr.bf16.gmra.mrb[0].mxu0 %v634
    %v673 = vpop.f32.mrb[0].mxu0
    %v674 = vadd.f32 %v322, %v673
    %v675 = vpop.f32.mrb[0].mxu0
    %v676 = vpop.f32.mrb[0].mxu0
    %v677 = vpop.f32.mrb[0].mxu0
    %678 = vdwg.mxu0
    %680 = vrot.lane.b32.xlu0 %v294, 96
    %v681 = vpop.permute.xlu0 %680
    %v683 = vsel %vm338, %v286, 0
    %v686 = vsel %vm338, %v681, 0
    %688 = vmatprep.subr.bf16.mxu0 0
    %689 = vmatpush1.bf16.xpose.msra.mxu0 %v686
    %690 = vmatprep.subr.bf16.mxu0 0
    %691 = vmatpush1.bf16.xpose.msra.mxu0 0
    %692 = vmatprep.subr.bf16.mxu0 0
    %693 = vmatpush1.bf16.xpose.msra.mxu0 0
    %694 = vmatprep.subr.bf16.mxu0 0
    %695 = vmatpush1.bf16.xpose.msra.mxu0 0
    %696 = vmatprep.subr.bf16.mxu0 0
    %697 = vmatpush1.bf16.xpose.msra.mxu0 0
    %698 = vmatprep.subr.bf16.mxu0 0
    %699 = vmatpush1.bf16.xpose.msra.mxu0 0
    %700 = vmatprep.subr.bf16.mxu0 0
    %701 = vmatpush1.bf16.xpose.msra.mxu0 0
    %702 = vmatprep.subr.bf16.mxu0 0
    %703 = vmatpush1.bf16.xpose.msra.mxu0 0
    %704 = vmatprep.subr.bf16.mxu0 0
    %705 = vmatpush1.bf16.xpose.msra.mxu0 0
    %706 = vmatprep.subr.bf16.mxu0 0
    %707 = vmatpush1.bf16.xpose.msra.mxu0 0
    %708 = vmatprep.subr.bf16.mxu0 0
    %709 = vmatpush1.bf16.xpose.msra.mxu0 0
    %710 = vmatprep.subr.bf16.mxu0 0
    %711 = vmatpush1.bf16.xpose.msra.mxu0 0
    %712 = vmatprep.subr.bf16.mxu0 0
    %713 = vmatpush1.bf16.xpose.msra.mxu0 0
    %714 = vmatprep.subr.bf16.mxu0 0
    %715 = vmatpush1.bf16.xpose.msra.mxu0 0
    %716 = vmatprep.subr.bf16.mxu0 0
    %717 = vmatpush1.bf16.xpose.msra.mxu0 0
    %718 = vmatprep.subr.bf16.mxu0 0
    %719 = vmatpush1.bf16.xpose.msra.mxu0 0
    %720 = vmatprep.mubr.bf16.mxu0 0
    %721 = vmatmul.mubr.bf16.gmra.mrb[0].mxu0 %v683
    %v722 = vpop.f32.mrb[0].mxu0
    %v723 = vadd.f32 %v326, %v722
    %v724 = vpop.f32.mrb[0].mxu0
    %v725 = vpop.f32.mrb[0].mxu0
    %v726 = vpop.f32.mrb[0].mxu0
    %727 = vdwg.mxu0
    %v728 = vsel %vm338, %v380, -inf
    %729 = vmax.xlane.f32.xlu0 %v728
    %v730 = vpop.xlane.xlu0 %729
    %v731 = vsel %vm338, %v429, -inf
    %732 = vmax.xlane.f32.xlu0 %v731
    %v733 = vpop.xlane.xlu0 %732
    %v734 = vsel %vm338, %v478, -inf
    %735 = vmax.xlane.f32.xlu0 %v734
    %v736 = vpop.xlane.xlu0 %735
    %v737 = vsel %vm338, %v527, -inf
    %738 = vmax.xlane.f32.xlu0 %v737
    %v739 = vpop.xlane.xlu0 %738
    %v740 = vsel %vm338, %v576, -inf
    %741 = vmax.xlane.f32.xlu0 %v740
    %v742 = vpop.xlane.xlu0 %741
    %v743 = vsel %vm338, %v625, -inf
    %744 = vmax.xlane.f32.xlu0 %v743
    %v745 = vpop.xlane.xlu0 %744
    %v746 = vsel %vm338, %v674, -inf
    %747 = vmax.xlane.f32.xlu0 %v746
    %v748 = vpop.xlane.xlu0 %747
    %v749 = vsel %vm338, %v723, -inf
    %750 = vmax.xlane.f32.xlu0 %v749
    %v751 = vpop.xlane.xlu0 %750
    %v752 = vsub.f32 %v380, %v730
    %v753 = vsub.f32 %v429, %v733
    %v754 = vsub.f32 %v478, %v736
    %v755 = vsub.f32 %v527, %v739
    %v756 = vsub.f32 %v576, %v742
    %v757 = vsub.f32 %v625, %v745
    %v758 = vsub.f32 %v674, %v748
    %v759 = vsub.f32 %v723, %v751
    %v760 = vmul.f32 %v752, 1.442695
    %v761 = vpow.pop %v760
    %v762 = vmul.f32 %v753, 1.442695
    %v763 = vpow.pop %v762
    %v764 = vmul.f32 %v754, 1.442695
    %v765 = vpow.pop %v764
    %v766 = vmul.f32 %v755, 1.442695
    %v767 = vpow.pop %v766
    %v768 = vmul.f32 %v756, 1.442695
    %v769 = vpow.pop %v768
    %v770 = vmul.f32 %v757, 1.442695
    %v771 = vpow.pop %v770
    %v772 = vmul.f32 %v758, 1.442695
    %v773 = vpow.pop %v772
    %v774 = vmul.f32 %v759, 1.442695
    %v775 = vpow.pop %v774
    %v776 = vsel %vm338, %v761, 0.0
    %777 = vadd.xlane.f32.xlu0 %v776
    %v778 = vpop.xlane.xlu0 %777
    %v779 = vsel %vm338, %v763, 0.0
    %780 = vadd.xlane.f32.xlu0 %v779
    %v781 = vpop.xlane.xlu0 %780
    %v782 = vsel %vm338, %v765, 0.0
    %783 = vadd.xlane.f32.xlu0 %v782
    %v784 = vpop.xlane.xlu0 %783
    %v785 = vsel %vm338, %v767, 0.0
    %786 = vadd.xlane.f32.xlu0 %v785
    %v787 = vpop.xlane.xlu0 %786
    %v788 = vsel %vm338, %v769, 0.0
    %789 = vadd.xlane.f32.xlu0 %v788
    %v790 = vpop.xlane.xlu0 %789
    %v791 = vsel %vm338, %v771, 0.0
    %792 = vadd.xlane.f32.xlu0 %v791
    %v793 = vpop.xlane.xlu0 %792
    %v794 = vsel %vm338, %v773, 0.0
    %795 = vadd.xlane.f32.xlu0 %v794
    %v796 = vpop.xlane.xlu0 %795
    %v797 = vsel %vm338, %v775, 0.0
    %798 = vadd.xlane.f32.xlu0 %v797
    %v799 = vpop.xlane.xlu0 %798
    %v800 = vrcp.pop %v778
    %v801 = vrcp.pop %v781
    %v802 = vrcp.pop %v784
    %v803 = vrcp.pop %v787
    %v804 = vrcp.pop %v790
    %v805 = vrcp.pop %v793
    %v806 = vrcp.pop %v796
    %v807 = vrcp.pop %v799
    %v808 = vmul.f32 %v761, %v800
    %v809 = vmul.f32 %v763, %v801
    %v810 = vmul.f32 %v765, %v802
    %v811 = vmul.f32 %v767, %v803
    %v812 = vmul.f32 %v769, %v804
    %v813 = vmul.f32 %v771, %v805
    %v814 = vmul.f32 %v773, %v806
    %v815 = vmul.f32 %v775, %v807
    %v816 = vpack.c.bf16 %v808, %v808
    %v817 = vpack.c.bf16 %v809, %v809
    %v818 = vpack.c.bf16 %v810, %v810
    %v819 = vpack.c.bf16 %v811, %v811
    %v820 = vpack.c.bf16 %v812, %v812
    %v821 = vpack.c.bf16 %v813, %v813
    %v822 = vpack.c.bf16 %v814, %v814
    %v823 = vpack.c.bf16 %v815, %v815
    %824 = vrot.lane.b32.xlu0 %v287, 64
    %v825 = vpop.permute.xlu0 %824
    %v827 = vsel %vm338, %v816, 0
    %v830 = vsel %vm115, %v825, 0
    %832 = vmatprep.subr.bf16.mxu0 0
    %833 = vmatpush1.bf16.msra.mxu0 %v830
    %834 = vmatprep.subr.bf16.mxu0 0
    %835 = vmatpush1.bf16.msra.mxu0 0
    %836 = vmatprep.subr.bf16.mxu0 0
    %837 = vmatpush1.bf16.msra.mxu0 0
    %838 = vmatprep.subr.bf16.mxu0 0
    %839 = vmatpush1.bf16.msra.mxu0 0
    %840 = vmatprep.subr.bf16.mxu0 0
    %841 = vmatpush1.bf16.msra.mxu0 0
    %842 = vmatprep.subr.bf16.mxu0 0
    %843 = vmatpush1.bf16.msra.mxu0 0
    %844 = vmatprep.subr.bf16.mxu0 0
    %845 = vmatpush1.bf16.msra.mxu0 0
    %846 = vmatprep.subr.bf16.mxu0 0
    %847 = vmatpush1.bf16.msra.mxu0 0
    %848 = vmatprep.subr.bf16.mxu0 0
    %849 = vmatpush1.bf16.msra.mxu0 0
    %850 = vmatprep.subr.bf16.mxu0 0
    %851 = vmatpush1.bf16.msra.mxu0 0
    %852 = vmatprep.subr.bf16.mxu0 0
    %853 = vmatpush1.bf16.msra.mxu0 0
    %854 = vmatprep.subr.bf16.mxu0 0
    %855 = vmatpush1.bf16.msra.mxu0 0
    %856 = vmatprep.subr.bf16.mxu0 0
    %857 = vmatpush1.bf16.msra.mxu0 0
    %858 = vmatprep.subr.bf16.mxu0 0
    %859 = vmatpush1.bf16.msra.mxu0 0
    %860 = vmatprep.subr.bf16.mxu0 0
    %861 = vmatpush1.bf16.msra.mxu0 0
    %862 = vmatprep.subr.bf16.mxu0 0
    %863 = vmatpush1.bf16.msra.mxu0 0
    %864 = vmatprep.mubr.bf16.mxu0 0
    %865 = vmatmul.mubr.bf16.gmra.mrb[0].mxu0 %v827
    %v866 = vpop.f32.mrb[0].mxu0
    %v867 = vadd.f32 0.0, %v866
    %v868 = vpop.f32.mrb[0].mxu0
    %v869 = vpop.f32.mrb[0].mxu0
    %v870 = vpop.f32.mrb[0].mxu0
    %871 = vdwg.mxu0
    %872 = vrot.lane.b32.xlu0 %v288, 64
    %v873 = vpop.permute.xlu0 %872
    %v875 = vsel %vm338, %v817, 0
    %v878 = vsel %vm115, %v873, 0
    %880 = vmatprep.subr.bf16.mxu0 0
    %881 = vmatpush1.bf16.msra.mxu0 %v878
    %882 = vmatprep.subr.bf16.mxu0 0
    %883 = vmatpush1.bf16.msra.mxu0 0
    %884 = vmatprep.subr.bf16.mxu0 0
    %885 = vmatpush1.bf16.msra.mxu0 0
    %886 = vmatprep.subr.bf16.mxu0 0
    %887 = vmatpush1.bf16.msra.mxu0 0
    %888 = vmatprep.subr.bf16.mxu0 0
    %889 = vmatpush1.bf16.msra.mxu0 0
    %890 = vmatprep.subr.bf16.mxu0 0
    %891 = vmatpush1.bf16.msra.mxu0 0
    %892 = vmatprep.subr.bf16.mxu0 0
    %893 = vmatpush1.bf16.msra.mxu0 0
    %894 = vmatprep.subr.bf16.mxu0 0
    %895 = vmatpush1.bf16.msra.mxu0 0
    %896 = vmatprep.subr.bf16.mxu0 0
    %897 = vmatpush1.bf16.msra.mxu0 0
    %898 = vmatprep.subr.bf16.mxu0 0
    %899 = vmatpush1.bf16.msra.mxu0 0
    %900 = vmatprep.subr.bf16.mxu0 0
    %901 = vmatpush1.bf16.msra.mxu0 0
    %902 = vmatprep.subr.bf16.mxu0 0
    %903 = vmatpush1.bf16.msra.mxu0 0
    %904 = vmatprep.subr.bf16.mxu0 0
    %905 = vmatpush1.bf16.msra.mxu0 0
    %906 = vmatprep.subr.bf16.mxu0 0
    %907 = vmatpush1.bf16.msra.mxu0 0
    %908 = vmatprep.subr.bf16.mxu0 0
    %909 = vmatpush1.bf16.msra.mxu0 0
    %910 = vmatprep.subr.bf16.mxu0 0
    %911 = vmatpush1.bf16.msra.mxu0 0
    %912 = vmatprep.mubr.bf16.mxu0 0
    %913 = vmatmul.mubr.bf16.gmra.mrb[0].mxu0 %v875
    %v914 = vpop.f32.mrb[0].mxu0
    %v915 = vadd.f32 0.0, %v914
    %v916 = vpop.f32.mrb[0].mxu0
    %v917 = vpop.f32.mrb[0].mxu0
    %v918 = vpop.f32.mrb[0].mxu0
    %919 = vdwg.mxu0
    %920 = vrot.lane.b32.xlu0 %v289, 64
    %v921 = vpop.permute.xlu0 %920
    %v923 = vsel %vm338, %v818, 0
    %v926 = vsel %vm115, %v921, 0
    %928 = vmatprep.subr.bf16.mxu0 0
    %929 = vmatpush1.bf16.msra.mxu0 %v926
    %930 = vmatprep.subr.bf16.mxu0 0
    %931 = vmatpush1.bf16.msra.mxu0 0
    %932 = vmatprep.subr.bf16.mxu0 0
    %933 = vmatpush1.bf16.msra.mxu0 0
    %934 = vmatprep.subr.bf16.mxu0 0
    %935 = vmatpush1.bf16.msra.mxu0 0
    %936 = vmatprep.subr.bf16.mxu0 0
    %937 = vmatpush1.bf16.msra.mxu0 0
    %938 = vmatprep.subr.bf16.mxu0 0
    %939 = vmatpush1.bf16.msra.mxu0 0
    %940 = vmatprep.subr.bf16.mxu0 0
    %941 = vmatpush1.bf16.msra.mxu0 0
    %942 = vmatprep.subr.bf16.mxu0 0
    %943 = vmatpush1.bf16.msra.mxu0 0
    %944 = vmatprep.subr.bf16.mxu0 0
    %945 = vmatpush1.bf16.msra.mxu0 0
    %946 = vmatprep.subr.bf16.mxu0 0
    %947 = vmatpush1.bf16.msra.mxu0 0
    %948 = vmatprep.subr.bf16.mxu0 0
    %949 = vmatpush1.bf16.msra.mxu0 0
    %950 = vmatprep.subr.bf16.mxu0 0
    %951 = vmatpush1.bf16.msra.mxu0 0
    %952 = vmatprep.subr.bf16.mxu0 0
    %953 = vmatpush1.bf16.msra.mxu0 0
    %954 = vmatprep.subr.bf16.mxu0 0
    %955 = vmatpush1.bf16.msra.mxu0 0
    %956 = vmatprep.subr.bf16.mxu0 0
    %957 = vmatpush1.bf16.msra.mxu0 0
    %958 = vmatprep.subr.bf16.mxu0 0
    %959 = vmatpush1.bf16.msra.mxu0 0
    %960 = vmatprep.mubr.bf16.mxu0 0
    %961 = vmatmul.mubr.bf16.gmra.mrb[0].mxu0 %v923
    %v962 = vpop.f32.mrb[0].mxu0
    %v963 = vadd.f32 0.0, %v962
    %v964 = vpop.f32.mrb[0].mxu0
    %v965 = vpop.f32.mrb[0].mxu0
    %v966 = vpop.f32.mrb[0].mxu0
    %967 = vdwg.mxu0
    %968 = vrot.lane.b32.xlu0 %v290, 64
    %v969 = vpop.permute.xlu0 %968
    %v971 = vsel %vm338, %v819, 0
    %v974 = vsel %vm115, %v969, 0
    %976 = vmatprep.subr.bf16.mxu0 0
    %977 = vmatpush1.bf16.msra.mxu0 %v974
    %978 = vmatprep.subr.bf16.mxu0 0
    %979 = vmatpush1.bf16.msra.mxu0 0
    %980 = vmatprep.subr.bf16.mxu0 0
    %981 = vmatpush1.bf16.msra.mxu0 0
    %982 = vmatprep.subr.bf16.mxu0 0
    %983 = vmatpush1.bf16.msra.mxu0 0
    %984 = vmatprep.subr.bf16.mxu0 0
    %985 = vmatpush1.bf16.msra.mxu0 0
    %986 = vmatprep.subr.bf16.mxu0 0
    %987 = vmatpush1.bf16.msra.mxu0 0
    %988 = vmatprep.subr.bf16.mxu0 0
    %989 = vmatpush1.bf16.msra.mxu0 0
    %990 = vmatprep.subr.bf16.mxu0 0
    %991 = vmatpush1.bf16.msra.mxu0 0
    %992 = vmatprep.subr.bf16.mxu0 0
    %993 = vmatpush1.bf16.msra.mxu0 0
    %994 = vmatprep.subr.bf16.mxu0 0
    %995 = vmatpush1.bf16.msra.mxu0 0
    %996 = vmatprep.subr.bf16.mxu0 0
    %997 = vmatpush1.bf16.msra.mxu0 0
    %998 = vmatprep.subr.bf16.mxu0 0
    %999 = vmatpush1.bf16.msra.mxu0 0
    %1000 = vmatprep.subr.bf16.mxu0 0
    %1001 = vmatpush1.bf16.msra.mxu0 0
    %1002 = vmatprep.subr.bf16.mxu0 0
    %1003 = vmatpush1.bf16.msra.mxu0 0
    %1004 = vmatprep.subr.bf16.mxu0 0
    %1005 = vmatpush1.bf16.msra.mxu0 0
    %1006 = vmatprep.subr.bf16.mxu0 0
    %1007 = vmatpush1.bf16.msra.mxu0 0
    %1008 = vmatprep.mubr.bf16.mxu0 0
    %1009 = vmatmul.mubr.bf16.gmra.mrb[0].mxu0 %v971
    %v1010 = vpop.f32.mrb[0].mxu0
    %v1011 = vadd.f32 0.0, %v1010
    %v1012 = vpop.f32.mrb[0].mxu0
    %v1013 = vpop.f32.mrb[0].mxu0
    %v1014 = vpop.f32.mrb[0].mxu0
    %1015 = vdwg.mxu0
    %1016 = vrot.lane.b32.xlu0 %v291, 64
    %v1017 = vpop.permute.xlu0 %1016
    %v1019 = vsel %vm338, %v820, 0
    %v1022 = vsel %vm115, %v1017, 0
    %1024 = vmatprep.subr.bf16.mxu0 0
    %1025 = vmatpush1.bf16.msra.mxu0 %v1022
    %1026 = vmatprep.subr.bf16.mxu0 0
    %1027 = vmatpush1.bf16.msra.mxu0 0
    %1028 = vmatprep.subr.bf16.mxu0 0
    %1029 = vmatpush1.bf16.msra.mxu0 0
    %1030 = vmatprep.subr.bf16.mxu0 0
    %1031 = vmatpush1.bf16.msra.mxu0 0
    %1032 = vmatprep.subr.bf16.mxu0 0
    %1033 = vmatpush1.bf16.msra.mxu0 0
    %1034 = vmatprep.subr.bf16.mxu0 0
    %1035 = vmatpush1.bf16.msra.mxu0 0
    %1036 = vmatprep.subr.bf16.mxu0 0
    %1037 = vmatpush1.bf16.msra.mxu0 0
    %1038 = vmatprep.subr.bf16.mxu0 0
    %1039 = vmatpush1.bf16.msra.mxu0 0
    %1040 = vmatprep.subr.bf16.mxu0 0
    %1041 = vmatpush1.bf16.msra.mxu0 0
    %1042 = vmatprep.subr.bf16.mxu0 0
    %1043 = vmatpush1.bf16.msra.mxu0 0
    %1044 = vmatprep.subr.bf16.mxu0 0
    %1045 = vmatpush1.bf16.msra.mxu0 0
    %1046 = vmatprep.subr.bf16.mxu0 0
    %1047 = vmatpush1.bf16.msra.mxu0 0
    %1048 = vmatprep.subr.bf16.mxu0 0
    %1049 = vmatpush1.bf16.msra.mxu0 0
    %1050 = vmatprep.subr.bf16.mxu0 0
    %1051 = vmatpush1.bf16.msra.mxu0 0
    %1052 = vmatprep.subr.bf16.mxu0 0
    %1053 = vmatpush1.bf16.msra.mxu0 0
    %1054 = vmatprep.subr.bf16.mxu0 0
    %1055 = vmatpush1.bf16.msra.mxu0 0
    %1056 = vmatprep.mubr.bf16.mxu0 0
    %1057 = vmatmul.mubr.bf16.gmra.mrb[0].mxu0 %v1019
    %v1058 = vpop.f32.mrb[0].mxu0
    %v1059 = vadd.f32 0.0, %v1058
    %v1060 = vpop.f32.mrb[0].mxu0
    %v1061 = vpop.f32.mrb[0].mxu0
    %v1062 = vpop.f32.mrb[0].mxu0
    %1063 = vdwg.mxu0
    %1064 = vrot.lane.b32.xlu0 %v292, 64
    %v1065 = vpop.permute.xlu0 %1064
    %v1067 = vsel %vm338, %v821, 0
    %v1070 = vsel %vm115, %v1065, 0
    %1072 = vmatprep.subr.bf16.mxu0 0
    %1073 = vmatpush1.bf16.msra.mxu0 %v1070
    %1074 = vmatprep.subr.bf16.mxu0 0
    %1075 = vmatpush1.bf16.msra.mxu0 0
    %1076 = vmatprep.subr.bf16.mxu0 0
    %1077 = vmatpush1.bf16.msra.mxu0 0
    %1078 = vmatprep.subr.bf16.mxu0 0
    %1079 = vmatpush1.bf16.msra.mxu0 0
    %1080 = vmatprep.subr.bf16.mxu0 0
    %1081 = vmatpush1.bf16.msra.mxu0 0
    %1082 = vmatprep.subr.bf16.mxu0 0
    %1083 = vmatpush1.bf16.msra.mxu0 0
    %1084 = vmatprep.subr.bf16.mxu0 0
    %1085 = vmatpush1.bf16.msra.mxu0 0
    %1086 = vmatprep.subr.bf16.mxu0 0
    %1087 = vmatpush1.bf16.msra.mxu0 0
    %1088 = vmatprep.subr.bf16.mxu0 0
    %1089 = vmatpush1.bf16.msra.mxu0 0
    %1090 = vmatprep.subr.bf16.mxu0 0
    %1091 = vmatpush1.bf16.msra.mxu0 0
    %1092 = vmatprep.subr.bf16.mxu0 0
    %1093 = vmatpush1.bf16.msra.mxu0 0
    %1094 = vmatprep.subr.bf16.mxu0 0
    %1095 = vmatpush1.bf16.msra.mxu0 0
    %1096 = vmatprep.subr.bf16.mxu0 0
    %1097 = vmatpush1.bf16.msra.mxu0 0
    %1098 = vmatprep.subr.bf16.mxu0 0
    %1099 = vmatpush1.bf16.msra.mxu0 0
    %1100 = vmatprep.subr.bf16.mxu0 0
    %1101 = vmatpush1.bf16.msra.mxu0 0
    %1102 = vmatprep.subr.bf16.mxu0 0
    %1103 = vmatpush1.bf16.msra.mxu0 0
    %1104 = vmatprep.mubr.bf16.mxu0 0
    %1105 = vmatmul.mubr.bf16.gmra.mrb[0].mxu0 %v1067
    %v1106 = vpop.f32.mrb[0].mxu0
    %v1107 = vadd.f32 0.0, %v1106
    %v1108 = vpop.f32.mrb[0].mxu0
    %v1109 = vpop.f32.mrb[0].mxu0
    %v1110 = vpop.f32.mrb[0].mxu0
    %1111 = vdwg.mxu0
    %1112 = vrot.lane.b32.xlu0 %v293, 64
    %v1113 = vpop.permute.xlu0 %1112
    %v1115 = vsel %vm338, %v822, 0
    %v1118 = vsel %vm115, %v1113, 0
    %1120 = vmatprep.subr.bf16.mxu0 0
    %1121 = vmatpush1.bf16.msra.mxu0 %v1118
    %1122 = vmatprep.subr.bf16.mxu0 0
    %1123 = vmatpush1.bf16.msra.mxu0 0
    %1124 = vmatprep.subr.bf16.mxu0 0
    %1125 = vmatpush1.bf16.msra.mxu0 0
    %1126 = vmatprep.subr.bf16.mxu0 0
    %1127 = vmatpush1.bf16.msra.mxu0 0
    %1128 = vmatprep.subr.bf16.mxu0 0
    %1129 = vmatpush1.bf16.msra.mxu0 0
    %1130 = vmatprep.subr.bf16.mxu0 0
    %1131 = vmatpush1.bf16.msra.mxu0 0
    %1132 = vmatprep.subr.bf16.mxu0 0
    %1133 = vmatpush1.bf16.msra.mxu0 0
    %1134 = vmatprep.subr.bf16.mxu0 0
    %1135 = vmatpush1.bf16.msra.mxu0 0
    %1136 = vmatprep.subr.bf16.mxu0 0
    %1137 = vmatpush1.bf16.msra.mxu0 0
    %1138 = vmatprep.subr.bf16.mxu0 0
    %1139 = vmatpush1.bf16.msra.mxu0 0
    %1140 = vmatprep.subr.bf16.mxu0 0
    %1141 = vmatpush1.bf16.msra.mxu0 0
    %1142 = vmatprep.subr.bf16.mxu0 0
    %1143 = vmatpush1.bf16.msra.mxu0 0
    %1144 = vmatprep.subr.bf16.mxu0 0
    %1145 = vmatpush1.bf16.msra.mxu0 0
    %1146 = vmatprep.subr.bf16.mxu0 0
    %1147 = vmatpush1.bf16.msra.mxu0 0
    %1148 = vmatprep.subr.bf16.mxu0 0
    %1149 = vmatpush1.bf16.msra.mxu0 0
    %1150 = vmatprep.subr.bf16.mxu0 0
    %1151 = vmatpush1.bf16.msra.mxu0 0
    %1152 = vmatprep.mubr.bf16.mxu0 0
    %1153 = vmatmul.mubr.bf16.gmra.mrb[0].mxu0 %v1115
    %v1154 = vpop.f32.mrb[0].mxu0
    %v1155 = vadd.f32 0.0, %v1154
    %v1156 = vpop.f32.mrb[0].mxu0
    %v1157 = vpop.f32.mrb[0].mxu0
    %v1158 = vpop.f32.mrb[0].mxu0
    %1159 = vdwg.mxu0
    %1160 = vrot.lane.b32.xlu0 %v294, 64
    %v1161 = vpop.permute.xlu0 %1160
    %v1163 = vsel %vm338, %v823, 0
    %v1166 = vsel %vm115, %v1161, 0
    %1168 = vmatprep.subr.bf16.mxu0 0
    %1169 = vmatpush1.bf16.msra.mxu0 %v1166
    %1170 = vmatprep.subr.bf16.mxu0 0
    %1171 = vmatpush1.bf16.msra.mxu0 0
    %1172 = vmatprep.subr.bf16.mxu0 0
    %1173 = vmatpush1.bf16.msra.mxu0 0
    %1174 = vmatprep.subr.bf16.mxu0 0
    %1175 = vmatpush1.bf16.msra.mxu0 0
    %1176 = vmatprep.subr.bf16.mxu0 0
    %1177 = vmatpush1.bf16.msra.mxu0 0
    %1178 = vmatprep.subr.bf16.mxu0 0
    %1179 = vmatpush1.bf16.msra.mxu0 0
    %1180 = vmatprep.subr.bf16.mxu0 0
    %1181 = vmatpush1.bf16.msra.mxu0 0
    %1182 = vmatprep.subr.bf16.mxu0 0
    %1183 = vmatpush1.bf16.msra.mxu0 0
    %1184 = vmatprep.subr.bf16.mxu0 0
    %1185 = vmatpush1.bf16.msra.mxu0 0
    %1186 = vmatprep.subr.bf16.mxu0 0
    %1187 = vmatpush1.bf16.msra.mxu0 0
    %1188 = vmatprep.subr.bf16.mxu0 0
    %1189 = vmatpush1.bf16.msra.mxu0 0
    %1190 = vmatprep.subr.bf16.mxu0 0
    %1191 = vmatpush1.bf16.msra.mxu0 0
    %1192 = vmatprep.subr.bf16.mxu0 0
    %1193 = vmatpush1.bf16.msra.mxu0 0
    %1194 = vmatprep.subr.bf16.mxu0 0
    %1195 = vmatpush1.bf16.msra.mxu0 0
    %1196 = vmatprep.subr.bf16.mxu0 0
    %1197 = vmatpush1.bf16.msra.mxu0 0
    %1198 = vmatprep.subr.bf16.mxu0 0
    %1199 = vmatpush1.bf16.msra.mxu0 0
    %1200 = vmatprep.mubr.bf16.mxu0 0
    %1201 = vmatmul.mubr.bf16.gmra.mrb[0].mxu0 %v1163
    %v1202 = vpop.f32.mrb[0].mxu0
    %v1203 = vadd.f32 0.0, %v1202
    %v1204 = vpop.f32.mrb[0].mxu0
    %v1205 = vpop.f32.mrb[0].mxu0
    %v1206 = vpop.f32.mrb[0].mxu0
    %1207 = vdwg.mxu0
    %1210 = vrot.lane.b32.xlu0 %v963, 8
    %v1211 = vpop.permute.xlu0 %1210
    %1212 = vrot.lane.b32.xlu0 %v1011, 8
    %v1213 = vpop.permute.xlu0 %1212
    %1218 = vrot.lane.b32.xlu0 %v1059, 16
    %v1219 = vpop.permute.xlu0 %1218
    %1220 = vrot.lane.b32.xlu0 %v1107, 16
    %v1221 = vpop.permute.xlu0 %1220
    %1226 = vrot.lane.b32.xlu0 %v1155, 24
    %v1227 = vpop.permute.xlu0 %1226
    %1228 = vrot.lane.b32.xlu0 %v1203, 24
    %v1229 = vpop.permute.xlu0 %1228
    %v1232 = vsel %vm338, %v867, %v1211
    %v1233 = vsel %vm338, %v915, %v1213
    %vm1234 = vcmask 130048
    %v1235 = vsel %vm1234, %v1232, %v1219
    %v1236 = vsel %vm1234, %v1233, %v1221
    %vm1237 = vcmask 195584
    %v1238 = vsel %vm1237, %v1235, %v1227
    %v1239 = vsel %vm1237, %v1236, %v1229
    %v1240 = vpack.c.bf16 %v1239, %v1238
    %v1241 = vld [vmem:[%s6] sm:$0xf]
    %v1242 = vld [vmem:[%s6 + $0x4] sm:$0xf]
    %v1243 = vld [vmem:[%s6 + $0x8] sm:$0xf]
    %v1244 = vld [vmem:[%s6 + $0xc] sm:$0xf]
    %v1245 = vld [vmem:[%s7] sm:$0x1]
    %v1247 = vlaneseq
    %v1248 = vshrl.u32 %v1247, 7
    %v1249 = vsub.s32 0, %v1248
    %v1250 = vrot.slane %v1245, %v1249
    %v1256 = vunpack.c.l.b16 %v1241
    %v1257 = vunpack.c.l.b16 %v1242
    %v1258 = vunpack.c.l.b16 %v1243
    %v1259 = vunpack.c.l.b16 %v1244
    %v1260 = vpack.c.b16 %v1257, %v1256
    %v1261 = vpack.c.b16 %v1259, %v1258
    %v1265 = vsel %vm59, %v1240, 0
    %1267 = vmatprep.subr.bf16.mxu0 0
    %1268 = vmatpush1.bf16.msra.mxu0 %v1260
    %1269 = vmatprep.subr.bf16.mxu0 0
    %1270 = vmatpush1.bf16.msra.mxu0 %v1261
    %1271 = vmatprep.subr.bf16.mxu0 0
    %1272 = vmatpush1.bf16.msra.mxu0 0
    %1273 = vmatprep.subr.bf16.mxu0 0
    %1274 = vmatpush1.bf16.msra.mxu0 0
    %1275 = vmatprep.subr.bf16.mxu0 0
    %1276 = vmatpush1.bf16.msra.mxu0 0
    %1277 = vmatprep.subr.bf16.mxu0 0
    %1278 = vmatpush1.bf16.msra.mxu0 0
    %1279 = vmatprep.subr.bf16.mxu0 0
    %1280 = vmatpush1.bf16.msra.mxu0 0
    %1281 = vmatprep.subr.bf16.mxu0 0
    %1282 = vmatpush1.bf16.msra.mxu0 0
    %1283 = vmatprep.subr.bf16.mxu0 0
    %1284 = vmatpush1.bf16.msra.mxu0 0
    %1285 = vmatprep.subr.bf16.mxu0 0
    %1286 = vmatpush1.bf16.msra.mxu0 0
    %1287 = vmatprep.subr.bf16.mxu0 0
    %1288 = vmatpush1.bf16.msra.mxu0 0
    %1289 = vmatprep.subr.bf16.mxu0 0
    %1290 = vmatpush1.bf16.msra.mxu0 0
    %1291 = vmatprep.subr.bf16.mxu0 0
    %1292 = vmatpush1.bf16.msra.mxu0 0
    %1293 = vmatprep.subr.bf16.mxu0 0
    %1294 = vmatpush1.bf16.msra.mxu0 0
    %1295 = vmatprep.subr.bf16.mxu0 0
    %1296 = vmatpush1.bf16.msra.mxu0 0
    %1297 = vmatprep.subr.bf16.mxu0 0
    %1298 = vmatpush1.bf16.msra.mxu0 0
    %1299 = vmatprep.mubr.bf16.mxu0 0
    %1300 = vmatmul.mubr.bf16.gmra.mrb[0].mxu0 %v1265
    %v1301 = vpop.f32.mrb[0].mxu0
    %v1302 = vadd.f32 %v1250, %v1301
    %v1303 = vpop.f32.mrb[0].mxu0
    %v1304 = vpop.f32.mrb[0].mxu0
    %v1305 = vadd.f32 %v1250, %v1304
    %v1306 = vpop.f32.mrb[0].mxu0
    %1307 = vdwg.mxu0
    %v1308 = vadd.f32 %v1302, %v101
    %v1309 = vadd.f32 %v1305, %v102
    %v1310 = vld [vmem:[%s8] sm:$0x1]
    %v1311 = vld [vmem:[%s9] sm:$0x1]
    %v1312 = vsel %vm59, %v1308, 0.0
    %1313 = vadd.xlane.f32.xlu0 %v1312
    %v1314 = vpop.xlane.xlu0 %1313
    %v1315 = vsel %vm59, %v1309, 0.0
    %1316 = vadd.xlane.f32.xlu0 %v1315
    %v1317 = vpop.xlane.xlu0 %1316
    %v1318 = vmul.f32 %v1314, %v66
    %v1319 = vmul.f32 %v1317, %v66
    %v1320 = vsub.f32 %v1308, %v1318
    %v1321 = vsub.f32 %v1309, %v1319
    %v1322 = vmul.f32 %v1320, %v1320
    %v1323 = vmul.f32 %v1321, %v1321
    %v1324 = vsel %vm59, %v1322, 0.0
    %1325 = vadd.xlane.f32.xlu0 %v1324
    %v1326 = vpop.xlane.xlu0 %1325
    %v1327 = vsel %vm59, %v1323, 0.0
    %1328 = vadd.xlane.f32.xlu0 %v1327
    %v1329 = vpop.xlane.xlu0 %1328
    %v1330 = vmul.f32 %v1326, %v66
    %v1331 = vmul.f32 %v1329, %v66
    %v1332 = vadd.f32 %v1330, 1e-12
    %v1333 = vadd.f32 %v1331, 1e-12
    %v1334 = vrsqrt.pop %v1332
    %v1335 = vrsqrt.pop %v1333
    %v1336 = vmul.f32 %v1320, %v1334
    %v1337 = vmul.f32 %v1321, %v1335
    %v1339 = vlaneseq
    %v1340 = vshrl.u32 %v1339, 7
    %v1341 = vsub.s32 0, %v1340
    %v1342 = vrot.slane %v1310, %v1341
    %v1344 = vmul.f32 %v1336, %v1342
    %v1345 = vmul.f32 %v1337, %v1342
    %v1347 = vlaneseq
    %v1348 = vshrl.u32 %v1347, 7
    %v1349 = vsub.s32 0, %v1348
    %v1350 = vrot.slane %v1311, %v1349
    %v1352 = vadd.f32 %v1344, %v1350
    %v1353 = vadd.f32 %v1345, %v1350
    %v1354 = vpack.c.bf16 %v1353, %v1352
    %v1355 = vld [vmem:[%s10] sm:$0xf]
    %v1356 = vld [vmem:[%s10 + $0x4] sm:$0xf]
    %v1357 = vld [vmem:[%s10 + $0x8] sm:$0xf]
    %v1358 = vld [vmem:[%s10 + $0xc] sm:$0xf]
    %v1359 = vld [vmem:[%s11] sm:$0x1]
    %v1361 = vlaneseq
    %v1362 = vshrl.u32 %v1361, 7
    %v1363 = vsub.s32 0, %v1362
    %v1364 = vrot.slane %v1359, %v1363
    %v1370 = vunpack.c.l.b16 %v1355
    %v1371 = vunpack.c.l.b16 %v1356
    %v1372 = vunpack.c.l.b16 %v1357
    %v1373 = vunpack.c.l.b16 %v1358
    %v1374 = vpack.c.b16 %v1371, %v1370
    %v1375 = vpack.c.b16 %v1373, %v1372
    %v1379 = vsel %vm59, %v1354, 0
    %1381 = vmatprep.subr.bf16.mxu0 0
    %1382 = vmatpush1.bf16.msra.mxu0 %v1374
    %1383 = vmatprep.subr.bf16.mxu0 0
    %1384 = vmatpush1.bf16.msra.mxu0 %v1375
    %1385 = vmatprep.subr.bf16.mxu0 0
    %1386 = vmatpush1.bf16.msra.mxu0 0
    %1387 = vmatprep.subr.bf16.mxu0 0
    %1388 = vmatpush1.bf16.msra.mxu0 0
    %1389 = vmatprep.subr.bf16.mxu0 0
    %1390 = vmatpush1.bf16.msra.mxu0 0
    %1391 = vmatprep.subr.bf16.mxu0 0
    %1392 = vmatpush1.bf16.msra.mxu0 0
    %1393 = vmatprep.subr.bf16.mxu0 0
    %1394 = vmatpush1.bf16.msra.mxu0 0
    %1395 = vmatprep.subr.bf16.mxu0 0
    %1396 = vmatpush1.bf16.msra.mxu0 0
    %1397 = vmatprep.subr.bf16.mxu0 0
    %1398 = vmatpush1.bf16.msra.mxu0 0
    %1399 = vmatprep.subr.bf16.mxu0 0
    %1400 = vmatpush1.bf16.msra.mxu0 0
    %1401 = vmatprep.subr.bf16.mxu0 0
    %1402 = vmatpush1.bf16.msra.mxu0 0
    %1403 = vmatprep.subr.bf16.mxu0 0
    %1404 = vmatpush1.bf16.msra.mxu0 0
    %1405 = vmatprep.subr.bf16.mxu0 0
    %1406 = vmatpush1.bf16.msra.mxu0 0
    %1407 = vmatprep.subr.bf16.mxu0 0
    %1408 = vmatpush1.bf16.msra.mxu0 0
    %1409 = vmatprep.subr.bf16.mxu0 0
    %1410 = vmatpush1.bf16.msra.mxu0 0
    %1411 = vmatprep.subr.bf16.mxu0 0
    %1412 = vmatpush1.bf16.msra.mxu0 0
    %1413 = vmatprep.mubr.bf16.mxu0 0
    %1414 = vmatmul.mubr.bf16.gmra.mrb[0].mxu0 %v1379
    %v1415 = vpop.f32.mrb[0].mxu0
    %v1416 = vadd.f32 %v1364, %v1415
    %v1417 = vpop.f32.mrb[0].mxu0
    %v1418 = vpop.f32.mrb[0].mxu0
    %v1419 = vadd.f32 %v1364, %v1418
    %v1420 = vpop.f32.mrb[0].mxu0
    %1421 = vdwg.mxu0
    %v1422 = vmul.f32 %v1416, 0.5
    %v1423 = vmul.f32 %v1419, 0.5
    %v1424 = vmul.f32 %v1416, 0.044715
    %v1425 = vmul.f32 %v1419, 0.044715
    %v1426 = vmul.f32 %v1424, %v1416
    %v1427 = vmul.f32 %v1425, %v1419
    %v1428 = vmul.f32 %v1426, %v1416
    %v1429 = vmul.f32 %v1427, %v1419
    %v1430 = vadd.f32 %v1416, %v1428
    %v1431 = vadd.f32 %v1419, %v1429
    %v1432 = vmul.f32 %v1430, 0.7978846
    %v1433 = vmul.f32 %v1431, 0.7978846
    %v1434 = vtanh.pop %v1432
    %v1435 = vtanh.pop %v1433
    %v1436 = vadd.f32 %v1434, 1.0
    %v1437 = vadd.f32 %v1435, 1.0
    %v1438 = vmul.f32 %v1422, %v1436
    %v1439 = vmul.f32 %v1423, %v1437
    %v1440 = vpack.c.bf16 %v1439, %v1438
    %v1441 = vld [vmem:[%s12] sm:$0xf]
    %v1442 = vld [vmem:[%s12 + $0x4] sm:$0xf]
    %v1443 = vld [vmem:[%s12 + $0x8] sm:$0xf]
    %v1444 = vld [vmem:[%s12 + $0xc] sm:$0xf]
    %v1445 = vld [vmem:[%s12 + $0x10] sm:$0xf]
    %v1446 = vld [vmem:[%s12 + $0x14] sm:$0xf]
    %v1447 = vld [vmem:[%s12 + $0x18] sm:$0xf]
    %v1448 = vld [vmem:[%s12 + $0x1c] sm:$0xf]
    %v1449 = vld [vmem:[%s13] sm:$0x1]
    %v1451 = vlaneseq
    %v1452 = vshrl.u32 %v1451, 7
    %v1453 = vsub.s32 0, %v1452
    %v1454 = vrot.slane %v1449, %v1453
    %v1464 = vunpack.c.l.b16 %v1441
    %v1465 = vunpack.c.l.b16 %v1442
    %v1466 = vunpack.c.l.b16 %v1443
    %v1467 = vunpack.c.l.b16 %v1444
    %v1468 = vunpack.c.l.b16 %v1445
    %v1469 = vunpack.c.l.b16 %v1446
    %v1470 = vunpack.c.l.b16 %v1447
    %v1471 = vunpack.c.l.b16 %v1448
    %v1472 = vpack.c.b16 %v1465, %v1464
    %v1473 = vpack.c.b16 %v1467, %v1466
    %v1474 = vpack.c.b16 %v1469, %v1468
    %v1475 = vpack.c.b16 %v1471, %v1470
    %vm1480 = vcmask 523264
    %v1482 = vsel %vm1480, %v1440, 0
    %1484 = vmatprep.subr.bf16.mxu0 0
    %1485 = vmatpush1.bf16.msra.mxu0 %v1472
    %1486 = vmatprep.subr.bf16.mxu0 0
    %1487 = vmatpush1.bf16.msra.mxu0 %v1473
    %1488 = vmatprep.subr.bf16.mxu0 0
    %1489 = vmatpush1.bf16.msra.mxu0 %v1474
    %1490 = vmatprep.subr.bf16.mxu0 0
    %1491 = vmatpush1.bf16.msra.mxu0 %v1475
    %1492 = vmatprep.subr.bf16.mxu0 0
    %1493 = vmatpush1.bf16.msra.mxu0 0
    %1494 = vmatprep.subr.bf16.mxu0 0
    %1495 = vmatpush1.bf16.msra.mxu0 0
    %1496 = vmatprep.subr.bf16.mxu0 0
    %1497 = vmatpush1.bf16.msra.mxu0 0
    %1498 = vmatprep.subr.bf16.mxu0 0
    %1499 = vmatpush1.bf16.msra.mxu0 0
    %1500 = vmatprep.subr.bf16.mxu0 0
    %1501 = vmatpush1.bf16.msra.mxu0 0
    %1502 = vmatprep.subr.bf16.mxu0 0
    %1503 = vmatpush1.bf16.msra.mxu0 0
    %1504 = vmatprep.subr.bf16.mxu0 0
    %1505 = vmatpush1.bf16.msra.mxu0 0
    %1506 = vmatprep.subr.bf16.mxu0 0
    %1507 = vmatpush1.bf16.msra.mxu0 0
    %1508 = vmatprep.subr.bf16.mxu0 0
    %1509 = vmatpush1.bf16.msra.mxu0 0
    %1510 = vmatprep.subr.bf16.mxu0 0
    %1511 = vmatpush1.bf16.msra.mxu0 0
    %1512 = vmatprep.subr.bf16.mxu0 0
    %1513 = vmatpush1.bf16.msra.mxu0 0
    %1514 = vmatprep.subr.bf16.mxu0 0
    %1515 = vmatpush1.bf16.msra.mxu0 0
    %1516 = vmatprep.mubr.bf16.mxu0 0
    %1517 = vmatmul.mubr.bf16.gmra.mrb[0].mxu0 %v1482
    %v1518 = vpop.f32.mrb[0].mxu0
    %v1519 = vadd.f32 %v1454, %v1518
    %v1520 = vpop.f32.mrb[0].mxu0
    %v1521 = vpop.f32.mrb[0].mxu0
    %v1522 = vadd.f32 %v1454, %v1521
    %v1523 = vpop.f32.mrb[0].mxu0
    %1524 = vdwg.mxu0
    %v1525 = vadd.f32 %v1519, %v1352
    %v1526 = vadd.f32 %v1522, %v1353
    %v1527 = vld [vmem:[%s14] sm:$0x1]
    %v1528 = vld [vmem:[%s15] sm:$0x1]
    %v1529 = vsel %vm59, %v1525, 0.0
    %1530 = vadd.xlane.f32.xlu0 %v1529
    %v1531 = vpop.xlane.xlu0 %1530
    %v1532 = vsel %vm59, %v1526, 0.0
    %1533 = vadd.xlane.f32.xlu0 %v1532
    %v1534 = vpop.xlane.xlu0 %1533
    %v1535 = vmul.f32 %v1531, %v66
    %v1536 = vmul.f32 %v1534, %v66
    %v1537 = vsub.f32 %v1525, %v1535
    %v1538 = vsub.f32 %v1526, %v1536
    %v1539 = vmul.f32 %v1537, %v1537
    %v1540 = vmul.f32 %v1538, %v1538
    %v1541 = vsel %vm59, %v1539, 0.0
    %1542 = vadd.xlane.f32.xlu0 %v1541
    %v1543 = vpop.xlane.xlu0 %1542
    %v1544 = vsel %vm59, %v1540, 0.0
    %1545 = vadd.xlane.f32.xlu0 %v1544
    %v1546 = vpop.xlane.xlu0 %1545
    %v1547 = vmul.f32 %v1543, %v66
    %v1548 = vmul.f32 %v1546, %v66
    %v1549 = vadd.f32 %v1547, 1e-12
    %v1550 = vadd.f32 %v1548, 1e-12
    %v1551 = vrsqrt.pop %v1549
    %v1552 = vrsqrt.pop %v1550
    %v1553 = vmul.f32 %v1537, %v1551
    %v1554 = vmul.f32 %v1538, %v1552
    %v1556 = vlaneseq
    %v1557 = vshrl.u32 %v1556, 7
    %v1558 = vsub.s32 0, %v1557
    %v1559 = vrot.slane %v1527, %v1558
    %v1561 = vmul.f32 %v1553, %v1559
    %v1562 = vmul.f32 %v1554, %v1559
    %v1564 = vlaneseq
    %v1565 = vshrl.u32 %v1564, 7
    %v1566 = vsub.s32 0, %v1565
    %v1567 = vrot.slane %v1528, %v1566
    %v1569 = vadd.f32 %v1561, %v1567
    %v1570 = vadd.f32 %v1562, %v1567
    %v1571 = vpack.c.bf16 %v1570, %v1569
    %s1572 = scalar_lea.vmem %s4, 16
    %v1573 = vld [vmem:[%s1572] sm:$0xf]
    %v1574 = vld [vmem:[%s1572 + $0x4] sm:$0xf]
    %v1575 = vld [vmem:[%s1572 + $0x8] sm:$0xf]
    %v1576 = vld [vmem:[%s1572 + $0xc] sm:$0xf]
    %s1577 = scalar_lea.vmem %s5, 1
    %v1578 = vld [vmem:[%s1577] sm:$0x1]
    %v1580 = vlaneseq
    %v1581 = vshrl.u32 %v1580, 7
    %v1582 = vsub.s32 0, %v1581
    %v1583 = vrot.slane %v1578, %v1582
    %v1589 = vunpack.c.l.b16 %v1573
    %v1590 = vunpack.c.l.b16 %v1574
    %v1591 = vunpack.c.l.b16 %v1575
    %v1592 = vunpack.c.l.b16 %v1576
    %v1593 = vpack.c.b16 %v1590, %v1589
    %v1594 = vpack.c.b16 %v1592, %v1591
    %v1598 = vsel %vm59, %v1571, 0
    %1600 = vmatprep.subr.bf16.mxu0 0
    %1601 = vmatpush1.bf16.msra.mxu0 %v1593
    %1602 = vmatprep.subr.bf16.mxu0 0
    %1603 = vmatpush1.bf16.msra.mxu0 %v1594
    %1604 = vmatprep.subr.bf16.mxu0 0
    %1605 = vmatpush1.bf16.msra.mxu0 0
    %1606 = vmatprep.subr.bf16.mxu0 0
    %1607 = vmatpush1.bf16.msra.mxu0 0
    %1608 = vmatprep.subr.bf16.mxu0 0
    %1609 = vmatpush1.bf16.msra.mxu0 0
    %1610 = vmatprep.subr.bf16.mxu0 0
    %1611 = vmatpush1.bf16.msra.mxu0 0
    %1612 = vmatprep.subr.bf16.mxu0 0
    %1613 = vmatpush1.bf16.msra.mxu0 0
    %1614 = vmatprep.subr.bf16.mxu0 0
    %1615 = vmatpush1.bf16.msra.mxu0 0
    %1616 = vmatprep.subr.bf16.mxu0 0
    %1617 = vmatpush1.bf16.msra.mxu0 0
    %1618 = vmatprep.subr.bf16.mxu0 0
    %1619 = vmatpush1.bf16.msra.mxu0 0
    %1620 = vmatprep.subr.bf16.mxu0 0
    %1621 = vmatpush1.bf16.msra.mxu0 0
    %1622 = vmatprep.subr.bf16.mxu0 0
    %1623 = vmatpush1.bf16.msra.mxu0 0
    %1624 = vmatprep.subr.bf16.mxu0 0
    %1625 = vmatpush1.bf16.msra.mxu0 0
    %1626 = vmatprep.subr.bf16.mxu0 0
    %1627 = vmatpush1.bf16.msra.mxu0 0
    %1628 = vmatprep.subr.bf16.mxu0 0
    %1629 = vmatpush1.bf16.msra.mxu0 0
    %1630 = vmatprep.subr.bf16.mxu0 0
    %1631 = vmatpush1.bf16.msra.mxu0 0
    %1632 = vmatprep.mubr.bf16.mxu0 0
    %1633 = vmatmul.mubr.bf16.gmra.mrb[0].mxu0 %v1598
    %v1634 = vpop.f32.mrb[0].mxu0
    %v1635 = vadd.f32 %v1583, %v1634
    %v1636 = vpop.f32.mrb[0].mxu0
    %v1637 = vpop.f32.mrb[0].mxu0
    %v1638 = vadd.f32 %v1583, %v1637
    %v1639 = vpop.f32.mrb[0].mxu0
    %1640 = vdwg.mxu0
    %v1641 = vmul.f32 %v1635, 0.35355338
    %v1642 = vmul.f32 %v1638, 0.35355338
    %1645 = vrot.lane.b32.xlu0 %v1641, 120
    %v1646 = vpop.permute.xlu0 %1645
    %1647 = vrot.lane.b32.xlu0 %v1642, 120
    %v1648 = vpop.permute.xlu0 %1647
    %1651 = vrot.lane.b32.xlu0 %v1641, 112
    %v1652 = vpop.permute.xlu0 %1651
    %1653 = vrot.lane.b32.xlu0 %v1642, 112
    %v1654 = vpop.permute.xlu0 %1653
    %1657 = vrot.lane.b32.xlu0 %v1641, 104
    %v1658 = vpop.permute.xlu0 %1657
    %1659 = vrot.lane.b32.xlu0 %v1642, 104
    %v1660 = vpop.permute.xlu0 %1659
    %1665 = vrot.lane.b32.xlu0 %v1635, 120
    %v1666 = vpop.permute.xlu0 %1665
    %1667 = vrot.lane.b32.xlu0 %v1638, 120
    %v1668 = vpop.permute.xlu0 %1667
    %1671 = vrot.lane.b32.xlu0 %v1635, 112
    %v1672 = vpop.permute.xlu0 %1671
    %1673 = vrot.lane.b32.xlu0 %v1638, 112
    %v1674 = vpop.permute.xlu0 %1673
    %1677 = vrot.lane.b32.xlu0 %v1635, 104
    %v1678 = vpop.permute.xlu0 %1677
    %1679 = vrot.lane.b32.xlu0 %v1638, 104
    %v1680 = vpop.permute.xlu0 %1679
    %v1683 = vpack.c.bf16 %v1641, %v1641
    %v1684 = vpack.c.bf16 %v1642, %v1642
    %v1685 = vpack.c.bf16 %v1646, %v1646
    %v1686 = vpack.c.bf16 %v1648, %v1648
    %v1687 = vpack.c.bf16 %v1652, %v1652
    %v1688 = vpack.c.bf16 %v1654, %v1654
    %v1689 = vpack.c.bf16 %v1658, %v1658
    %v1690 = vpack.c.bf16 %v1660, %v1660
    %v1691 = vpack.c.bf16 %v1635, %v1635
    %v1692 = vpack.c.bf16 %v1638, %v1638
    %v1693 = vpack.c.bf16 %v1666, %v1666
    %v1694 = vpack.c.bf16 %v1668, %v1668
    %v1695 = vpack.c.bf16 %v1672, %v1672
    %v1696 = vpack.c.bf16 %v1674, %v1674
    %v1697 = vpack.c.bf16 %v1678, %v1678
    %v1698 = vpack.c.bf16 %v1680, %v1680
    %1700 = vrot.lane.b32.xlu0 %v1691, 96
    %v1701 = vpop.permute.xlu0 %1700
    %v1703 = vsel %vm338, %v1683, 0
    %v1706 = vsel %vm338, %v1701, 0
    %1708 = vmatprep.subr.bf16.mxu0 0
    %1709 = vmatpush1.bf16.xpose.msra.mxu0 %v1706
    %1710 = vmatprep.subr.bf16.mxu0 0
    %1711 = vmatpush1.bf16.xpose.msra.mxu0 0
    %1712 = vmatprep.subr.bf16.mxu0 0
    %1713 = vmatpush1.bf16.xpose.msra.mxu0 0
    %1714 = vmatprep.subr.bf16.mxu0 0
    %1715 = vmatpush1.bf16.xpose.msra.mxu0 0
    %1716 = vmatprep.subr.bf16.mxu0 0
    %1717 = vmatpush1.bf16.xpose.msra.mxu0 0
    %1718 = vmatprep.subr.bf16.mxu0 0
    %1719 = vmatpush1.bf16.xpose.msra.mxu0 0
    %1720 = vmatprep.subr.bf16.mxu0 0
    %1721 = vmatpush1.bf16.xpose.msra.mxu0 0
    %1722 = vmatprep.subr.bf16.mxu0 0
    %1723 = vmatpush1.bf16.xpose.msra.mxu0 0
    %1724 = vmatprep.subr.bf16.mxu0 0
    %1725 = vmatpush1.bf16.xpose.msra.mxu0 0
    %1726 = vmatprep.subr.bf16.mxu0 0
    %1727 = vmatpush1.bf16.xpose.msra.mxu0 0
    %1728 = vmatprep.subr.bf16.mxu0 0
    %1729 = vmatpush1.bf16.xpose.msra.mxu0 0
    %1730 = vmatprep.subr.bf16.mxu0 0
    %1731 = vmatpush1.bf16.xpose.msra.mxu0 0
    %1732 = vmatprep.subr.bf16.mxu0 0
    %1733 = vmatpush1.bf16.xpose.msra.mxu0 0
    %1734 = vmatprep.subr.bf16.mxu0 0
    %1735 = vmatpush1.bf16.xpose.msra.mxu0 0
    %1736 = vmatprep.subr.bf16.mxu0 0
    %1737 = vmatpush1.bf16.xpose.msra.mxu0 0
    %1738 = vmatprep.subr.bf16.mxu0 0
    %1739 = vmatpush1.bf16.xpose.msra.mxu0 0
    %1740 = vmatprep.mubr.bf16.mxu0 0
    %1741 = vmatmul.mubr.bf16.gmra.mrb[0].mxu0 %v1703
    %v1742 = vpop.f32.mrb[0].mxu0
    %v1743 = vadd.f32 %v298, %v1742
    %v1744 = vpop.f32.mrb[0].mxu0
    %v1745 = vpop.f32.mrb[0].mxu0
    %v1746 = vpop.f32.mrb[0].mxu0
    %1747 = vdwg.mxu0
    %1749 = vrot.lane.b32.xlu0 %v1692, 96
    %v1750 = vpop.permute.xlu0 %1749
    %v1752 = vsel %vm338, %v1684, 0
    %v1755 = vsel %vm338, %v1750, 0
    %1757 = vmatprep.subr.bf16.mxu0 0
    %1758 = vmatpush1.bf16.xpose.msra.mxu0 %v1755
    %1759 = vmatprep.subr.bf16.mxu0 0
    %1760 = vmatpush1.bf16.xpose.msra.mxu0 0
    %1761 = vmatprep.subr.bf16.mxu0 0
    %1762 = vmatpush1.bf16.xpose.msra.mxu0 0
    %1763 = vmatprep.subr.bf16.mxu0 0
    %1764 = vmatpush1.bf16.xpose.msra.mxu0 0
    %1765 = vmatprep.subr.bf16.mxu0 0
    %1766 = vmatpush1.bf16.xpose.msra.mxu0 0
    %1767 = vmatprep.subr.bf16.mxu0 0
    %1768 = vmatpush1.bf16.xpose.msra.mxu0 0
    %1769 = vmatprep.subr.bf16.mxu0 0
    %1770 = vmatpush1.bf16.xpose.msra.mxu0 0
    %1771 = vmatprep.subr.bf16.mxu0 0
    %1772 = vmatpush1.bf16.xpose.msra.mxu0 0
    %1773 = vmatprep.subr.bf16.mxu0 0
    %1774 = vmatpush1.bf16.xpose.msra.mxu0 0
    %1775 = vmatprep.subr.bf16.mxu0 0
    %1776 = vmatpush1.bf16.xpose.msra.mxu0 0
    %1777 = vmatprep.subr.bf16.mxu0 0
    %1778 = vmatpush1.bf16.xpose.msra.mxu0 0
    %1779 = vmatprep.subr.bf16.mxu0 0
    %1780 = vmatpush1.bf16.xpose.msra.mxu0 0
    %1781 = vmatprep.subr.bf16.mxu0 0
    %1782 = vmatpush1.bf16.xpose.msra.mxu0 0
    %1783 = vmatprep.subr.bf16.mxu0 0
    %1784 = vmatpush1.bf16.xpose.msra.mxu0 0
    %1785 = vmatprep.subr.bf16.mxu0 0
    %1786 = vmatpush1.bf16.xpose.msra.mxu0 0
    %1787 = vmatprep.subr.bf16.mxu0 0
    %1788 = vmatpush1.bf16.xpose.msra.mxu0 0
    %1789 = vmatprep.mubr.bf16.mxu0 0
    %1790 = vmatmul.mubr.bf16.gmra.mrb[0].mxu0 %v1752
    %v1791 = vpop.f32.mrb[0].mxu0
    %v1792 = vadd.f32 %v302, %v1791
    %v1793 = vpop.f32.mrb[0].mxu0
    %v1794 = vpop.f32.mrb[0].mxu0
    %v1795 = vpop.f32.mrb[0].mxu0
    %1796 = vdwg.mxu0
    %1798 = vrot.lane.b32.xlu0 %v1693, 96
    %v1799 = vpop.permute.xlu0 %1798
    %v1801 = vsel %vm338, %v1685, 0
    %v1804 = vsel %vm338, %v1799, 0
    %1806 = vmatprep.subr.bf16.mxu0 0
    %1807 = vmatpush1.bf16.xpose.msra.mxu0 %v1804
    %1808 = vmatprep.subr.bf16.mxu0 0
    %1809 = vmatpush1.bf16.xpose.msra.mxu0 0
    %1810 = vmatprep.subr.bf16.mxu0 0
    %1811 = vmatpush1.bf16.xpose.msra.mxu0 0
    %1812 = vmatprep.subr.bf16.mxu0 0
    %1813 = vmatpush1.bf16.xpose.msra.mxu0 0
    %1814 = vmatprep.subr.bf16.mxu0 0
    %1815 = vmatpush1.bf16.xpose.msra.mxu0 0
    %1816 = vmatprep.subr.bf16.mxu0 0
    %1817 = vmatpush1.bf16.xpose.msra.mxu0 0
    %1818 = vmatprep.subr.bf16.mxu0 0
    %1819 = vmatpush1.bf16.xpose.msra.mxu0 0
    %1820 = vmatprep.subr.bf16.mxu0 0
    %1821 = vmatpush1.bf16.xpose.msra.mxu0 0
    %1822 = vmatprep.subr.bf16.mxu0 0
    %1823 = vmatpush1.bf16.xpose.msra.mxu0 0
    %1824 = vmatprep.subr.bf16.mxu0 0
    %1825 = vmatpush1.bf16.xpose.msra.mxu0 0
    %1826 = vmatprep.subr.bf16.mxu0 0
    %1827 = vmatpush1.bf16.xpose.msra.mxu0 0
    %1828 = vmatprep.subr.bf16.mxu0 0
    %1829 = vmatpush1.bf16.xpose.msra.mxu0 0
    %1830 = vmatprep.subr.bf16.mxu0 0
    %1831 = vmatpush1.bf16.xpose.msra.mxu0 0
    %1832 = vmatprep.subr.bf16.mxu0 0
    %1833 = vmatpush1.bf16.xpose.msra.mxu0 0
    %1834 = vmatprep.subr.bf16.mxu0 0
    %1835 = vmatpush1.bf16.xpose.msra.mxu0 0
    %1836 = vmatprep.subr.bf16.mxu0 0
    %1837 = vmatpush1.bf16.xpose.msra.mxu0 0
    %1838 = vmatprep.mubr.bf16.mxu0 0
    %1839 = vmatmul.mubr.bf16.gmra.mrb[0].mxu0 %v1801
    %v1840 = vpop.f32.mrb[0].mxu0
    %v1841 = vadd.f32 %v306, %v1840
    %v1842 = vpop.f32.mrb[0].mxu0
    %v1843 = vpop.f32.mrb[0].mxu0
    %v1844 = vpop.f32.mrb[0].mxu0
    %1845 = vdwg.mxu0
    %1847 = vrot.lane.b32.xlu0 %v1694, 96
    %v1848 = vpop.permute.xlu0 %1847
    %v1850 = vsel %vm338, %v1686, 0
    %v1853 = vsel %vm338, %v1848, 0
    %1855 = vmatprep.subr.bf16.mxu0 0
    %1856 = vmatpush1.bf16.xpose.msra.mxu0 %v1853
    %1857 = vmatprep.subr.bf16.mxu0 0
    %1858 = vmatpush1.bf16.xpose.msra.mxu0 0
    %1859 = vmatprep.subr.bf16.mxu0 0
    %1860 = vmatpush1.bf16.xpose.msra.mxu0 0
    %1861 = vmatprep.subr.bf16.mxu0 0
    %1862 = vmatpush1.bf16.xpose.msra.mxu0 0
    %1863 = vmatprep.subr.bf16.mxu0 0
    %1864 = vmatpush1.bf16.xpose.msra.mxu0 0
    %1865 = vmatprep.subr.bf16.mxu0 0
    %1866 = vmatpush1.bf16.xpose.msra.mxu0 0
    %1867 = vmatprep.subr.bf16.mxu0 0
    %1868 = vmatpush1.bf16.xpose.msra.mxu0 0
    %1869 = vmatprep.subr.bf16.mxu0 0
    %1870 = vmatpush1.bf16.xpose.msra.mxu0 0
    %1871 = vmatprep.subr.bf16.mxu0 0
    %1872 = vmatpush1.bf16.xpose.msra.mxu0 0
    %1873 = vmatprep.subr.bf16.mxu0 0
    %1874 = vmatpush1.bf16.xpose.msra.mxu0 0
    %1875 = vmatprep.subr.bf16.mxu0 0
    %1876 = vmatpush1.bf16.xpose.msra.mxu0 0
    %1877 = vmatprep.subr.bf16.mxu0 0
    %1878 = vmatpush1.bf16.xpose.msra.mxu0 0
    %1879 = vmatprep.subr.bf16.mxu0 0
    %1880 = vmatpush1.bf16.xpose.msra.mxu0 0
    %1881 = vmatprep.subr.bf16.mxu0 0
    %1882 = vmatpush1.bf16.xpose.msra.mxu0 0
    %1883 = vmatprep.subr.bf16.mxu0 0
    %1884 = vmatpush1.bf16.xpose.msra.mxu0 0
    %1885 = vmatprep.subr.bf16.mxu0 0
    %1886 = vmatpush1.bf16.xpose.msra.mxu0 0
    %1887 = vmatprep.mubr.bf16.mxu0 0
    %1888 = vmatmul.mubr.bf16.gmra.mrb[0].mxu0 %v1850
    %v1889 = vpop.f32.mrb[0].mxu0
    %v1890 = vadd.f32 %v310, %v1889
    %v1891 = vpop.f32.mrb[0].mxu0
    %v1892 = vpop.f32.mrb[0].mxu0
    %v1893 = vpop.f32.mrb[0].mxu0
    %1894 = vdwg.mxu0
    %1896 = vrot.lane.b32.xlu0 %v1695, 96
    %v1897 = vpop.permute.xlu0 %1896
    %v1899 = vsel %vm338, %v1687, 0
    %v1902 = vsel %vm338, %v1897, 0
    %1904 = vmatprep.subr.bf16.mxu0 0
    %1905 = vmatpush1.bf16.xpose.msra.mxu0 %v1902
    %1906 = vmatprep.subr.bf16.mxu0 0
    %1907 = vmatpush1.bf16.xpose.msra.mxu0 0
    %1908 = vmatprep.subr.bf16.mxu0 0
    %1909 = vmatpush1.bf16.xpose.msra.mxu0 0
    %1910 = vmatprep.subr.bf16.mxu0 0
    %1911 = vmatpush1.bf16.xpose.msra.mxu0 0
    %1912 = vmatprep.subr.bf16.mxu0 0
    %1913 = vmatpush1.bf16.xpose.msra.mxu0 0
    %1914 = vmatprep.subr.bf16.mxu0 0
    %1915 = vmatpush1.bf16.xpose.msra.mxu0 0
    %1916 = vmatprep.subr.bf16.mxu0 0
    %1917 = vmatpush1.bf16.xpose.msra.mxu0 0
    %1918 = vmatprep.subr.bf16.mxu0 0
    %1919 = vmatpush1.bf16.xpose.msra.mxu0 0
    %1920 = vmatprep.subr.bf16.mxu0 0
    %1921 = vmatpush1.bf16.xpose.msra.mxu0 0
    %1922 = vmatprep.subr.bf16.mxu0 0
    %1923 = vmatpush1.bf16.xpose.msra.mxu0 0
    %1924 = vmatprep.subr.bf16.mxu0 0
    %1925 = vmatpush1.bf16.xpose.msra.mxu0 0
    %1926 = vmatprep.subr.bf16.mxu0 0
    %1927 = vmatpush1.bf16.xpose.msra.mxu0 0
    %1928 = vmatprep.subr.bf16.mxu0 0
    %1929 = vmatpush1.bf16.xpose.msra.mxu0 0
    %1930 = vmatprep.subr.bf16.mxu0 0
    %1931 = vmatpush1.bf16.xpose.msra.mxu0 0
    %1932 = vmatprep.subr.bf16.mxu0 0
    %1933 = vmatpush1.bf16.xpose.msra.mxu0 0
    %1934 = vmatprep.subr.bf16.mxu0 0
    %1935 = vmatpush1.bf16.xpose.msra.mxu0 0
    %1936 = vmatprep.mubr.bf16.mxu0 0
    %1937 = vmatmul.mubr.bf16.gmra.mrb[0].mxu0 %v1899
    %v1938 = vpop.f32.mrb[0].mxu0
    %v1939 = vadd.f32 %v314, %v1938
    %v1940 = vpop.f32.mrb[0].mxu0
    %v1941 = vpop.f32.mrb[0].mxu0
    %v1942 = vpop.f32.mrb[0].mxu0
    %1943 = vdwg.mxu0
    %1945 = vrot.lane.b32.xlu0 %v1696, 96
    %v1946 = vpop.permute.xlu0 %1945
    %v1948 = vsel %vm338, %v1688, 0
    %v1951 = vsel %vm338, %v1946, 0
    %1953 = vmatprep.subr.bf16.mxu0 0
    %1954 = vmatpush1.bf16.xpose.msra.mxu0 %v1951
    %1955 = vmatprep.subr.bf16.mxu0 0
    %1956 = vmatpush1.bf16.xpose.msra.mxu0 0
    %1957 = vmatprep.subr.bf16.mxu0 0
    %1958 = vmatpush1.bf16.xpose.msra.mxu0 0
    %1959 = vmatprep.subr.bf16.mxu0 0
    %1960 = vmatpush1.bf16.xpose.msra.mxu0 0
    %1961 = vmatprep.subr.bf16.mxu0 0
    %1962 = vmatpush1.bf16.xpose.msra.mxu0 0
    %1963 = vmatprep.subr.bf16.mxu0 0
    %1964 = vmatpush1.bf16.xpose.msra.mxu0 0
    %1965 = vmatprep.subr.bf16.mxu0 0
    %1966 = vmatpush1.bf16.xpose.msra.mxu0 0
    %1967 = vmatprep.subr.bf16.mxu0 0
    %1968 = vmatpush1.bf16.xpose.msra.mxu0 0
    %1969 = vmatprep.subr.bf16.mxu0 0
    %1970 = vmatpush1.bf16.xpose.msra.mxu0 0
    %1971 = vmatprep.subr.bf16.mxu0 0
    %1972 = vmatpush1.bf16.xpose.msra.mxu0 0
    %1973 = vmatprep.subr.bf16.mxu0 0
    %1974 = vmatpush1.bf16.xpose.msra.mxu0 0
    %1975 = vmatprep.subr.bf16.mxu0 0
    %1976 = vmatpush1.bf16.xpose.msra.mxu0 0
    %1977 = vmatprep.subr.bf16.mxu0 0
    %1978 = vmatpush1.bf16.xpose.msra.mxu0 0
    %1979 = vmatprep.subr.bf16.mxu0 0
    %1980 = vmatpush1.bf16.xpose.msra.mxu0 0
    %1981 = vmatprep.subr.bf16.mxu0 0
    %1982 = vmatpush1.bf16.xpose.msra.mxu0 0
    %1983 = vmatprep.subr.bf16.mxu0 0
    %1984 = vmatpush1.bf16.xpose.msra.mxu0 0
    %1985 = vmatprep.mubr.bf16.mxu0 0
    %1986 = vmatmul.mubr.bf16.gmra.mrb[0].mxu0 %v1948
    %v1987 = vpop.f32.mrb[0].mxu0
    %v1988 = vadd.f32 %v318, %v1987
    %v1989 = vpop.f32.mrb[0].mxu0
    %v1990 = vpop.f32.mrb[0].mxu0
    %v1991 = vpop.f32.mrb[0].mxu0
    %1992 = vdwg.mxu0
    %1994 = vrot.lane.b32.xlu0 %v1697, 96
    %v1995 = vpop.permute.xlu0 %1994
    %v1997 = vsel %vm338, %v1689, 0
    %v2000 = vsel %vm338, %v1995, 0
    %2002 = vmatprep.subr.bf16.mxu0 0
    %2003 = vmatpush1.bf16.xpose.msra.mxu0 %v2000
    %2004 = vmatprep.subr.bf16.mxu0 0
    %2005 = vmatpush1.bf16.xpose.msra.mxu0 0
    %2006 = vmatprep.subr.bf16.mxu0 0
    %2007 = vmatpush1.bf16.xpose.msra.mxu0 0
    %2008 = vmatprep.subr.bf16.mxu0 0
    %2009 = vmatpush1.bf16.xpose.msra.mxu0 0
    %2010 = vmatprep.subr.bf16.mxu0 0
    %2011 = vmatpush1.bf16.xpose.msra.mxu0 0
    %2012 = vmatprep.subr.bf16.mxu0 0
    %2013 = vmatpush1.bf16.xpose.msra.mxu0 0
    %2014 = vmatprep.subr.bf16.mxu0 0
    %2015 = vmatpush1.bf16.xpose.msra.mxu0 0
    %2016 = vmatprep.subr.bf16.mxu0 0
    %2017 = vmatpush1.bf16.xpose.msra.mxu0 0
    %2018 = vmatprep.subr.bf16.mxu0 0
    %2019 = vmatpush1.bf16.xpose.msra.mxu0 0
    %2020 = vmatprep.subr.bf16.mxu0 0
    %2021 = vmatpush1.bf16.xpose.msra.mxu0 0
    %2022 = vmatprep.subr.bf16.mxu0 0
    %2023 = vmatpush1.bf16.xpose.msra.mxu0 0
    %2024 = vmatprep.subr.bf16.mxu0 0
    %2025 = vmatpush1.bf16.xpose.msra.mxu0 0
    %2026 = vmatprep.subr.bf16.mxu0 0
    %2027 = vmatpush1.bf16.xpose.msra.mxu0 0
    %2028 = vmatprep.subr.bf16.mxu0 0
    %2029 = vmatpush1.bf16.xpose.msra.mxu0 0
    %2030 = vmatprep.subr.bf16.mxu0 0
    %2031 = vmatpush1.bf16.xpose.msra.mxu0 0
    %2032 = vmatprep.subr.bf16.mxu0 0
    %2033 = vmatpush1.bf16.xpose.msra.mxu0 0
    %2034 = vmatprep.mubr.bf16.mxu0 0
    %2035 = vmatmul.mubr.bf16.gmra.mrb[0].mxu0 %v1997
    %v2036 = vpop.f32.mrb[0].mxu0
    %v2037 = vadd.f32 %v322, %v2036
    %v2038 = vpop.f32.mrb[0].mxu0
    %v2039 = vpop.f32.mrb[0].mxu0
    %v2040 = vpop.f32.mrb[0].mxu0
    %2041 = vdwg.mxu0
    %2043 = vrot.lane.b32.xlu0 %v1698, 96
    %v2044 = vpop.permute.xlu0 %2043
    %v2046 = vsel %vm338, %v1690, 0
    %v2049 = vsel %vm338, %v2044, 0
    %2051 = vmatprep.subr.bf16.mxu0 0
    %2052 = vmatpush1.bf16.xpose.msra.mxu0 %v2049
    %2053 = vmatprep.subr.bf16.mxu0 0
    %2054 = vmatpush1.bf16.xpose.msra.mxu0 0
    %2055 = vmatprep.subr.bf16.mxu0 0
    %2056 = vmatpush1.bf16.xpose.msra.mxu0 0
    %2057 = vmatprep.subr.bf16.mxu0 0
    %2058 = vmatpush1.bf16.xpose.msra.mxu0 0
    %2059 = vmatprep.subr.bf16.mxu0 0
    %2060 = vmatpush1.bf16.xpose.msra.mxu0 0
    %2061 = vmatprep.subr.bf16.mxu0 0
    %2062 = vmatpush1.bf16.xpose.msra.mxu0 0
    %2063 = vmatprep.subr.bf16.mxu0 0
    %2064 = vmatpush1.bf16.xpose.msra.mxu0 0
    %2065 = vmatprep.subr.bf16.mxu0 0
    %2066 = vmatpush1.bf16.xpose.msra.mxu0 0
    %2067 = vmatprep.subr.bf16.mxu0 0
    %2068 = vmatpush1.bf16.xpose.msra.mxu0 0
    %2069 = vmatprep.subr.bf16.mxu0 0
    %2070 = vmatpush1.bf16.xpose.msra.mxu0 0
    %2071 = vmatprep.subr.bf16.mxu0 0
    %2072 = vmatpush1.bf16.xpose.msra.mxu0 0
    %2073 = vmatprep.subr.bf16.mxu0 0
    %2074 = vmatpush1.bf16.xpose.msra.mxu0 0
    %2075 = vmatprep.subr.bf16.mxu0 0
    %2076 = vmatpush1.bf16.xpose.msra.mxu0 0
    %2077 = vmatprep.subr.bf16.mxu0 0
    %2078 = vmatpush1.bf16.xpose.msra.mxu0 0
    %2079 = vmatprep.subr.bf16.mxu0 0
    %2080 = vmatpush1.bf16.xpose.msra.mxu0 0
    %2081 = vmatprep.subr.bf16.mxu0 0
    %2082 = vmatpush1.bf16.xpose.msra.mxu0 0
    %2083 = vmatprep.mubr.bf16.mxu0 0
    %2084 = vmatmul.mubr.bf16.gmra.mrb[0].mxu0 %v2046
    %v2085 = vpop.f32.mrb[0].mxu0
    %v2086 = vadd.f32 %v326, %v2085
    %v2087 = vpop.f32.mrb[0].mxu0
    %v2088 = vpop.f32.mrb[0].mxu0
    %v2089 = vpop.f32.mrb[0].mxu0
    %2090 = vdwg.mxu0
    %v2091 = vsel %vm338, %v1743, -inf
    %2092 = vmax.xlane.f32.xlu0 %v2091
    %v2093 = vpop.xlane.xlu0 %2092
    %v2094 = vsel %vm338, %v1792, -inf
    %2095 = vmax.xlane.f32.xlu0 %v2094
    %v2096 = vpop.xlane.xlu0 %2095
    %v2097 = vsel %vm338, %v1841, -inf
    %2098 = vmax.xlane.f32.xlu0 %v2097
    %v2099 = vpop.xlane.xlu0 %2098
    %v2100 = vsel %vm338, %v1890, -inf
    %2101 = vmax.xlane.f32.xlu0 %v2100
    %v2102 = vpop.xlane.xlu0 %2101
    %v2103 = vsel %vm338, %v1939, -inf
    %2104 = vmax.xlane.f32.xlu0 %v2103
    %v2105 = vpop.xlane.xlu0 %2104
    %v2106 = vsel %vm338, %v1988, -inf
    %2107 = vmax.xlane.f32.xlu0 %v2106
    %v2108 = vpop.xlane.xlu0 %2107
    %v2109 = vsel %vm338, %v2037, -inf
    %2110 = vmax.xlane.f32.xlu0 %v2109
    %v2111 = vpop.xlane.xlu0 %2110
    %v2112 = vsel %vm338, %v2086, -inf
    %2113 = vmax.xlane.f32.xlu0 %v2112
    %v2114 = vpop.xlane.xlu0 %2113
    %v2115 = vsub.f32 %v1743, %v2093
    %v2116 = vsub.f32 %v1792, %v2096
    %v2117 = vsub.f32 %v1841, %v2099
    %v2118 = vsub.f32 %v1890, %v2102
    %v2119 = vsub.f32 %v1939, %v2105
    %v2120 = vsub.f32 %v1988, %v2108
    %v2121 = vsub.f32 %v2037, %v2111
    %v2122 = vsub.f32 %v2086, %v2114
    %v2123 = vmul.f32 %v2115, 1.442695
    %v2124 = vpow.pop %v2123
    %v2125 = vmul.f32 %v2116, 1.442695
    %v2126 = vpow.pop %v2125
    %v2127 = vmul.f32 %v2117, 1.442695
    %v2128 = vpow.pop %v2127
    %v2129 = vmul.f32 %v2118, 1.442695
    %v2130 = vpow.pop %v2129
    %v2131 = vmul.f32 %v2119, 1.442695
    %v2132 = vpow.pop %v2131
    %v2133 = vmul.f32 %v2120, 1.442695
    %v2134 = vpow.pop %v2133
    %v2135 = vmul.f32 %v2121, 1.442695
    %v2136 = vpow.pop %v2135
    %v2137 = vmul.f32 %v2122, 1.442695
    %v2138 = vpow.pop %v2137
    %v2139 = vsel %vm338, %v2124, 0.0
    %2140 = vadd.xlane.f32.xlu0 %v2139
    %v2141 = vpop.xlane.xlu0 %2140
    %v2142 = vsel %vm338, %v2126, 0.0
    %2143 = vadd.xlane.f32.xlu0 %v2142
    %v2144 = vpop.xlane.xlu0 %2143
    %v2145 = vsel %vm338, %v2128, 0.0
    %2146 = vadd.xlane.f32.xlu0 %v2145
    %v2147 = vpop.xlane.xlu0 %2146
    %v2148 = vsel %vm338, %v2130, 0.0
    %2149 = vadd.xlane.f32.xlu0 %v2148
    %v2150 = vpop.xlane.xlu0 %2149
    %v2151 = vsel %vm338, %v2132, 0.0
    %2152 = vadd.xlane.f32.xlu0 %v2151
    %v2153 = vpop.xlane.xlu0 %2152
    %v2154 = vsel %vm338, %v2134, 0.0
    %2155 = vadd.xlane.f32.xlu0 %v2154
    %v2156 = vpop.xlane.xlu0 %2155
    %v2157 = vsel %vm338, %v2136, 0.0
    %2158 = vadd.xlane.f32.xlu0 %v2157
    %v2159 = vpop.xlane.xlu0 %2158
    %v2160 = vsel %vm338, %v2138, 0.0
    %2161 = vadd.xlane.f32.xlu0 %v2160
    %v2162 = vpop.xlane.xlu0 %2161
    %v2163 = vrcp.pop %v2141
    %v2164 = vrcp.pop %v2144
    %v2165 = vrcp.pop %v2147
    %v2166 = vrcp.pop %v2150
    %v2167 = vrcp.pop %v2153
    %v2168 = vrcp.pop %v2156
    %v2169 = vrcp.pop %v2159
    %v2170 = vrcp.pop %v2162
    %v2171 = vmul.f32 %v2124, %v2163
    %v2172 = vmul.f32 %v2126, %v2164
    %v2173 = vmul.f32 %v2128, %v2165
    %v2174 = vmul.f32 %v2130, %v2166
    %v2175 = vmul.f32 %v2132, %v2167
    %v2176 = vmul.f32 %v2134, %v2168
    %v2177 = vmul.f32 %v2136, %v2169
    %v2178 = vmul.f32 %v2138, %v2170
    %v2179 = vpack.c.bf16 %v2171, %v2171
    %v2180 = vpack.c.bf16 %v2172, %v2172
    %v2181 = vpack.c.bf16 %v2173, %v2173
    %v2182 = vpack.c.bf16 %v2174, %v2174
    %v2183 = vpack.c.bf16 %v2175, %v2175
    %v2184 = vpack.c.bf16 %v2176, %v2176
    %v2185 = vpack.c.bf16 %v2177, %v2177
    %v2186 = vpack.c.bf16 %v2178, %v2178
    %2187 = vrot.lane.b32.xlu0 %v1691, 64
    %v2188 = vpop.permute.xlu0 %2187
    %v2190 = vsel %vm338, %v2179, 0
    %v2193 = vsel %vm115, %v2188, 0
    %2195 = vmatprep.subr.bf16.mxu0 0
    %2196 = vmatpush1.bf16.msra.mxu0 %v2193
    %2197 = vmatprep.subr.bf16.mxu0 0
    %2198 = vmatpush1.bf16.msra.mxu0 0
    %2199 = vmatprep.subr.bf16.mxu0 0
    %2200 = vmatpush1.bf16.msra.mxu0 0
    %2201 = vmatprep.subr.bf16.mxu0 0
    %2202 = vmatpush1.bf16.msra.mxu0 0
    %2203 = vmatprep.subr.bf16.mxu0 0
    %2204 = vmatpush1.bf16.msra.mxu0 0
    %2205 = vmatprep.subr.bf16.mxu0 0
    %2206 = vmatpush1.bf16.msra.mxu0 0
    %2207 = vmatprep.subr.bf16.mxu0 0
    %2208 = vmatpush1.bf16.msra.mxu0 0
    %2209 = vmatprep.subr.bf16.mxu0 0
    %2210 = vmatpush1.bf16.msra.mxu0 0
    %2211 = vmatprep.subr.bf16.mxu0 0
    %2212 = vmatpush1.bf16.msra.mxu0 0
    %2213 = vmatprep.subr.bf16.mxu0 0
    %2214 = vmatpush1.bf16.msra.mxu0 0
    %2215 = vmatprep.subr.bf16.mxu0 0
    %2216 = vmatpush1.bf16.msra.mxu0 0
    %2217 = vmatprep.subr.bf16.mxu0 0
    %2218 = vmatpush1.bf16.msra.mxu0 0
    %2219 = vmatprep.subr.bf16.mxu0 0
    %2220 = vmatpush1.bf16.msra.mxu0 0
    %2221 = vmatprep.subr.bf16.mxu0 0
    %2222 = vmatpush1.bf16.msra.mxu0 0
    %2223 = vmatprep.subr.bf16.mxu0 0
    %2224 = vmatpush1.bf16.msra.mxu0 0
    %2225 = vmatprep.subr.bf16.mxu0 0
    %2226 = vmatpush1.bf16.msra.mxu0 0
    %2227 = vmatprep.mubr.bf16.mxu0 0
    %2228 = vmatmul.mubr.bf16.gmra.mrb[0].mxu0 %v2190
    %v2229 = vpop.f32.mrb[0].mxu0
    %v2230 = vadd.f32 0.0, %v2229
    %v2231 = vpop.f32.mrb[0].mxu0
    %v2232 = vpop.f32.mrb[0].mxu0
    %v2233 = vpop.f32.mrb[0].mxu0
    %2234 = vdwg.mxu0
    %2235 = vrot.lane.b32.xlu0 %v1692, 64
    %v2236 = vpop.permute.xlu0 %2235
    %v2238 = vsel %vm338, %v2180, 0
    %v2241 = vsel %vm115, %v2236, 0
    %2243 = vmatprep.subr.bf16.mxu0 0
    %2244 = vmatpush1.bf16.msra.mxu0 %v2241
    %2245 = vmatprep.subr.bf16.mxu0 0
    %2246 = vmatpush1.bf16.msra.mxu0 0
    %2247 = vmatprep.subr.bf16.mxu0 0
    %2248 = vmatpush1.bf16.msra.mxu0 0
    %2249 = vmatprep.subr.bf16.mxu0 0
    %2250 = vmatpush1.bf16.msra.mxu0 0
    %2251 = vmatprep.subr.bf16.mxu0 0
    %2252 = vmatpush1.bf16.msra.mxu0 0
    %2253 = vmatprep.subr.bf16.mxu0 0
    %2254 = vmatpush1.bf16.msra.mxu0 0
    %2255 = vmatprep.subr.bf16.mxu0 0
    %2256 = vmatpush1.bf16.msra.mxu0 0
    %2257 = vmatprep.subr.bf16.mxu0 0
    %2258 = vmatpush1.bf16.msra.mxu0 0
    %2259 = vmatprep.subr.bf16.mxu0 0
    %2260 = vmatpush1.bf16.msra.mxu0 0
    %2261 = vmatprep.subr.bf16.mxu0 0
    %2262 = vmatpush1.bf16.msra.mxu0 0
    %2263 = vmatprep.subr.bf16.mxu0 0
    %2264 = vmatpush1.bf16.msra.mxu0 0
    %2265 = vmatprep.subr.bf16.mxu0 0
    %2266 = vmatpush1.bf16.msra.mxu0 0
    %2267 = vmatprep.subr.bf16.mxu0 0
    %2268 = vmatpush1.bf16.msra.mxu0 0
    %2269 = vmatprep.subr.bf16.mxu0 0
    %2270 = vmatpush1.bf16.msra.mxu0 0
    %2271 = vmatprep.subr.bf16.mxu0 0
    %2272 = vmatpush1.bf16.msra.mxu0 0
    %2273 = vmatprep.subr.bf16.mxu0 0
    %2274 = vmatpush1.bf16.msra.mxu0 0
    %2275 = vmatprep.mubr.bf16.mxu0 0
    %2276 = vmatmul.mubr.bf16.gmra.mrb[0].mxu0 %v2238
    %v2277 = vpop.f32.mrb[0].mxu0
    %v2278 = vadd.f32 0.0, %v2277
    %v2279 = vpop.f32.mrb[0].mxu0
    %v2280 = vpop.f32.mrb[0].mxu0
    %v2281 = vpop.f32.mrb[0].mxu0
    %2282 = vdwg.mxu0
    %2283 = vrot.lane.b32.xlu0 %v1693, 64
    %v2284 = vpop.permute.xlu0 %2283
    %v2286 = vsel %vm338, %v2181, 0
    %v2289 = vsel %vm115, %v2284, 0
    %2291 = vmatprep.subr.bf16.mxu0 0
    %2292 = vmatpush1.bf16.msra.mxu0 %v2289
    %2293 = vmatprep.subr.bf16.mxu0 0
    %2294 = vmatpush1.bf16.msra.mxu0 0
    %2295 = vmatprep.subr.bf16.mxu0 0
    %2296 = vmatpush1.bf16.msra.mxu0 0
    %2297 = vmatprep.subr.bf16.mxu0 0
    %2298 = vmatpush1.bf16.msra.mxu0 0
    %2299 = vmatprep.subr.bf16.mxu0 0
    %2300 = vmatpush1.bf16.msra.mxu0 0
    %2301 = vmatprep.subr.bf16.mxu0 0
    %2302 = vmatpush1.bf16.msra.mxu0 0
    %2303 = vmatprep.subr.bf16.mxu0 0
    %2304 = vmatpush1.bf16.msra.mxu0 0
    %2305 = vmatprep.subr.bf16.mxu0 0
    %2306 = vmatpush1.bf16.msra.mxu0 0
    %2307 = vmatprep.subr.bf16.mxu0 0
    %2308 = vmatpush1.bf16.msra.mxu0 0
    %2309 = vmatprep.subr.bf16.mxu0 0
    %2310 = vmatpush1.bf16.msra.mxu0 0
    %2311 = vmatprep.subr.bf16.mxu0 0
    %2312 = vmatpush1.bf16.msra.mxu0 0
    %2313 = vmatprep.subr.bf16.mxu0 0
    %2314 = vmatpush1.bf16.msra.mxu0 0
    %2315 = vmatprep.subr.bf16.mxu0 0
    %2316 = vmatpush1.bf16.msra.mxu0 0
    %2317 = vmatprep.subr.bf16.mxu0 0
    %2318 = vmatpush1.bf16.msra.mxu0 0
    %2319 = vmatprep.subr.bf16.mxu0 0
    %2320 = vmatpush1.bf16.msra.mxu0 0
    %2321 = vmatprep.subr.bf16.mxu0 0
    %2322 = vmatpush1.bf16.msra.mxu0 0
    %2323 = vmatprep.mubr.bf16.mxu0 0
    %2324 = vmatmul.mubr.bf16.gmra.mrb[0].mxu0 %v2286
    %v2325 = vpop.f32.mrb[0].mxu0
    %v2326 = vadd.f32 0.0, %v2325
    %v2327 = vpop.f32.mrb[0].mxu0
    %v2328 = vpop.f32.mrb[0].mxu0
    %v2329 = vpop.f32.mrb[0].mxu0
    %2330 = vdwg.mxu0
    %2331 = vrot.lane.b32.xlu0 %v1694, 64
    %v2332 = vpop.permute.xlu0 %2331
    %v2334 = vsel %vm338, %v2182, 0
    %v2337 = vsel %vm115, %v2332, 0
    %2339 = vmatprep.subr.bf16.mxu0 0
    %2340 = vmatpush1.bf16.msra.mxu0 %v2337
    %2341 = vmatprep.subr.bf16.mxu0 0
    %2342 = vmatpush1.bf16.msra.mxu0 0
    %2343 = vmatprep.subr.bf16.mxu0 0
    %2344 = vmatpush1.bf16.msra.mxu0 0
    %2345 = vmatprep.subr.bf16.mxu0 0
    %2346 = vmatpush1.bf16.msra.mxu0 0
    %2347 = vmatprep.subr.bf16.mxu0 0
    %2348 = vmatpush1.bf16.msra.mxu0 0
    %2349 = vmatprep.subr.bf16.mxu0 0
    %2350 = vmatpush1.bf16.msra.mxu0 0
    %2351 = vmatprep.subr.bf16.mxu0 0
    %2352 = vmatpush1.bf16.msra.mxu0 0
    %2353 = vmatprep.subr.bf16.mxu0 0
    %2354 = vmatpush1.bf16.msra.mxu0 0
    %2355 = vmatprep.subr.bf16.mxu0 0
    %2356 = vmatpush1.bf16.msra.mxu0 0
    %2357 = vmatprep.subr.bf16.mxu0 0
    %2358 = vmatpush1.bf16.msra.mxu0 0
    %2359 = vmatprep.subr.bf16.mxu0 0
    %2360 = vmatpush1.bf16.msra.mxu0 0
    %2361 = vmatprep.subr.bf16.mxu0 0
    %2362 = vmatpush1.bf16.msra.mxu0 0
    %2363 = vmatprep.subr.bf16.mxu0 0
    %2364 = vmatpush1.bf16.msra.mxu0 0
    %2365 = vmatprep.subr.bf16.mxu0 0
    %2366 = vmatpush1.bf16.msra.mxu0 0
    %2367 = vmatprep.subr.bf16.mxu0 0
    %2368 = vmatpush1.bf16.msra.mxu0 0
    %2369 = vmatprep.subr.bf16.mxu0 0
    %2370 = vmatpush1.bf16.msra.mxu0 0
    %2371 = vmatprep.mubr.bf16.mxu0 0
    %2372 = vmatmul.mubr.bf16.gmra.mrb[0].mxu0 %v2334
    %v2373 = vpop.f32.mrb[0].mxu0
    %v2374 = vadd.f32 0.0, %v2373
    %v2375 = vpop.f32.mrb[0].mxu0
    %v2376 = vpop.f32.mrb[0].mxu0
    %v2377 = vpop.f32.mrb[0].mxu0
    %2378 = vdwg.mxu0
    %2379 = vrot.lane.b32.xlu0 %v1695, 64
    %v2380 = vpop.permute.xlu0 %2379
    %v2382 = vsel %vm338, %v2183, 0
    %v2385 = vsel %vm115, %v2380, 0
    %2387 = vmatprep.subr.bf16.mxu0 0
    %2388 = vmatpush1.bf16.msra.mxu0 %v2385
    %2389 = vmatprep.subr.bf16.mxu0 0
    %2390 = vmatpush1.bf16.msra.mxu0 0
    %2391 = vmatprep.subr.bf16.mxu0 0
    %2392 = vmatpush1.bf16.msra.mxu0 0
    %2393 = vmatprep.subr.bf16.mxu0 0
    %2394 = vmatpush1.bf16.msra.mxu0 0
    %2395 = vmatprep.subr.bf16.mxu0 0
    %2396 = vmatpush1.bf16.msra.mxu0 0
    %2397 = vmatprep.subr.bf16.mxu0 0
    %2398 = vmatpush1.bf16.msra.mxu0 0
    %2399 = vmatprep.subr.bf16.mxu0 0
    %2400 = vmatpush1.bf16.msra.mxu0 0
    %2401 = vmatprep.subr.bf16.mxu0 0
    %2402 = vmatpush1.bf16.msra.mxu0 0
    %2403 = vmatprep.subr.bf16.mxu0 0
    %2404 = vmatpush1.bf16.msra.mxu0 0
    %2405 = vmatprep.subr.bf16.mxu0 0
    %2406 = vmatpush1.bf16.msra.mxu0 0
    %2407 = vmatprep.subr.bf16.mxu0 0
    %2408 = vmatpush1.bf16.msra.mxu0 0
    %2409 = vmatprep.subr.bf16.mxu0 0
    %2410 = vmatpush1.bf16.msra.mxu0 0
    %2411 = vmatprep.subr.bf16.mxu0 0
    %2412 = vmatpush1.bf16.msra.mxu0 0
    %2413 = vmatprep.subr.bf16.mxu0 0
    %2414 = vmatpush1.bf16.msra.mxu0 0
    %2415 = vmatprep.subr.bf16.mxu0 0
    %2416 = vmatpush1.bf16.msra.mxu0 0
    %2417 = vmatprep.subr.bf16.mxu0 0
    %2418 = vmatpush1.bf16.msra.mxu0 0
    %2419 = vmatprep.mubr.bf16.mxu0 0
    %2420 = vmatmul.mubr.bf16.gmra.mrb[0].mxu0 %v2382
    %v2421 = vpop.f32.mrb[0].mxu0
    %v2422 = vadd.f32 0.0, %v2421
    %v2423 = vpop.f32.mrb[0].mxu0
    %v2424 = vpop.f32.mrb[0].mxu0
    %v2425 = vpop.f32.mrb[0].mxu0
    %2426 = vdwg.mxu0
    %2427 = vrot.lane.b32.xlu0 %v1696, 64
    %v2428 = vpop.permute.xlu0 %2427
    %v2430 = vsel %vm338, %v2184, 0
    %v2433 = vsel %vm115, %v2428, 0
    %2435 = vmatprep.subr.bf16.mxu0 0
    %2436 = vmatpush1.bf16.msra.mxu0 %v2433
    %2437 = vmatprep.subr.bf16.mxu0 0
    %2438 = vmatpush1.bf16.msra.mxu0 0
    %2439 = vmatprep.subr.bf16.mxu0 0
    %2440 = vmatpush1.bf16.msra.mxu0 0
    %2441 = vmatprep.subr.bf16.mxu0 0
    %2442 = vmatpush1.bf16.msra.mxu0 0
    %2443 = vmatprep.subr.bf16.mxu0 0
    %2444 = vmatpush1.bf16.msra.mxu0 0
    %2445 = vmatprep.subr.bf16.mxu0 0
    %2446 = vmatpush1.bf16.msra.mxu0 0
    %2447 = vmatprep.subr.bf16.mxu0 0
    %2448 = vmatpush1.bf16.msra.mxu0 0
    %2449 = vmatprep.subr.bf16.mxu0 0
    %2450 = vmatpush1.bf16.msra.mxu0 0
    %2451 = vmatprep.subr.bf16.mxu0 0
    %2452 = vmatpush1.bf16.msra.mxu0 0
    %2453 = vmatprep.subr.bf16.mxu0 0
    %2454 = vmatpush1.bf16.msra.mxu0 0
    %2455 = vmatprep.subr.bf16.mxu0 0
    %2456 = vmatpush1.bf16.msra.mxu0 0
    %2457 = vmatprep.subr.bf16.mxu0 0
    %2458 = vmatpush1.bf16.msra.mxu0 0
    %2459 = vmatprep.subr.bf16.mxu0 0
    %2460 = vmatpush1.bf16.msra.mxu0 0
    %2461 = vmatprep.subr.bf16.mxu0 0
    %2462 = vmatpush1.bf16.msra.mxu0 0
    %2463 = vmatprep.subr.bf16.mxu0 0
    %2464 = vmatpush1.bf16.msra.mxu0 0
    %2465 = vmatprep.subr.bf16.mxu0 0
    %2466 = vmatpush1.bf16.msra.mxu0 0
    %2467 = vmatprep.mubr.bf16.mxu0 0
    %2468 = vmatmul.mubr.bf16.gmra.mrb[0].mxu0 %v2430
    %v2469 = vpop.f32.mrb[0].mxu0
    %v2470 = vadd.f32 0.0, %v2469
    %v2471 = vpop.f32.mrb[0].mxu0
    %v2472 = vpop.f32.mrb[0].mxu0
    %v2473 = vpop.f32.mrb[0].mxu0
    %2474 = vdwg.mxu0
    %2475 = vrot.lane.b32.xlu0 %v1697, 64
    %v2476 = vpop.permute.xlu0 %2475
    %v2478 = vsel %vm338, %v2185, 0
    %v2481 = vsel %vm115, %v2476, 0
    %2483 = vmatprep.subr.bf16.mxu0 0
    %2484 = vmatpush1.bf16.msra.mxu0 %v2481
    %2485 = vmatprep.subr.bf16.mxu0 0
    %2486 = vmatpush1.bf16.msra.mxu0 0
    %2487 = vmatprep.subr.bf16.mxu0 0
    %2488 = vmatpush1.bf16.msra.mxu0 0
    %2489 = vmatprep.subr.bf16.mxu0 0
    %2490 = vmatpush1.bf16.msra.mxu0 0
    %2491 = vmatprep.subr.bf16.mxu0 0
    %2492 = vmatpush1.bf16.msra.mxu0 0
    %2493 = vmatprep.subr.bf16.mxu0 0
    %2494 = vmatpush1.bf16.msra.mxu0 0
    %2495 = vmatprep.subr.bf16.mxu0 0
    %2496 = vmatpush1.bf16.msra.mxu0 0
    %2497 = vmatprep.subr.bf16.mxu0 0
    %2498 = vmatpush1.bf16.msra.mxu0 0
    %2499 = vmatprep.subr.bf16.mxu0 0
    %2500 = vmatpush1.bf16.msra.mxu0 0
    %2501 = vmatprep.subr.bf16.mxu0 0
    %2502 = vmatpush1.bf16.msra.mxu0 0
    %2503 = vmatprep.subr.bf16.mxu0 0
    %2504 = vmatpush1.bf16.msra.mxu0 0
    %2505 = vmatprep.subr.bf16.mxu0 0
    %2506 = vmatpush1.bf16.msra.mxu0 0
    %2507 = vmatprep.subr.bf16.mxu0 0
    %2508 = vmatpush1.bf16.msra.mxu0 0
    %2509 = vmatprep.subr.bf16.mxu0 0
    %2510 = vmatpush1.bf16.msra.mxu0 0
    %2511 = vmatprep.subr.bf16.mxu0 0
    %2512 = vmatpush1.bf16.msra.mxu0 0
    %2513 = vmatprep.subr.bf16.mxu0 0
    %2514 = vmatpush1.bf16.msra.mxu0 0
    %2515 = vmatprep.mubr.bf16.mxu0 0
    %2516 = vmatmul.mubr.bf16.gmra.mrb[0].mxu0 %v2478
    %v2517 = vpop.f32.mrb[0].mxu0
    %v2518 = vadd.f32 0.0, %v2517
    %v2519 = vpop.f32.mrb[0].mxu0
    %v2520 = vpop.f32.mrb[0].mxu0
    %v2521 = vpop.f32.mrb[0].mxu0
    %2522 = vdwg.mxu0
    %2523 = vrot.lane.b32.xlu0 %v1698, 64
    %v2524 = vpop.permute.xlu0 %2523
    %v2526 = vsel %vm338, %v2186, 0
    %v2529 = vsel %vm115, %v2524, 0
    %2531 = vmatprep.subr.bf16.mxu0 0
    %2532 = vmatpush1.bf16.msra.mxu0 %v2529
    %2533 = vmatprep.subr.bf16.mxu0 0
    %2534 = vmatpush1.bf16.msra.mxu0 0
    %2535 = vmatprep.subr.bf16.mxu0 0
    %2536 = vmatpush1.bf16.msra.mxu0 0
    %2537 = vmatprep.subr.bf16.mxu0 0
    %2538 = vmatpush1.bf16.msra.mxu0 0
    %2539 = vmatprep.subr.bf16.mxu0 0
    %2540 = vmatpush1.bf16.msra.mxu0 0
    %2541 = vmatprep.subr.bf16.mxu0 0
    %2542 = vmatpush1.bf16.msra.mxu0 0
    %2543 = vmatprep.subr.bf16.mxu0 0
    %2544 = vmatpush1.bf16.msra.mxu0 0
    %2545 = vmatprep.subr.bf16.mxu0 0
    %2546 = vmatpush1.bf16.msra.mxu0 0
    %2547 = vmatprep.subr.bf16.mxu0 0
    %2548 = vmatpush1.bf16.msra.mxu0 0
    %2549 = vmatprep.subr.bf16.mxu0 0
    %2550 = vmatpush1.bf16.msra.mxu0 0
    %2551 = vmatprep.subr.bf16.mxu0 0
    %2552 = vmatpush1.bf16.msra.mxu0 0
    %2553 = vmatprep.subr.bf16.mxu0 0
    %2554 = vmatpush1.bf16.msra.mxu0 0
    %2555 = vmatprep.subr.bf16.mxu0 0
    %2556 = vmatpush1.bf16.msra.mxu0 0
    %2557 = vmatprep.subr.bf16.mxu0 0
    %2558 = vmatpush1.bf16.msra.mxu0 0
    %2559 = vmatprep.subr.bf16.mxu0 0
    %2560 = vmatpush1.bf16.msra.mxu0 0
    %2561 = vmatprep.subr.bf16.mxu0 0
    %2562 = vmatpush1.bf16.msra.mxu0 0
    %2563 = vmatprep.mubr.bf16.mxu0 0
    %2564 = vmatmul.mubr.bf16.gmra.mrb[0].mxu0 %v2526
    %v2565 = vpop.f32.mrb[0].mxu0
    %v2566 = vadd.f32 0.0, %v2565
    %v2567 = vpop.f32.mrb[0].mxu0
    %v2568 = vpop.f32.mrb[0].mxu0
    %v2569 = vpop.f32.mrb[0].mxu0
    %2570 = vdwg.mxu0
    %2573 = vrot.lane.b32.xlu0 %v2326, 8
    %v2574 = vpop.permute.xlu0 %2573
    %2575 = vrot.lane.b32.xlu0 %v2374, 8
    %v2576 = vpop.permute.xlu0 %2575
    %2581 = vrot.lane.b32.xlu0 %v2422, 16
    %v2582 = vpop.permute.xlu0 %2581
    %2583 = vrot.lane.b32.xlu0 %v2470, 16
    %v2584 = vpop.permute.xlu0 %2583
    %2589 = vrot.lane.b32.xlu0 %v2518, 24
    %v2590 = vpop.permute.xlu0 %2589
    %2591 = vrot.lane.b32.xlu0 %v2566, 24
    %v2592 = vpop.permute.xlu0 %2591
    %v2595 = vsel %vm338, %v2230, %v2574
    %v2596 = vsel %vm338, %v2278, %v2576
    %v2597 = vsel %vm1234, %v2595, %v2582
    %v2598 = vsel %vm1234, %v2596, %v2584
    %v2599 = vsel %vm1237, %v2597, %v2590
    %v2600 = vsel %vm1237, %v2598, %v2592
    %v2601 = vpack.c.bf16 %v2600, %v2599
    %s2602 = scalar_lea.vmem %s6, 16
    %v2603 = vld [vmem:[%s2602] sm:$0xf]
    %v2604 = vld [vmem:[%s2602 + $0x4] sm:$0xf]
    %v2605 = vld [vmem:[%s2602 + $0x8] sm:$0xf]
    %v2606 = vld [vmem:[%s2602 + $0xc] sm:$0xf]
    %s2607 = scalar_lea.vmem %s7, 1
    %v2608 = vld [vmem:[%s2607] sm:$0x1]
    %v2610 = vlaneseq
    %v2611 = vshrl.u32 %v2610, 7
    %v2612 = vsub.s32 0, %v2611
    %v2613 = vrot.slane %v2608, %v2612
    %v2619 = vunpack.c.l.b16 %v2603
    %v2620 = vunpack.c.l.b16 %v2604
    %v2621 = vunpack.c.l.b16 %v2605
    %v2622 = vunpack.c.l.b16 %v2606
    %v2623 = vpack.c.b16 %v2620, %v2619
    %v2624 = vpack.c.b16 %v2622, %v2621
    %v2628 = vsel %vm59, %v2601, 0
    %2630 = vmatprep.subr.bf16.mxu0 0
    %2631 = vmatpush1.bf16.msra.mxu0 %v2623
    %2632 = vmatprep.subr.bf16.mxu0 0
    %2633 = vmatpush1.bf16.msra.mxu0 %v2624
    %2634 = vmatprep.subr.bf16.mxu0 0
    %2635 = vmatpush1.bf16.msra.mxu0 0
    %2636 = vmatprep.subr.bf16.mxu0 0
    %2637 = vmatpush1.bf16.msra.mxu0 0
    %2638 = vmatprep.subr.bf16.mxu0 0
    %2639 = vmatpush1.bf16.msra.mxu0 0
    %2640 = vmatprep.subr.bf16.mxu0 0
    %2641 = vmatpush1.bf16.msra.mxu0 0
    %2642 = vmatprep.subr.bf16.mxu0 0
    %2643 = vmatpush1.bf16.msra.mxu0 0
    %2644 = vmatprep.subr.bf16.mxu0 0
    %2645 = vmatpush1.bf16.msra.mxu0 0
    %2646 = vmatprep.subr.bf16.mxu0 0
    %2647 = vmatpush1.bf16.msra.mxu0 0
    %2648 = vmatprep.subr.bf16.mxu0 0
    %2649 = vmatpush1.bf16.msra.mxu0 0
    %2650 = vmatprep.subr.bf16.mxu0 0
    %2651 = vmatpush1.bf16.msra.mxu0 0
    %2652 = vmatprep.subr.bf16.mxu0 0
    %2653 = vmatpush1.bf16.msra.mxu0 0
    %2654 = vmatprep.subr.bf16.mxu0 0
    %2655 = vmatpush1.bf16.msra.mxu0 0
    %2656 = vmatprep.subr.bf16.mxu0 0
    %2657 = vmatpush1.bf16.msra.mxu0 0
    %2658 = vmatprep.subr.bf16.mxu0 0
    %2659 = vmatpush1.bf16.msra.mxu0 0
    %2660 = vmatprep.subr.bf16.mxu0 0
    %2661 = vmatpush1.bf16.msra.mxu0 0
    %2662 = vmatprep.mubr.bf16.mxu0 0
    %2663 = vmatmul.mubr.bf16.gmra.mrb[0].mxu0 %v2628
    %v2664 = vpop.f32.mrb[0].mxu0
    %v2665 = vadd.f32 %v2613, %v2664
    %v2666 = vpop.f32.mrb[0].mxu0
    %v2667 = vpop.f32.mrb[0].mxu0
    %v2668 = vadd.f32 %v2613, %v2667
    %v2669 = vpop.f32.mrb[0].mxu0
    %2670 = vdwg.mxu0
    %v2671 = vadd.f32 %v2665, %v1569
    %v2672 = vadd.f32 %v2668, %v1570
    %s2673 = scalar_lea.vmem %s8, 1
    %v2674 = vld [vmem:[%s2673] sm:$0x1]
    %s2675 = scalar_lea.vmem %s9, 1
    %v2676 = vld [vmem:[%s2675] sm:$0x1]
    %v2677 = vsel %vm59, %v2671, 0.0
    %2678 = vadd.xlane.f32.xlu0 %v2677
    %v2679 = vpop.xlane.xlu0 %2678
    %v2680 = vsel %vm59, %v2672, 0.0
    %2681 = vadd.xlane.f32.xlu0 %v2680
    %v2682 = vpop.xlane.xlu0 %2681
    %v2683 = vmul.f32 %v2679, %v66
    %v2684 = vmul.f32 %v2682, %v66
    %v2685 = vsub.f32 %v2671, %v2683
    %v2686 = vsub.f32 %v2672, %v2684
    %v2687 = vmul.f32 %v2685, %v2685
    %v2688 = vmul.f32 %v2686, %v2686
    %v2689 = vsel %vm59, %v2687, 0.0
    %2690 = vadd.xlane.f32.xlu0 %v2689
    %v2691 = vpop.xlane.xlu0 %2690
    %v2692 = vsel %vm59, %v2688, 0.0
    %2693 = vadd.xlane.f32.xlu0 %v2692
    %v2694 = vpop.xlane.xlu0 %2693
    %v2695 = vmul.f32 %v2691, %v66
    %v2696 = vmul.f32 %v2694, %v66
    %v2697 = vadd.f32 %v2695, 1e-12
    %v2698 = vadd.f32 %v2696, 1e-12
    %v2699 = vrsqrt.pop %v2697
    %v2700 = vrsqrt.pop %v2698
    %v2701 = vmul.f32 %v2685, %v2699
    %v2702 = vmul.f32 %v2686, %v2700
    %v2704 = vlaneseq
    %v2705 = vshrl.u32 %v2704, 7
    %v2706 = vsub.s32 0, %v2705
    %v2707 = vrot.slane %v2674, %v2706
    %v2709 = vmul.f32 %v2701, %v2707
    %v2710 = vmul.f32 %v2702, %v2707
    %v2712 = vlaneseq
    %v2713 = vshrl.u32 %v2712, 7
    %v2714 = vsub.s32 0, %v2713
    %v2715 = vrot.slane %v2676, %v2714
    %v2717 = vadd.f32 %v2709, %v2715
    %v2718 = vadd.f32 %v2710, %v2715
    %v2719 = vpack.c.bf16 %v2718, %v2717
    %s2720 = scalar_lea.vmem %s10, 16
    %v2721 = vld [vmem:[%s2720] sm:$0xf]
    %v2722 = vld [vmem:[%s2720 + $0x4] sm:$0xf]
    %v2723 = vld [vmem:[%s2720 + $0x8] sm:$0xf]
    %v2724 = vld [vmem:[%s2720 + $0xc] sm:$0xf]
    %s2725 = scalar_lea.vmem %s11, 1
    %v2726 = vld [vmem:[%s2725] sm:$0x1]
    %v2728 = vlaneseq
    %v2729 = vshrl.u32 %v2728, 7
    %v2730 = vsub.s32 0, %v2729
    %v2731 = vrot.slane %v2726, %v2730
    %v2737 = vunpack.c.l.b16 %v2721
    %v2738 = vunpack.c.l.b16 %v2722
    %v2739 = vunpack.c.l.b16 %v2723
    %v2740 = vunpack.c.l.b16 %v2724
    %v2741 = vpack.c.b16 %v2738, %v2737
    %v2742 = vpack.c.b16 %v2740, %v2739
    %v2746 = vsel %vm59, %v2719, 0
    %2748 = vmatprep.subr.bf16.mxu0 0
    %2749 = vmatpush1.bf16.msra.mxu0 %v2741
    %2750 = vmatprep.subr.bf16.mxu0 0
    %2751 = vmatpush1.bf16.msra.mxu0 %v2742
    %2752 = vmatprep.subr.bf16.mxu0 0
    %2753 = vmatpush1.bf16.msra.mxu0 0
    %2754 = vmatprep.subr.bf16.mxu0 0
    %2755 = vmatpush1.bf16.msra.mxu0 0
    %2756 = vmatprep.subr.bf16.mxu0 0
    %2757 = vmatpush1.bf16.msra.mxu0 0
    %2758 = vmatprep.subr.bf16.mxu0 0
    %2759 = vmatpush1.bf16.msra.mxu0 0
    %2760 = vmatprep.subr.bf16.mxu0 0
    %2761 = vmatpush1.bf16.msra.mxu0 0
    %2762 = vmatprep.subr.bf16.mxu0 0
    %2763 = vmatpush1.bf16.msra.mxu0 0
    %2764 = vmatprep.subr.bf16.mxu0 0
    %2765 = vmatpush1.bf16.msra.mxu0 0
    %2766 = vmatprep.subr.bf16.mxu0 0
    %2767 = vmatpush1.bf16.msra.mxu0 0
    %2768 = vmatprep.subr.bf16.mxu0 0
    %2769 = vmatpush1.bf16.msra.mxu0 0
    %2770 = vmatprep.subr.bf16.mxu0 0
    %2771 = vmatpush1.bf16.msra.mxu0 0
    %2772 = vmatprep.subr.bf16.mxu0 0
    %2773 = vmatpush1.bf16.msra.mxu0 0
    %2774 = vmatprep.subr.bf16.mxu0 0
    %2775 = vmatpush1.bf16.msra.mxu0 0
    %2776 = vmatprep.subr.bf16.mxu0 0
    %2777 = vmatpush1.bf16.msra.mxu0 0
    %2778 = vmatprep.subr.bf16.mxu0 0
    %2779 = vmatpush1.bf16.msra.mxu0 0
    %2780 = vmatprep.mubr.bf16.mxu0 0
    %2781 = vmatmul.mubr.bf16.gmra.mrb[0].mxu0 %v2746
    %v2782 = vpop.f32.mrb[0].mxu0
    %v2783 = vadd.f32 %v2731, %v2782
    %v2784 = vpop.f32.mrb[0].mxu0
    %v2785 = vpop.f32.mrb[0].mxu0
    %v2786 = vadd.f32 %v2731, %v2785
    %v2787 = vpop.f32.mrb[0].mxu0
    %2788 = vdwg.mxu0
    %v2789 = vmul.f32 %v2783, 0.5
    %v2790 = vmul.f32 %v2786, 0.5
    %v2791 = vmul.f32 %v2783, 0.044715
    %v2792 = vmul.f32 %v2786, 0.044715
    %v2793 = vmul.f32 %v2791, %v2783
    %v2794 = vmul.f32 %v2792, %v2786
    %v2795 = vmul.f32 %v2793, %v2783
    %v2796 = vmul.f32 %v2794, %v2786
    %v2797 = vadd.f32 %v2783, %v2795
    %v2798 = vadd.f32 %v2786, %v2796
    %v2799 = vmul.f32 %v2797, 0.7978846
    %v2800 = vmul.f32 %v2798, 0.7978846
    %v2801 = vtanh.pop %v2799
    %v2802 = vtanh.pop %v2800
    %v2803 = vadd.f32 %v2801, 1.0
    %v2804 = vadd.f32 %v2802, 1.0
    %v2805 = vmul.f32 %v2789, %v2803
    %v2806 = vmul.f32 %v2790, %v2804
    %v2807 = vpack.c.bf16 %v2806, %v2805
    %s2808 = scalar_lea.vmem %s12, 32
    %v2809 = vld [vmem:[%s2808] sm:$0xf]
    %v2810 = vld [vmem:[%s2808 + $0x4] sm:$0xf]
    %v2811 = vld [vmem:[%s2808 + $0x8] sm:$0xf]
    %v2812 = vld [vmem:[%s2808 + $0xc] sm:$0xf]
    %v2813 = vld [vmem:[%s2808 + $0x10] sm:$0xf]
    %v2814 = vld [vmem:[%s2808 + $0x14] sm:$0xf]
    %v2815 = vld [vmem:[%s2808 + $0x18] sm:$0xf]
    %v2816 = vld [vmem:[%s2808 + $0x1c] sm:$0xf]
    %s2817 = scalar_lea.vmem %s13, 1
    %v2818 = vld [vmem:[%s2817] sm:$0x1]
    %v2820 = vlaneseq
    %v2821 = vshrl.u32 %v2820, 7
    %v2822 = vsub.s32 0, %v2821
    %v2823 = vrot.slane %v2818, %v2822
    %v2833 = vunpack.c.l.b16 %v2809
    %v2834 = vunpack.c.l.b16 %v2810
    %v2835 = vunpack.c.l.b16 %v2811
    %v2836 = vunpack.c.l.b16 %v2812
    %v2837 = vunpack.c.l.b16 %v2813
    %v2838 = vunpack.c.l.b16 %v2814
    %v2839 = vunpack.c.l.b16 %v2815
    %v2840 = vunpack.c.l.b16 %v2816
    %v2841 = vpack.c.b16 %v2834, %v2833
    %v2842 = vpack.c.b16 %v2836, %v2835
    %v2843 = vpack.c.b16 %v2838, %v2837
    %v2844 = vpack.c.b16 %v2840, %v2839
    %v2850 = vsel %vm1480, %v2807, 0
    %2852 = vmatprep.subr.bf16.mxu0 0
    %2853 = vmatpush1.bf16.msra.mxu0 %v2841
    %2854 = vmatprep.subr.bf16.mxu0 0
    %2855 = vmatpush1.bf16.msra.mxu0 %v2842
    %2856 = vmatprep.subr.bf16.mxu0 0
    %2857 = vmatpush1.bf16.msra.mxu0 %v2843
    %2858 = vmatprep.subr.bf16.mxu0 0
    %2859 = vmatpush1.bf16.msra.mxu0 %v2844
    %2860 = vmatprep.subr.bf16.mxu0 0
    %2861 = vmatpush1.bf16.msra.mxu0 0
    %2862 = vmatprep.subr.bf16.mxu0 0
    %2863 = vmatpush1.bf16.msra.mxu0 0
    %2864 = vmatprep.subr.bf16.mxu0 0
    %2865 = vmatpush1.bf16.msra.mxu0 0
    %2866 = vmatprep.subr.bf16.mxu0 0
    %2867 = vmatpush1.bf16.msra.mxu0 0
    %2868 = vmatprep.subr.bf16.mxu0 0
    %2869 = vmatpush1.bf16.msra.mxu0 0
    %2870 = vmatprep.subr.bf16.mxu0 0
    %2871 = vmatpush1.bf16.msra.mxu0 0
    %2872 = vmatprep.subr.bf16.mxu0 0
    %2873 = vmatpush1.bf16.msra.mxu0 0
    %2874 = vmatprep.subr.bf16.mxu0 0
    %2875 = vmatpush1.bf16.msra.mxu0 0
    %2876 = vmatprep.subr.bf16.mxu0 0
    %2877 = vmatpush1.bf16.msra.mxu0 0
    %2878 = vmatprep.subr.bf16.mxu0 0
    %2879 = vmatpush1.bf16.msra.mxu0 0
    %2880 = vmatprep.subr.bf16.mxu0 0
    %2881 = vmatpush1.bf16.msra.mxu0 0
    %2882 = vmatprep.subr.bf16.mxu0 0
    %2883 = vmatpush1.bf16.msra.mxu0 0
    %2884 = vmatprep.mubr.bf16.mxu0 0
    %2885 = vmatmul.mubr.bf16.gmra.mrb[0].mxu0 %v2850
    %v2886 = vpop.f32.mrb[0].mxu0
    %v2887 = vadd.f32 %v2823, %v2886
    %v2888 = vpop.f32.mrb[0].mxu0
    %v2889 = vpop.f32.mrb[0].mxu0
    %v2890 = vadd.f32 %v2823, %v2889
    %v2891 = vpop.f32.mrb[0].mxu0
    %2892 = vdwg.mxu0
    %v2893 = vadd.f32 %v2887, %v2717
    %v2894 = vadd.f32 %v2890, %v2718
    %s2895 = scalar_lea.vmem %s14, 1
    %v2896 = vld [vmem:[%s2895] sm:$0x1]
    %s2897 = scalar_lea.vmem %s15, 1
    %v2898 = vld [vmem:[%s2897] sm:$0x1]
    %v2899 = vsel %vm59, %v2893, 0.0
    %2900 = vadd.xlane.f32.xlu0 %v2899
    %v2901 = vpop.xlane.xlu0 %2900
    %v2902 = vsel %vm59, %v2894, 0.0
    %2903 = vadd.xlane.f32.xlu0 %v2902
    %v2904 = vpop.xlane.xlu0 %2903
    %v2905 = vmul.f32 %v2901, %v66
    %v2906 = vmul.f32 %v2904, %v66
    %v2907 = vsub.f32 %v2893, %v2905
    %v2908 = vsub.f32 %v2894, %v2906
    %v2909 = vmul.f32 %v2907, %v2907
    %v2910 = vmul.f32 %v2908, %v2908
    %v2911 = vsel %vm59, %v2909, 0.0
    %2912 = vadd.xlane.f32.xlu0 %v2911
    %v2913 = vpop.xlane.xlu0 %2912
    %v2914 = vsel %vm59, %v2910, 0.0
    %2915 = vadd.xlane.f32.xlu0 %v2914
    %v2916 = vpop.xlane.xlu0 %2915
    %v2917 = vmul.f32 %v2913, %v66
    %v2918 = vmul.f32 %v2916, %v66
    %v2919 = vadd.f32 %v2917, 1e-12
    %v2920 = vadd.f32 %v2918, 1e-12
    %v2921 = vrsqrt.pop %v2919
    %v2922 = vrsqrt.pop %v2920
    %v2923 = vmul.f32 %v2907, %v2921
    %v2924 = vmul.f32 %v2908, %v2922
    %v2926 = vlaneseq
    %v2927 = vshrl.u32 %v2926, 7
    %v2928 = vsub.s32 0, %v2927
    %v2929 = vrot.slane %v2896, %v2928
    %v2931 = vmul.f32 %v2923, %v2929
    %v2932 = vmul.f32 %v2924, %v2929
    %v2934 = vlaneseq
    %v2935 = vshrl.u32 %v2934, 7
    %v2936 = vsub.s32 0, %v2935
    %v2937 = vrot.slane %v2898, %v2936
    %v2939 = vadd.f32 %v2931, %v2937
    %v2940 = vadd.f32 %v2932, %v2937
    %v2943 = vrot.slane %v2940, 7
    %vm2944 = vcmask 1041409
    %v2945 = vsel %vm2944, %v2943, %v2939
    %vm2947 = vcmask 254976
    %2948 = vst.msk [vmem:[#allocation2] sm:$0x3] %vm2947, %v2945
    // Predicated region
    $region66: #{dialogue_bert_forward.1} parent=1 // pred_check
      _
    $region67: #{dialogue_bert_forward.1} parent=1 // pred_check_branch
      %2950 = sbr.rel (0) target = $region69
    $region68: #{dialogue_bert_forward.1} parent=1 // pred_region
      %s2952 = ssub.s32 32, 32
      %2953 = vsyncadd [#allocation3], %s2952
      %s2955 = sshll.u32 [#allocation2], 4
      %s2956 = int_to_ptr.vmem [resolvable:$true] %s2955
      %2958 = dma.vmem_to_hbm [thread:$0]  %s2956, 32, %s16, [#allocation3]
    $region69: #{dialogue_bert_forward.1} parent=1 // pred_fallthru
      _
    // Predicated region
    $region70: #{dialogue_bert_forward.1} parent=1 // pred_check
      _
    $region71: #{dialogue_bert_forward.1} parent=1 // pred_check_branch
      %2960 = sbr.rel (0) target = $region73
    $region72: #{dialogue_bert_forward.1} parent=1 // pred_region
      %2961 = dma.done [#allocation3], 32
    $region73: #{dialogue_bert_forward.1} parent=1 // pred_fallthru
      _
    %2962 = vsyncpa [#allocation3], 1

</llo_original>
